<compile_context>
chip_gen: v5e
topology: v5e:2x2
jax: 0.10.0
libtpu: 0.0.40
codegen_flags: <defaults>
</compile_context>

<pallas_src>
import math

import jax
import jax.numpy as jnp
from jax.experimental import pallas as pl
from jax.experimental.pallas import tpu as pltpu

# ----------------------------- model dimensions ------------------------------
BS        = 2
NUM_PTS   = 128
POSE_DIM  = 9            # 'rot_matrix' pose mode
PTS_FEAT  = 1024         # PointNetfeat out_dim
T_EMBED   = 128          # GaussianFourierProjection embed_dim
POSE_HID  = 256
FUSE_HID  = 512
FUSE_IN   = PTS_FEAT + T_EMBED + POSE_HID   # 1408

SIGMA_MIN = 0.01         # VE-SDE constants (score_sde defaults)
SIGMA_MAX = 50.0

_VMEM = pl.BlockSpec(memory_space=pltpu.MemorySpace.VMEM)


# ----------------------------- shared kernel bodies --------------------------
def _pointnet_body(pts, w1_bf, b1, w2_bf, b2, w3_bf, b3):
    """PointNetfeat: per-point MLP (1x1 convs) + global max pool over points.

    All matmuls are flattened to 2-D ([BS*P, K] x [K, N]) so the MXU sees
    BS*P rows in one shot instead of BS separate M=P matmuls. Weights are bf16,
    accumulation is f32.
    """
    bs, p, _ = pts.shape
    x2d = pts.reshape(bs * p, 3).astype(jnp.bfloat16)                      # [bs*P, 3]
    h = jnp.dot(x2d, w1_bf, preferred_element_type=jnp.float32) + b1
    h = jnp.maximum(h, 0.0)                                                # [bs*P, 64]
    h = jnp.dot(h.astype(jnp.bfloat16), w2_bf,
                preferred_element_type=jnp.float32) + b2
    h = jnp.maximum(h, 0.0)                                                # [bs*P, 128]
    h = jnp.dot(h.astype(jnp.bfloat16), w3_bf,
                preferred_element_type=jnp.float32) + b3                   # [bs*P, 1024]

    # Global max over points: pairwise-max tree on the sublane axis (stays on
    # the VPU, halves the live intermediate each step), tiny tail reduce at 8.
    h = h.reshape(bs, p, PTS_FEAT)                                         # [bs, P, 1024]
    rows = p
    while rows > 8:
        half = rows // 2
        h = jnp.maximum(h[:, :half, :], h[:, half:, :])
        rows = half
    return jnp.max(h, axis=1)                                              # [bs, 1024]


def _score_body(pts_feat, pose, t,
                wf2pi, tw_sin_bf, tw_cos_bf, tb,
                pw1_bf, pb1, pw2_bf, pb2,
                fw1_pts_bf, fw1_t_bf, fw1_pose_bf, fb1, fw2_bf, fb2):
    """PoseScoreNet forward (regression_head == 'RT').

    bf16 weights feed the MXU with f32 accumulation; elementwise math is f32.
    The t-encoder weight is pre-split into sin/cos halves so the [sin|cos]
    concat is replaced by two partial matmuls.
    """
    t = t.astype(jnp.float32)                                              # [bs, 1]

    # --- t encoder: GaussianFourierProjection + Linear + ReLU ---
    x_proj = t * wf2pi                                                     # [bs, 64]
    sin_p = jnp.sin(x_proj)
    cos_p = jnp.cos(x_proj)
    t_feat = (jnp.dot(sin_p.astype(jnp.bfloat16), tw_sin_bf,
                      preferred_element_type=jnp.float32)
              + jnp.dot(cos_p.astype(jnp.bfloat16), tw_cos_bf,
                        preferred_element_type=jnp.float32)
              + tb)
    t_feat = jnp.maximum(t_feat, 0.0)                                      # [bs, 128]

    # --- pose encoder: Linear + ReLU, Linear + ReLU ---
    p = pose.astype(jnp.float32)                                           # [bs, 9]
    h = jnp.dot(p.astype(jnp.bfloat16), pw1_bf,
                preferred_element_type=jnp.float32) + pb1
    h = jnp.maximum(h, 0.0)
    pose_feat = jnp.dot(h.astype(jnp.bfloat16), pw2_bf,
                        preferred_element_type=jnp.float32) + pb2
    pose_feat = jnp.maximum(pose_feat, 0.0)                                # [bs, 256]

    # --- fusion tail: split-weight matmul (no [bs,1408] concat materialized) ---
    h = (jnp.dot(pts_feat.astype(jnp.bfloat16), fw1_pts_bf,
                 preferred_element_type=jnp.float32)
         + jnp.dot(t_feat.astype(jnp.bfloat16), fw1_t_bf,
                   preferred_element_type=jnp.float32)
         + jnp.dot(pose_feat.astype(jnp.bfloat16), fw1_pose_bf,
                   preferred_element_type=jnp.float32)
         + fb1)
    h = jnp.maximum(h, 0.0)                                                # [bs, 512]
    score = jnp.dot(h.astype(jnp.bfloat16), fw2_bf,
                    preferred_element_type=jnp.float32) + fb2              # [bs, 9]

    # --- normalise by VE-SDE marginal std: sigma_min*(sigma_max/sigma_min)**t ---
    std = SIGMA_MIN * jnp.exp(t * math.log(SIGMA_MAX / SIGMA_MIN))         # [bs, 1]
    return score * pl.reciprocal(std + 1e-7, approx=True)


# ----------------------------- Pallas kernels --------------------------------
def _pointnet_kernel(pts_ref, w1, b1, w2, b2, w3, b3, out_ref):
    out_ref[...] = _pointnet_body(pts_ref[...].astype(jnp.float32),
                                  w1[...], b1[...], w2[...], b2[...],
                                  w3[...], b3[...])


def _score_kernel(pts_feat_ref, pose_ref, t_ref,
                  wf, tw_sin, tw_cos, tb, pw1, pb1, pw2, pb2,
                  fw1_pts, fw1_t, fw1_pose, fb1, fw2, fb2,
                  out_ref):
    out_ref[...] = _score_body(pts_feat_ref[...].astype(jnp.float32),
                               pose_ref[...], t_ref[...],
                               wf[...], tw_sin[...], tw_cos[...], tb[...],
                               pw1[...], pb1[...], pw2[...], pb2[...],
                               fw1_pts[...], fw1_t[...], fw1_pose[...],
                               fb1[...], fw2[...], fb2[...])


def _fused_kernel(pts_ref, pose_ref, t_ref,
                  pn_w1, pn_b1, pn_w2, pn_b2, pn_w3, pn_b3,
                  wf, tw_sin, tw_cos, tb, pw1, pb1, pw2, pb2,
                  fw1_pts, fw1_t, fw1_pose, fb1, fw2, fb2,
                  out_ref):
    """PointNet encoder + PoseScoreNet in one launch; pts_feat stays in VMEM."""
    pts_feat = _pointnet_body(pts_ref[...].astype(jnp.float32),
                              pn_w1[...], pn_b1[...], pn_w2[...], pn_b2[...],
                              pn_w3[...], pn_b3[...])
    out_ref[...] = _score_body(pts_feat, pose_ref[...], t_ref[...],
                               wf[...], tw_sin[...], tw_cos[...], tb[...],
                               pw1[...], pb1[...], pw2[...], pb2[...],
                               fw1_pts[...], fw1_t[...], fw1_pose[...],
                               fb1[...], fw2[...], fb2[...])


# ----------------------------- pallas_call wrappers ---------------------------
def _pointnet_weight_args(params):
    return (params['pn_w1'], params['pn_b1'],
            params['pn_w2'], params['pn_b2'],
            params['pn_w3'], params['pn_b3'])


def _score_weight_args(params):
    return (params['fourier_w2pi'],
            params['t_w_sin'], params['t_w_cos'], params['t_b'],
            params['p_w1'], params['p_b1'],
            params['p_w2'], params['p_b2'],
            params['f_w1_pts'], params['f_w1_t'], params['f_w1_pose'],
            params['f_b1'],
            params['f_w2'], params['f_b2'])


def pointnet_feature(pts, params):
    args = (pts,) + _pointnet_weight_args(params)
    return pl.pallas_call(
        _pointnet_kernel,
        out_shape=jax.ShapeDtypeStruct((pts.shape[0], PTS_FEAT), jnp.float32),
        in_specs=[_VMEM] * len(args),
        out_specs=_VMEM,
    )(*args)


def pose_score(pts_feat, sampled_pose, t, params):
    # Batch-size generic: the leading dim may be bs*num_samples — the GenPose
    # sampler should stack samples/steps here so every matmul has M >= 128.
    args = (pts_feat, sampled_pose, t) + _score_weight_args(params)
    return pl.pallas_call(
        _score_kernel,
        out_shape=jax.ShapeDtypeStruct((sampled_pose.shape[0], POSE_DIM), jnp.float32),
        in_specs=[_VMEM] * len(args),
        out_specs=_VMEM,
    )(*args)


def pose_score_fused(pts, sampled_pose, t, params):
    """Fused PointNet + score net: one launch, no pts_feat HBM round trip."""
    args = ((pts, sampled_pose, t)
            + _pointnet_weight_args(params)
            + _score_weight_args(params))
    return pl.pallas_call(
        _fused_kernel,
        out_shape=jax.ShapeDtypeStruct((sampled_pose.shape[0], POSE_DIM), jnp.float32),
        in_specs=[_VMEM] * len(args),
        out_specs=_VMEM,
    )(*args)


# ----------------------------- parameter init --------------------------------
def init_params(key):
    """Deterministic synthetic weights (shapes from the PyTorch __init__)."""
    keys = iter(jax.random.split(key, 32))

    def lin(fin, fout):
        bound = 1.0 / math.sqrt(fin)
        w = jax.random.uniform(next(keys), (fin, fout), jnp.float32, -bound, bound)
        b = jax.random.uniform(next(keys), (1, fout), jnp.float32, -bound, bound)
        return w, b

    params = {}
    # PointNetfeat: Conv1d(3,64,1), Conv1d(64,128,1), Conv1d(128,1024,1)
    w1, params['pn_b1'] = lin(3, 64)
    w2, params['pn_b2'] = lin(64, 128)
    w3, params['pn_b3'] = lin(128, PTS_FEAT)
    params['pn_w1'] = w1.astype(jnp.bfloat16)            # MXU input dtype
    params['pn_w2'] = w2.astype(jnp.bfloat16)
    params['pn_w3'] = w3.astype(jnp.bfloat16)

    # GaussianFourierProjection: W = randn(embed_dim//2) * 30  (non-trainable).
    # The 2*pi factor is baked in once here (one-time init, not a per-call op).
    fourier_w = jax.random.normal(next(keys), (1, T_EMBED // 2), jnp.float32) * 30.0
    params['fourier_w2pi'] = fourier_w * (2.0 * math.pi)

    # t encoder Linear(128, 128) — pre-split along the input (concat) axis into
    # the sin-half and cos-half so the kernel never materializes [sin|cos].
    tw, params['t_b'] = lin(T_EMBED, T_EMBED)
    tw = tw.astype(jnp.bfloat16)
    params['t_w_sin'] = tw[:T_EMBED // 2]                 # [64, 128]
    params['t_w_cos'] = tw[T_EMBED // 2:]                 # [64, 128]

    # pose encoder Linear(9, 256), Linear(256, 256)
    pw1, params['p_b1'] = lin(POSE_DIM, POSE_HID)
    pw2, params['p_b2'] = lin(POSE_HID, POSE_HID)
    params['p_w1'] = pw1.astype(jnp.bfloat16)
    params['p_w2'] = pw2.astype(jnp.bfloat16)

    # fusion tail Linear(1408, 512) — stored pre-split along the concat axis so
    # the kernel can do three partial matmuls instead of a concat.
    fw1, params['f_b1'] = lin(FUSE_IN, FUSE_HID)
    fw1 = fw1.astype(jnp.bfloat16)
    params['f_w1_pts']  = fw1[:PTS_FEAT]                           # [1024, 512]
    params['f_w1_t']    = fw1[PTS_FEAT:PTS_FEAT + T_EMBED]         # [128, 512]
    params['f_w1_pose'] = fw1[PTS_FEAT + T_EMBED:]                 # [256, 512]

    # fusion tail Linear(512, 9)
    # NOTE: PyTorch zero_module() zero-inits this last layer; we use nonzero
    # deterministic weights so the kernel numerics are meaningful.
    fw2, params['f_b2'] = lin(FUSE_HID, POSE_DIM)
    params['f_w2'] = fw2.astype(jnp.bfloat16)
    return params


# ----------------------------- module wrapper ---------------------------------
class GFObjectPose:
    """JAX/Pallas port of the PyTorch GFObjectPose forward pass."""

    def __init__(self, params):
        self.params = params

    def extract_pts_feature(self, data):
        # PyTorch does pts.permute(0, 2, 1) to NCW for Conv1d; the kernel keeps
        # the channels-last [bs, num_pts, 3] layout directly (1x1 conv == per-point
        # Linear), so no transpose is needed.
        return pointnet_feature(data['pts'], self.params)

    def forward(self, data, mode='score', init_x=None, T0=None):
        if mode == 'score':
            if 'pts_feat' in data:
                # Standard two-step path (matches the PyTorch call pattern).
                # TODO(synk): for the ODE sampler loop, keep the ~1.8 MiB of
                # score weights VMEM-resident across steps (grid over steps or
                # cross-call persistence, P10) instead of re-DMA'ing per call.
                return pose_score(data['pts_feat'], data['sampled_pose'],
                                  data['t'], self.params)
            # Fused single-launch path: pts_feat never leaves VMEM.
            return pose_score_fused(data['pts'], data['sampled_pose'],
                                    data['t'], self.params)
        elif mode == 'pts_feature':
            # TODO(synk): if NUM_PTS grows beyond ~512, add a grid over point
            # tiles with a running-max VMEM accumulator instead of loading the
            # whole [bs, P, 1024] activation at once.
            return self.extract_pts_feature(data)
        elif mode in ('likelihood', 'ode_sample'):
            # TODO(synk): cond_ode_sampler / cond_ode_likelihood use an adaptive
            # ODE integrator (scipy solve_ivp) — no clean Pallas equivalent.
            raise NotImplementedError(f'mode {mode} is not implemented in the Pallas port')
        else:
            raise NotImplementedError(f'mode {mode} is not supported!')

    __call__ = forward


# ----------------------------- main --------------------------------------------
if __name__ == "__main__":
    key = jax.random.PRNGKey(0)
    k_param, k_pts, k_pose, k_t = jax.random.split(key, 4)

    params = init_params(k_param)
    model = GFObjectPose(params)

    data = {
        'pts': jax.random.normal(k_pts, (BS, NUM_PTS, 3), jnp.float32),
        'sampled_pose': jax.random.normal(k_pose, (BS, POSE_DIM), jnp.float32),
        't': jax.random.uniform(k_t, (BS, 1), jnp.float32, 1e-3, 1.0),
    }

    # Fused single-launch path (default forward when pts_feat is not cached).
    score_fused = model(data, mode='score')
    score_fused = jax.block_until_ready(score_fused)

    # Standard two-step path (mode='pts_feature' then mode='score').
    pts_feat = model(data, mode='pts_feature')
    pts_feat = jax.block_until_ready(pts_feat)
    data['pts_feat'] = pts_feat

    score_two_step = model(data, mode='score')
    score_two_step = jax.block_until_ready(score_two_step)

    assert pts_feat.shape == (BS, PTS_FEAT)
    assert score_fused.shape == (BS, POSE_DIM)
    assert score_two_step.shape == (BS, POSE_DIM)
    assert bool(jnp.all(jnp.isfinite(pts_feat)))
    assert bool(jnp.all(jnp.isfinite(score_fused)))
    assert bool(jnp.all(jnp.isfinite(score_two_step)))
    # Fused and two-step paths compute the same math; allow bf16-level slack.
    assert bool(jnp.allclose(score_fused, score_two_step, rtol=1e-2, atol=1e-2))

    print("KERNEL_OK")
</pallas_src>

<mosaic_0001>
module attributes {stable_mosaic.version = 11 : i64} {
  func.func @_fused_kernel(%arg0: memref<2x128x3xf32, #tpu.memory_space<vmem>>, %arg1: memref<2x9xf32, #tpu.memory_space<vmem>>, %arg2: memref<2x1xf32, #tpu.memory_space<vmem>>, %arg3: memref<3x64xbf16, #tpu.memory_space<vmem>>, %arg4: memref<1x64xf32, #tpu.memory_space<vmem>>, %arg5: memref<64x128xbf16, #tpu.memory_space<vmem>>, %arg6: memref<1x128xf32, #tpu.memory_space<vmem>>, %arg7: memref<128x1024xbf16, #tpu.memory_space<vmem>>, %arg8: memref<1x1024xf32, #tpu.memory_space<vmem>>, %arg9: memref<1x64xf32, #tpu.memory_space<vmem>>, %arg10: memref<64x128xbf16, #tpu.memory_space<vmem>>, %arg11: memref<64x128xbf16, #tpu.memory_space<vmem>>, %arg12: memref<1x128xf32, #tpu.memory_space<vmem>>, %arg13: memref<9x256xbf16, #tpu.memory_space<vmem>>, %arg14: memref<1x256xf32, #tpu.memory_space<vmem>>, %arg15: memref<256x256xbf16, #tpu.memory_space<vmem>>, %arg16: memref<1x256xf32, #tpu.memory_space<vmem>>, %arg17: memref<1024x512xbf16, #tpu.memory_space<vmem>>, %arg18: memref<128x512xbf16, #tpu.memory_space<vmem>>, %arg19: memref<256x512xbf16, #tpu.memory_space<vmem>>, %arg20: memref<1x512xf32, #tpu.memory_space<vmem>>, %arg21: memref<512x9xbf16, #tpu.memory_space<vmem>>, %arg22: memref<1x9xf32, #tpu.memory_space<vmem>>, %arg23: memref<2x9xf32, #tpu.memory_space<vmem>>) attributes {dimension_semantics = [], scalar_prefetch = 0 : i64, scratch_operands = 0 : i64, tpu.core_type = #tpu.core_type<tc>} {
    %c0 = arith.constant 0 : index
    %c0_0 = arith.constant 0 : index
    %c0_1 = arith.constant 0 : index
    %0 = vector.load %arg0[%c0, %c0_0, %c0_1] : memref<2x128x3xf32, #tpu.memory_space<vmem>>, vector<2x128x3xf32>
    %c0_2 = arith.constant 0 : index
    %c0_3 = arith.constant 0 : index
    %1 = vector.load %arg3[%c0_2, %c0_3] : memref<3x64xbf16, #tpu.memory_space<vmem>>, vector<3x64xbf16>
    %c0_4 = arith.constant 0 : index
    %c0_5 = arith.constant 0 : index
    %2 = vector.load %arg4[%c0_4, %c0_5] : memref<1x64xf32, #tpu.memory_space<vmem>>, vector<1x64xf32>
    %c0_6 = arith.constant 0 : index
    %c0_7 = arith.constant 0 : index
    %3 = vector.load %arg5[%c0_6, %c0_7] : memref<64x128xbf16, #tpu.memory_space<vmem>>, vector<64x128xbf16>
    %c0_8 = arith.constant 0 : index
    %c0_9 = arith.constant 0 : index
    %4 = vector.load %arg6[%c0_8, %c0_9] : memref<1x128xf32, #tpu.memory_space<vmem>>, vector<1x128xf32>
    %c0_10 = arith.constant 0 : index
    %c0_11 = arith.constant 0 : index
    %5 = vector.load %arg7[%c0_10, %c0_11] : memref<128x1024xbf16, #tpu.memory_space<vmem>>, vector<128x1024xbf16>
    %c0_12 = arith.constant 0 : index
    %c0_13 = arith.constant 0 : index
    %6 = vector.load %arg8[%c0_12, %c0_13] : memref<1x1024xf32, #tpu.memory_space<vmem>>, vector<1x1024xf32>
    %7 = vector.shape_cast %0 : vector<2x128x3xf32> to vector<256x3xf32>
    %8 = arith.truncf %7 : vector<256x3xf32> to vector<256x3xbf16>
    %cst = arith.constant dense<0.000000e+00> : vector<256x64xf32>
    %9 = tpu.matmul %8, %1, %cst {dimension_numbers = #tpu.dot_dimension_numbers<[1], [0], [0], [1], [0, 0, 1, 1], [], []>} : vector<256x3xbf16>, vector<3x64xbf16>, vector<256x64xf32> -> vector<256x64xf32>
    %10 = vector.broadcast %2 : vector<1x64xf32> to vector<256x64xf32>
    %11 = arith.addf %9, %10 : vector<256x64xf32>
    %cst_14 = arith.constant 0.000000e+00 : f32
    %12 = vector.broadcast %cst_14 : f32 to vector<256x64xf32>
    %13 = arith.maximumf %11, %12 : vector<256x64xf32>
    %14 = arith.truncf %13 : vector<256x64xf32> to vector<256x64xbf16>
    %cst_15 = arith.constant dense<0.000000e+00> : vector<256x128xf32>
    %15 = tpu.matmul %14, %3, %cst_15 {dimension_numbers = #tpu.dot_dimension_numbers<[1], [0], [0], [1], [0, 0, 1, 1], [], []>} : vector<256x64xbf16>, vector<64x128xbf16>, vector<256x128xf32> -> vector<256x128xf32>
    %16 = vector.broadcast %4 : vector<1x128xf32> to vector<256x128xf32>
    %17 = arith.addf %15, %16 : vector<256x128xf32>
    %cst_16 = arith.constant 0.000000e+00 : f32
    %18 = vector.broadcast %cst_16 : f32 to vector<256x128xf32>
    %19 = arith.maximumf %17, %18 : vector<256x128xf32>
    %20 = arith.truncf %19 : vector<256x128xf32> to vector<256x128xbf16>
    %cst_17 = arith.constant dense<0.000000e+00> : vector<256x1024xf32>
    %21 = tpu.matmul %20, %5, %cst_17 {dimension_numbers = #tpu.dot_dimension_numbers<[1], [0], [0], [1], [0, 0, 1, 1], [], []>} : vector<256x128xbf16>, vector<128x1024xbf16>, vector<256x1024xf32> -> vector<256x1024xf32>
    %22 = vector.broadcast %6 : vector<1x1024xf32> to vector<256x1024xf32>
    %23 = arith.addf %21, %22 : vector<256x1024xf32>
    %24 = vector.shape_cast %23 : vector<256x1024xf32> to vector<2x128x1024xf32>
    %25 = vector.extract_strided_slice %24 {offsets = [0, 0, 0], sizes = [2, 64, 1024], strides = [1, 1, 1]} : vector<2x128x1024xf32> to vector<2x64x1024xf32>
    %26 = vector.extract_strided_slice %24 {offsets = [0, 64, 0], sizes = [2, 64, 1024], strides = [1, 1, 1]} : vector<2x128x1024xf32> to vector<2x64x1024xf32>
    %27 = arith.maximumf %25, %26 : vector<2x64x1024xf32>
    %28 = vector.extract_strided_slice %27 {offsets = [0, 0, 0], sizes = [2, 32, 1024], strides = [1, 1, 1]} : vector<2x64x1024xf32> to vector<2x32x1024xf32>
    %29 = vector.extract_strided_slice %27 {offsets = [0, 32, 0], sizes = [2, 32, 1024], strides = [1, 1, 1]} : vector<2x64x1024xf32> to vector<2x32x1024xf32>
    %30 = arith.maximumf %28, %29 : vector<2x32x1024xf32>
    %31 = vector.extract_strided_slice %30 {offsets = [0, 0, 0], sizes = [2, 16, 1024], strides = [1, 1, 1]} : vector<2x32x1024xf32> to vector<2x16x1024xf32>
    %32 = vector.extract_strided_slice %30 {offsets = [0, 16, 0], sizes = [2, 16, 1024], strides = [1, 1, 1]} : vector<2x32x1024xf32> to vector<2x16x1024xf32>
    %33 = arith.maximumf %31, %32 : vector<2x16x1024xf32>
    %34 = vector.extract_strided_slice %33 {offsets = [0, 0, 0], sizes = [2, 8, 1024], strides = [1, 1, 1]} : vector<2x16x1024xf32> to vector<2x8x1024xf32>
    %35 = vector.extract_strided_slice %33 {offsets = [0, 8, 0], sizes = [2, 8, 1024], strides = [1, 1, 1]} : vector<2x16x1024xf32> to vector<2x8x1024xf32>
    %36 = arith.maximumf %34, %35 : vector<2x8x1024xf32>
    %cst_18 = arith.constant dense<0xFF800000> : vector<2x1024xf32>
    %37 = vector.multi_reduction <maximumf>, %36, %cst_18 [1] : vector<2x8x1024xf32> to vector<2x1024xf32>
    %c0_19 = arith.constant 0 : index
    %c0_20 = arith.constant 0 : index
    %38 = vector.load %arg1[%c0_19, %c0_20] : memref<2x9xf32, #tpu.memory_space<vmem>>, vector<2x9xf32>
    %c0_21 = arith.constant 0 : index
    %c0_22 = arith.constant 0 : index
    %39 = vector.load %arg2[%c0_21, %c0_22] : memref<2x1xf32, #tpu.memory_space<vmem>>, vector<2x1xf32>
    %c0_23 = arith.constant 0 : index
    %c0_24 = arith.constant 0 : index
    %40 = vector.load %arg9[%c0_23, %c0_24] : memref<1x64xf32, #tpu.memory_space<vmem>>, vector<1x64xf32>
    %c0_25 = arith.constant 0 : index
    %c0_26 = arith.constant 0 : index
    %41 = vector.load %arg10[%c0_25, %c0_26] : memref<64x128xbf16, #tpu.memory_space<vmem>>, vector<64x128xbf16>
    %c0_27 = arith.constant 0 : index
    %c0_28 = arith.constant 0 : index
    %42 = vector.load %arg11[%c0_27, %c0_28] : memref<64x128xbf16, #tpu.memory_space<vmem>>, vector<64x128xbf16>
    %c0_29 = arith.constant 0 : index
    %c0_30 = arith.constant 0 : index
    %43 = vector.load %arg12[%c0_29, %c0_30] : memref<1x128xf32, #tpu.memory_space<vmem>>, vector<1x128xf32>
    %c0_31 = arith.constant 0 : index
    %c0_32 = arith.constant 0 : index
    %44 = vector.load %arg13[%c0_31, %c0_32] : memref<9x256xbf16, #tpu.memory_space<vmem>>, vector<9x256xbf16>
    %c0_33 = arith.constant 0 : index
    %c0_34 = arith.constant 0 : index
    %45 = vector.load %arg14[%c0_33, %c0_34] : memref<1x256xf32, #tpu.memory_space<vmem>>, vector<1x256xf32>
    %c0_35 = arith.constant 0 : index
    %c0_36 = arith.constant 0 : index
    %46 = vector.load %arg15[%c0_35, %c0_36] : memref<256x256xbf16, #tpu.memory_space<vmem>>, vector<256x256xbf16>
    %c0_37 = arith.constant 0 : index
    %c0_38 = arith.constant 0 : index
    %47 = vector.load %arg16[%c0_37, %c0_38] : memref<1x256xf32, #tpu.memory_space<vmem>>, vector<1x256xf32>
    %c0_39 = arith.constant 0 : index
    %c0_40 = arith.constant 0 : index
    %48 = vector.load %arg17[%c0_39, %c0_40] : memref<1024x512xbf16, #tpu.memory_space<vmem>>, vector<1024x512xbf16>
    %c0_41 = arith.constant 0 : index
    %c0_42 = arith.constant 0 : index
    %49 = vector.load %arg18[%c0_41, %c0_42] : memref<128x512xbf16, #tpu.memory_space<vmem>>, vector<128x512xbf16>
    %c0_43 = arith.constant 0 : index
    %c0_44 = arith.constant 0 : index
    %50 = vector.load %arg19[%c0_43, %c0_44] : memref<256x512xbf16, #tpu.memory_space<vmem>>, vector<256x512xbf16>
    %c0_45 = arith.constant 0 : index
    %c0_46 = arith.constant 0 : index
    %51 = vector.load %arg20[%c0_45, %c0_46] : memref<1x512xf32, #tpu.memory_space<vmem>>, vector<1x512xf32>
    %c0_47 = arith.constant 0 : index
    %c0_48 = arith.constant 0 : index
    %52 = vector.load %arg21[%c0_47, %c0_48] : memref<512x9xbf16, #tpu.memory_space<vmem>>, vector<512x9xbf16>
    %c0_49 = arith.constant 0 : index
    %c0_50 = arith.constant 0 : index
    %53 = vector.load %arg22[%c0_49, %c0_50] : memref<1x9xf32, #tpu.memory_space<vmem>>, vector<1x9xf32>
    %54 = vector.broadcast %39 : vector<2x1xf32> to vector<2x64xf32>
    %55 = vector.broadcast %40 : vector<1x64xf32> to vector<2x64xf32>
    %56 = arith.mulf %54, %55 : vector<2x64xf32>
    %57 = math.sin %56 : vector<2x64xf32>
    %58 = math.cos %56 : vector<2x64xf32>
    %59 = arith.truncf %57 : vector<2x64xf32> to vector<2x64xbf16>
    %cst_51 = arith.constant dense<0.000000e+00> : vector<2x128xf32>
    %60 = tpu.matmul %59, %41, %cst_51 {dimension_numbers = #tpu.dot_dimension_numbers<[1], [0], [0], [1], [0, 0, 1, 1], [], []>} : vector<2x64xbf16>, vector<64x128xbf16>, vector<2x128xf32> -> vector<2x128xf32>
    %61 = arith.truncf %58 : vector<2x64xf32> to vector<2x64xbf16>
    %cst_52 = arith.constant dense<0.000000e+00> : vector<2x128xf32>
    %62 = tpu.matmul %61, %42, %cst_52 {dimension_numbers = #tpu.dot_dimension_numbers<[1], [0], [0], [1], [0, 0, 1, 1], [], []>} : vector<2x64xbf16>, vector<64x128xbf16>, vector<2x128xf32> -> vector<2x128xf32>
    %63 = arith.addf %60, %62 : vector<2x128xf32>
    %64 = vector.broadcast %43 : vector<1x128xf32> to vector<2x128xf32>
    %65 = arith.addf %63, %64 : vector<2x128xf32>
    %cst_53 = arith.constant 0.000000e+00 : f32
    %66 = vector.broadcast %cst_53 : f32 to vector<2x128xf32>
    %67 = arith.maximumf %65, %66 : vector<2x128xf32>
    %68 = arith.truncf %38 : vector<2x9xf32> to vector<2x9xbf16>
    %cst_54 = arith.constant dense<0.000000e+00> : vector<2x256xf32>
    %69 = tpu.matmul %68, %44, %cst_54 {dimension_numbers = #tpu.dot_dimension_numbers<[1], [0], [0], [1], [0, 0, 1, 1], [], []>} : vector<2x9xbf16>, vector<9x256xbf16>, vector<2x256xf32> -> vector<2x256xf32>
    %70 = vector.broadcast %45 : vector<1x256xf32> to vector<2x256xf32>
    %71 = arith.addf %69, %70 : vector<2x256xf32>
    %cst_55 = arith.constant 0.000000e+00 : f32
    %72 = vector.broadcast %cst_55 : f32 to vector<2x256xf32>
    %73 = arith.maximumf %71, %72 : vector<2x256xf32>
    %74 = arith.truncf %73 : vector<2x256xf32> to vector<2x256xbf16>
    %cst_56 = arith.constant dense<0.000000e+00> : vector<2x256xf32>
    %75 = tpu.matmul %74, %46, %cst_56 {dimension_numbers = #tpu.dot_dimension_numbers<[1], [0], [0], [1], [0, 0, 1, 1], [], []>} : vector<2x256xbf16>, vector<256x256xbf16>, vector<2x256xf32> -> vector<2x256xf32>
    %76 = vector.broadcast %47 : vector<1x256xf32> to vector<2x256xf32>
    %77 = arith.addf %75, %76 : vector<2x256xf32>
    %cst_57 = arith.constant 0.000000e+00 : f32
    %78 = vector.broadcast %cst_57 : f32 to vector<2x256xf32>
    %79 = arith.maximumf %77, %78 : vector<2x256xf32>
    %80 = arith.truncf %37 : vector<2x1024xf32> to vector<2x1024xbf16>
    %cst_58 = arith.constant dense<0.000000e+00> : vector<2x512xf32>
    %81 = tpu.matmul %80, %48, %cst_58 {dimension_numbers = #tpu.dot_dimension_numbers<[1], [0], [0], [1], [0, 0, 1, 1], [], []>} : vector<2x1024xbf16>, vector<1024x512xbf16>, vector<2x512xf32> -> vector<2x512xf32>
    %82 = arith.truncf %67 : vector<2x128xf32> to vector<2x128xbf16>
    %cst_59 = arith.constant dense<0.000000e+00> : vector<2x512xf32>
    %83 = tpu.matmul %82, %49, %cst_59 {dimension_numbers = #tpu.dot_dimension_numbers<[1], [0], [0], [1], [0, 0, 1, 1], [], []>} : vector<2x128xbf16>, vector<128x512xbf16>, vector<2x512xf32> -> vector<2x512xf32>
    %84 = arith.addf %81, %83 : vector<2x512xf32>
    %85 = arith.truncf %79 : vector<2x256xf32> to vector<2x256xbf16>
    %cst_60 = arith.constant dense<0.000000e+00> : vector<2x512xf32>
    %86 = tpu.matmul %85, %50, %cst_60 {dimension_numbers = #tpu.dot_dimension_numbers<[1], [0], [0], [1], [0, 0, 1, 1], [], []>} : vector<2x256xbf16>, vector<256x512xbf16>, vector<2x512xf32> -> vector<2x512xf32>
    %87 = arith.addf %84, %86 : vector<2x512xf32>
    %88 = vector.broadcast %51 : vector<1x512xf32> to vector<2x512xf32>
    %89 = arith.addf %87, %88 : vector<2x512xf32>
    %cst_61 = arith.constant 0.000000e+00 : f32
    %90 = vector.broadcast %cst_61 : f32 to vector<2x512xf32>
    %91 = arith.maximumf %89, %90 : vector<2x512xf32>
    %92 = arith.truncf %91 : vector<2x512xf32> to vector<2x512xbf16>
    %cst_62 = arith.constant dense<0.000000e+00> : vector<2x9xf32>
    %93 = tpu.matmul %92, %52, %cst_62 {dimension_numbers = #tpu.dot_dimension_numbers<[1], [0], [0], [1], [0, 0, 1, 1], [], []>} : vector<2x512xbf16>, vector<512x9xbf16>, vector<2x9xf32> -> vector<2x9xf32>
    %94 = vector.broadcast %53 : vector<1x9xf32> to vector<2x9xf32>
    %95 = arith.addf %93, %94 : vector<2x9xf32>
    %cst_63 = arith.constant 8.51719284 : f32
    %96 = vector.broadcast %cst_63 : f32 to vector<2x1xf32>
    %97 = arith.mulf %39, %96 : vector<2x1xf32>
    %98 = math.exp %97 : vector<2x1xf32>
    %cst_64 = arith.constant 0.00999999977 : f32
    %99 = vector.broadcast %cst_64 : f32 to vector<2x1xf32>
    %100 = arith.mulf %99, %98 : vector<2x1xf32>
    %cst_65 = arith.constant 1.000000e-07 : f32
    %101 = vector.broadcast %cst_65 : f32 to vector<2x1xf32>
    %102 = arith.addf %100, %101 : vector<2x1xf32>
    %103 = tpu.reciprocal %102 {approx = true} : vector<2x1xf32> -> vector<2x1xf32>
    %104 = vector.broadcast %103 : vector<2x1xf32> to vector<2x9xf32>
    %105 = arith.mulf %95, %104 : vector<2x9xf32>
    %c0_66 = arith.constant 0 : index
    %c0_67 = arith.constant 0 : index
    %106 = vector.load %arg23[%c0_66, %c0_67] : memref<2x9xf32, #tpu.memory_space<vmem>>, vector<2x9xf32>
    tpu.vector_store %arg23[%c0_66, %c0_67], %105 {strides = array<i32>} : memref<2x9xf32, #tpu.memory_space<vmem>>, vector<2x9xf32>,
    return
  }
}

</mosaic_0001>

<llo_original>
// kernel: tpu_custom_call.1
$region0: #{tpu_custom_call.1}
  #allocation0 [shape = 'u32[]', space=smem, size = 0x4, offset = 0x4, fixed_abs, tag = 'smem constant byte address 0x4 - core index']
  #allocation1 [shape = 'u32[72,128]{1,0:T(1,128)}', space=vmem, size = 0x9000, scoped, tag = 'internal scratch']
  %s0 = inlined_call_operand.vmem [shape: f32[2,128,3], index: 0, kind: input, shape index: {}]
  %s1 = inlined_call_operand.vmem [shape: f32[2,9], index: 1, kind: input, shape index: {}]
  %s2 = inlined_call_operand.vmem [shape: f32[2,1], index: 2, kind: input, shape index: {}]
  %s3 = inlined_call_operand.hbm [shape: bf16[3,64], index: 3, kind: input, shape index: {}]
  %s4 = inlined_call_operand.vmem [shape: f32[1,64], index: 4, kind: input, shape index: {}]
  %s5 = inlined_call_operand.hbm [shape: bf16[64,128], index: 5, kind: input, shape index: {}]
  %s6 = inlined_call_operand.hbm [shape: f32[1,128], index: 6, kind: input, shape index: {}]
  %s7 = inlined_call_operand.vmem [shape: bf16[128,1024], index: 7, kind: input, shape index: {}]
  %s8 = inlined_call_operand.hbm [shape: f32[1,1024], index: 8, kind: input, shape index: {}]
  %s9 = inlined_call_operand.vmem [shape: f32[1,64], index: 9, kind: input, shape index: {}]
  %s10 = inlined_call_operand.hbm [shape: bf16[64,128], index: 10, kind: input, shape index: {}]
  %s11 = inlined_call_operand.hbm [shape: bf16[64,128], index: 11, kind: input, shape index: {}]
  %s12 = inlined_call_operand.vmem [shape: f32[1,128], index: 12, kind: input, shape index: {}]
  %s13 = inlined_call_operand.hbm [shape: bf16[9,256], index: 13, kind: input, shape index: {}]
  %s14 = inlined_call_operand.vmem [shape: f32[1,256], index: 14, kind: input, shape index: {}]
  %s15 = inlined_call_operand.hbm [shape: bf16[256,256], index: 15, kind: input, shape index: {}]
  %s16 = inlined_call_operand.vmem [shape: f32[1,256], index: 16, kind: input, shape index: {}]
  %s17 = inlined_call_operand.hbm [shape: bf16[1024,512], index: 17, kind: input, shape index: {}]
  %s18 = inlined_call_operand.hbm [shape: bf16[128,512], index: 18, kind: input, shape index: {}]
  %s19 = inlined_call_operand.hbm [shape: bf16[256,512], index: 19, kind: input, shape index: {}]
  %s20 = inlined_call_operand.vmem [shape: f32[1,512], index: 20, kind: input, shape index: {}]
  %s21 = inlined_call_operand.vmem [shape: bf16[512,9], index: 21, kind: input, shape index: {}]
  %s22 = inlined_call_operand.vmem [shape: f32[1,9], index: 22, kind: input, shape index: {}]
  %s23 = inlined_call_operand.hbm [shape: f32[2,9], index: 23, kind: output, shape index: {}]
  %s24 = sld [smem:[#allocation0]]
  $region146: #{tpu_custom_call.1} parent=0
    _
  %s26 = ssub.s32 1, %s24
  %s27 = scalar_select 0, %s26, %s24
  $region1: #{tpu_custom_call.1} parent=0
    #allocation2 [shape = 'u8[1024]{0}', space=vmem, size = 0x400, scoped, tag = 'input window, operand 3, single buffered']
    #allocation3 [shape = 's32[1]{0}', space=sflag, size = 0x4, scoped, tag = 'scoped memory for tpu_custom_call.1']
    #allocation4 [shape = 's32[1]{0}', space=sflag, size = 0x4, scoped, tag = 'scoped memory for tpu_custom_call.1']
    #allocation5 [shape = 'u8[16384]{0}', space=vmem, size = 0x4000, scoped, tag = 'input window, operand 5, single buffered']
    #allocation6 [shape = 's32[1]{0}', space=sflag, size = 0x4, scoped, tag = 'scoped memory for tpu_custom_call.1']
    #allocation7 [shape = 'u8[512]{0}', space=vmem, size = 0x400, scoped, tag = 'input window, operand 6, single buffered']
    #allocation8 [shape = 'u8[4096]{0}', space=vmem, size = 0x1000, scoped, tag = 'input window, operand 8, single buffered']
    #allocation9 [shape = 's32[1]{0}', space=sflag, size = 0x4, scoped, tag = 'scoped memory for tpu_custom_call.1']
    #allocation10 [shape = 'u8[16384]{0}', space=vmem, size = 0x4000, scoped, tag = 'input window, operand 10, single buffered']
    #allocation11 [shape = 'u8[16384]{0}', space=vmem, size = 0x4000, scoped, tag = 'input window, operand 11, single buffered']
    #allocation12 [shape = 's32[1]{0}', space=sflag, size = 0x4, scoped, tag = 'scoped memory for tpu_custom_call.1']
    #allocation13 [shape = 'u8[8192]{0}', space=vmem, size = 0x2000, scoped, tag = 'input window, operand 13, single buffered']
    #allocation14 [shape = 'u8[131072]{0}', space=vmem, size = 0x20000, scoped, tag = 'input window, operand 15, single buffered']
    #allocation15 [shape = 's32[1]{0}', space=sflag, size = 0x4, scoped, tag = 'scoped memory for tpu_custom_call.1']
    #allocation16 [shape = 'u8[1048576]{0}', space=vmem, size = 0x100000, scoped, tag = 'input window, operand 17, single buffered']
    #allocation17 [shape = 'u8[131072]{0}', space=vmem, size = 0x20000, scoped, tag = 'input window, operand 18, single buffered']
    #allocation18 [shape = 's32[1]{0}', space=sflag, size = 0x4, scoped, tag = 'scoped memory for tpu_custom_call.1']
    #allocation19 [shape = 'u8[262144]{0}', space=vmem, size = 0x40000, scoped, tag = 'input window, operand 19, single buffered']
    #allocation20 [shape = 'u8[1024]{0}', space=vmem, size = 0x400, scoped, tag = 'output window, operand 0, single buffered']
    %28 = vsyncpa [#allocation3], 0
    %29 = vsyncpa [#allocation6], 0
    %30 = vsyncpa [#allocation9], 0
    %31 = vsyncpa [#allocation12], 0
    %32 = vsyncpa [#allocation15], 0
    %33 = vsyncpa [#allocation18], 0
    %34 = vsyncpa [#allocation4], 0
    // Predicated region
    $region2: #{tpu_custom_call.1} parent=1 // pred_check
      _
    $region3: #{tpu_custom_call.1} parent=1 // pred_check_branch
      %36 = sbr.rel (0) target = $region5
    $region4: #{tpu_custom_call.1} parent=1 // pred_region
      _
    $region5: #{tpu_custom_call.1} parent=1 // pred_fallthru
      _
    // Predicated region
    $region6: #{tpu_custom_call.1} parent=1 // pred_check
      _
    $region7: #{tpu_custom_call.1} parent=1 // pred_check_branch
      %38 = sbr.rel (0) target = $region9
    $region8: #{tpu_custom_call.1} parent=1 // pred_region
      _
    $region9: #{tpu_custom_call.1} parent=1 // pred_fallthru
      _
    // Predicated region
    $region10: #{tpu_custom_call.1} parent=1 // pred_check
      _
    $region11: #{tpu_custom_call.1} parent=1 // pred_check_branch
      %40 = sbr.rel (0) target = $region13
    $region12: #{tpu_custom_call.1} parent=1 // pred_region
      _
    $region13: #{tpu_custom_call.1} parent=1 // pred_fallthru
      _
    // Predicated region
    $region14: #{tpu_custom_call.1} parent=1 // pred_check
      _
    $region15: #{tpu_custom_call.1} parent=1 // pred_check_branch
      %42 = sbr.rel (0) target = $region17
    $region16: #{tpu_custom_call.1} parent=1 // pred_region
      %44 = vsyncadd [#allocation3], 0
      %s46 = sshll.u32 %s3, 4
      %s47 = int_to_ptr.hbm [resolvable:$true] %s46
      %s48 = sshll.u32 [#allocation2], 4
      %s49 = int_to_ptr.vmem [resolvable:$true] %s48
      %51 = dma.hbm_to_vmem [thread:$0]  %s47, 32, %s49, [#allocation3]
    $region17: #{tpu_custom_call.1} parent=1 // pred_fallthru
      _
    // Predicated region
    $region18: #{tpu_custom_call.1} parent=1 // pred_check
      _
    $region19: #{tpu_custom_call.1} parent=1 // pred_check_branch
      %53 = sbr.rel (0) target = $region21
    $region20: #{tpu_custom_call.1} parent=1 // pred_region
      _
    $region21: #{tpu_custom_call.1} parent=1 // pred_fallthru
      _
    // Predicated region
    $region22: #{tpu_custom_call.1} parent=1 // pred_check
      _
    $region23: #{tpu_custom_call.1} parent=1 // pred_check_branch
      %55 = sbr.rel (0) target = $region25
    $region24: #{tpu_custom_call.1} parent=1 // pred_region
      %57 = vsyncadd [#allocation6], 0
      %s58 = sshll.u32 %s5, 4
      %s59 = int_to_ptr.hbm [resolvable:$true] %s58
      %s60 = sshll.u32 [#allocation5], 4
      %s61 = int_to_ptr.vmem [resolvable:$true] %s60
      %66 = dma.hbm_to_vmem [thread:$0]  %s59, 512, %s61, [#allocation6], 64, 64, 4
    $region25: #{tpu_custom_call.1} parent=1 // pred_fallthru
      _
    // Predicated region
    $region26: #{tpu_custom_call.1} parent=1 // pred_check
      _
    $region27: #{tpu_custom_call.1} parent=1 // pred_check_branch
      %68 = sbr.rel (0) target = $region29
    $region28: #{tpu_custom_call.1} parent=1 // pred_region
      %70 = vsyncadd [#allocation6], 0
      %s72 = sshll.u32 %s6, 4
      %s73 = int_to_ptr.hbm [resolvable:$true] %s72
      %s74 = sshll.u32 [#allocation7], 4
      %s75 = int_to_ptr.vmem [resolvable:$true] %s74
      %77 = dma.hbm_to_vmem [thread:$0]  %s73, 16, %s75, [#allocation6]
    $region29: #{tpu_custom_call.1} parent=1 // pred_fallthru
      _
    // Predicated region
    $region30: #{tpu_custom_call.1} parent=1 // pred_check
      _
    $region31: #{tpu_custom_call.1} parent=1 // pred_check_branch
      %79 = sbr.rel (0) target = $region33
    $region32: #{tpu_custom_call.1} parent=1 // pred_region
      _
    $region33: #{tpu_custom_call.1} parent=1 // pred_fallthru
      _
    // Predicated region
    $region34: #{tpu_custom_call.1} parent=1 // pred_check
      _
    $region35: #{tpu_custom_call.1} parent=1 // pred_check_branch
      %81 = sbr.rel (0) target = $region37
    $region36: #{tpu_custom_call.1} parent=1 // pred_region
      %83 = vsyncadd [#allocation9], 0
      %s85 = sshll.u32 %s8, 4
      %s86 = int_to_ptr.hbm [resolvable:$true] %s85
      %s87 = sshll.u32 [#allocation8], 4
      %s88 = int_to_ptr.vmem [resolvable:$true] %s87
      %90 = dma.hbm_to_vmem [thread:$0]  %s86, 128, %s88, [#allocation9]
    $region37: #{tpu_custom_call.1} parent=1 // pred_fallthru
      _
    // Predicated region
    $region38: #{tpu_custom_call.1} parent=1 // pred_check
      _
    $region39: #{tpu_custom_call.1} parent=1 // pred_check_branch
      %92 = sbr.rel (0) target = $region41
    $region40: #{tpu_custom_call.1} parent=1 // pred_region
      _
    $region41: #{tpu_custom_call.1} parent=1 // pred_fallthru
      _
    // Predicated region
    $region42: #{tpu_custom_call.1} parent=1 // pred_check
      _
    $region43: #{tpu_custom_call.1} parent=1 // pred_check_branch
      %94 = sbr.rel (0) target = $region45
    $region44: #{tpu_custom_call.1} parent=1 // pred_region
      %96 = vsyncadd [#allocation9], 0
      %s97 = sshll.u32 %s10, 4
      %s98 = int_to_ptr.hbm [resolvable:$true] %s97
      %s99 = sshll.u32 [#allocation10], 4
      %s100 = int_to_ptr.vmem [resolvable:$true] %s99
      %105 = dma.hbm_to_vmem [thread:$0]  %s98, 512, %s100, [#allocation9], 64, 64, 4
    $region45: #{tpu_custom_call.1} parent=1 // pred_fallthru
      _
    // Predicated region
    $region46: #{tpu_custom_call.1} parent=1 // pred_check
      _
    $region47: #{tpu_custom_call.1} parent=1 // pred_check_branch
      %107 = sbr.rel (0) target = $region49
    $region48: #{tpu_custom_call.1} parent=1 // pred_region
      %109 = vsyncadd [#allocation12], 0
      %s110 = sshll.u32 %s11, 4
      %s111 = int_to_ptr.hbm [resolvable:$true] %s110
      %s112 = sshll.u32 [#allocation11], 4
      %s113 = int_to_ptr.vmem [resolvable:$true] %s112
      %118 = dma.hbm_to_vmem [thread:$0]  %s111, 512, %s113, [#allocation12], 64, 64, 4
    $region49: #{tpu_custom_call.1} parent=1 // pred_fallthru
      _
    // Predicated region
    $region50: #{tpu_custom_call.1} parent=1 // pred_check
      _
    $region51: #{tpu_custom_call.1} parent=1 // pred_check_branch
      %120 = sbr.rel (0) target = $region53
    $region52: #{tpu_custom_call.1} parent=1 // pred_region
      _
    $region53: #{tpu_custom_call.1} parent=1 // pred_fallthru
      _
    // Predicated region
    $region54: #{tpu_custom_call.1} parent=1 // pred_check
      _
    $region55: #{tpu_custom_call.1} parent=1 // pred_check_branch
      %122 = sbr.rel (0) target = $region57
    $region56: #{tpu_custom_call.1} parent=1 // pred_region
      %124 = vsyncadd [#allocation12], 0
      %s125 = sshll.u32 %s13, 4
      %s126 = int_to_ptr.hbm [resolvable:$true] %s125
      %s127 = sshll.u32 [#allocation13], 4
      %s128 = int_to_ptr.vmem [resolvable:$true] %s127
      %133 = dma.hbm_to_vmem [thread:$0]  %s126, 256, %s128, [#allocation12], 128, 128, 8
    $region57: #{tpu_custom_call.1} parent=1 // pred_fallthru
      _
    // Predicated region
    $region58: #{tpu_custom_call.1} parent=1 // pred_check
      _
    $region59: #{tpu_custom_call.1} parent=1 // pred_check_branch
      %135 = sbr.rel (0) target = $region61
    $region60: #{tpu_custom_call.1} parent=1 // pred_region
      _
    $region61: #{tpu_custom_call.1} parent=1 // pred_fallthru
      _
    // Predicated region
    $region62: #{tpu_custom_call.1} parent=1 // pred_check
      _
    $region63: #{tpu_custom_call.1} parent=1 // pred_check_branch
      %137 = sbr.rel (0) target = $region65
    $region64: #{tpu_custom_call.1} parent=1 // pred_region
      %139 = vsyncadd [#allocation15], 0
      %s140 = sshll.u32 %s15, 4
      %s141 = int_to_ptr.hbm [resolvable:$true] %s140
      %s142 = sshll.u32 [#allocation14], 4
      %s143 = int_to_ptr.vmem [resolvable:$true] %s142
      %148 = dma.hbm_to_vmem [thread:$0]  %s141, 4096, %s143, [#allocation15], 128, 128, 8
    $region65: #{tpu_custom_call.1} parent=1 // pred_fallthru
      _
    // Predicated region
    $region66: #{tpu_custom_call.1} parent=1 // pred_check
      _
    $region67: #{tpu_custom_call.1} parent=1 // pred_check_branch
      %150 = sbr.rel (0) target = $region69
    $region68: #{tpu_custom_call.1} parent=1 // pred_region
      _
    $region69: #{tpu_custom_call.1} parent=1 // pred_fallthru
      _
    // Predicated region
    $region70: #{tpu_custom_call.1} parent=1 // pred_check
      _
    $region71: #{tpu_custom_call.1} parent=1 // pred_check_branch
      %152 = sbr.rel (0) target = $region73
    $region72: #{tpu_custom_call.1} parent=1 // pred_region
      %154 = vsyncadd [#allocation15], 0
      %s155 = sshll.u32 %s17, 4
      %s156 = int_to_ptr.hbm [resolvable:$true] %s155
      %s157 = sshll.u32 [#allocation16], 4
      %s158 = int_to_ptr.vmem [resolvable:$true] %s157
      %163 = dma.hbm_to_vmem [thread:$0]  %s156, 32768, %s158, [#allocation15], 256, 256, 16
    $region73: #{tpu_custom_call.1} parent=1 // pred_fallthru
      _
    // Predicated region
    $region74: #{tpu_custom_call.1} parent=1 // pred_check
      _
    $region75: #{tpu_custom_call.1} parent=1 // pred_check_branch
      %165 = sbr.rel (0) target = $region77
    $region76: #{tpu_custom_call.1} parent=1 // pred_region
      %167 = vsyncadd [#allocation18], 0
      %s168 = sshll.u32 %s18, 4
      %s169 = int_to_ptr.hbm [resolvable:$true] %s168
      %s170 = sshll.u32 [#allocation17], 4
      %s171 = int_to_ptr.vmem [resolvable:$true] %s170
      %176 = dma.hbm_to_vmem [thread:$0]  %s169, 4096, %s171, [#allocation18], 256, 256, 16
    $region77: #{tpu_custom_call.1} parent=1 // pred_fallthru
      _
    // Predicated region
    $region78: #{tpu_custom_call.1} parent=1 // pred_check
      _
    $region79: #{tpu_custom_call.1} parent=1 // pred_check_branch
      %178 = sbr.rel (0) target = $region81
    $region80: #{tpu_custom_call.1} parent=1 // pred_region
      %180 = vsyncadd [#allocation18], 0
      %s181 = sshll.u32 %s19, 4
      %s182 = int_to_ptr.hbm [resolvable:$true] %s181
      %s183 = sshll.u32 [#allocation19], 4
      %s184 = int_to_ptr.vmem [resolvable:$true] %s183
      %189 = dma.hbm_to_vmem [thread:$0]  %s182, 8192, %s184, [#allocation18], 256, 256, 16
    $region81: #{tpu_custom_call.1} parent=1 // pred_fallthru
      _
    // Predicated region
    $region82: #{tpu_custom_call.1} parent=1 // pred_check
      _
    $region83: #{tpu_custom_call.1} parent=1 // pred_check_branch
      %191 = sbr.rel (0) target = $region85
    $region84: #{tpu_custom_call.1} parent=1 // pred_region
      _
    $region85: #{tpu_custom_call.1} parent=1 // pred_fallthru
      _
    // Predicated region
    $region86: #{tpu_custom_call.1} parent=1 // pred_check
      _
    $region87: #{tpu_custom_call.1} parent=1 // pred_check_branch
      %193 = sbr.rel (0) target = $region89
    $region88: #{tpu_custom_call.1} parent=1 // pred_region
      _
    $region89: #{tpu_custom_call.1} parent=1 // pred_fallthru
      _
    // Predicated region
    $region90: #{tpu_custom_call.1} parent=1 // pred_check
      _
    $region91: #{tpu_custom_call.1} parent=1 // pred_check_branch
      %195 = sbr.rel (0) target = $region93
    $region92: #{tpu_custom_call.1} parent=1 // pred_region
      _
    $region93: #{tpu_custom_call.1} parent=1 // pred_fallthru
      _
    // Predicated region
    $region94: #{tpu_custom_call.1} parent=1 // pred_check
      _
    $region95: #{tpu_custom_call.1} parent=1 // pred_check_branch
      %197 = sbr.rel (0) target = $region97
    $region96: #{tpu_custom_call.1} parent=1 // pred_region
      %199 = dma.done [#allocation3], 32
    $region97: #{tpu_custom_call.1} parent=1 // pred_fallthru
      _
    // Predicated region
    $region98: #{tpu_custom_call.1} parent=1 // pred_check
      _
    $region99: #{tpu_custom_call.1} parent=1 // pred_check_branch
      %201 = sbr.rel (0) target = $region101
    $region100: #{tpu_custom_call.1} parent=1 // pred_region
      %203 = dma.done [#allocation6], 512
    $region101: #{tpu_custom_call.1} parent=1 // pred_fallthru
      _
    // Predicated region
    $region102: #{tpu_custom_call.1} parent=1 // pred_check
      _
    $region103: #{tpu_custom_call.1} parent=1 // pred_check_branch
      %205 = sbr.rel (0) target = $region105
    $region104: #{tpu_custom_call.1} parent=1 // pred_region
      %207 = dma.done [#allocation6], 16
    $region105: #{tpu_custom_call.1} parent=1 // pred_fallthru
      _
    // Predicated region
    $region106: #{tpu_custom_call.1} parent=1 // pred_check
      _
    $region107: #{tpu_custom_call.1} parent=1 // pred_check_branch
      %209 = sbr.rel (0) target = $region109
    $region108: #{tpu_custom_call.1} parent=1 // pred_region
      %211 = dma.done [#allocation9], 128
    $region109: #{tpu_custom_call.1} parent=1 // pred_fallthru
      _
    // Predicated region
    $region110: #{tpu_custom_call.1} parent=1 // pred_check
      _
    $region111: #{tpu_custom_call.1} parent=1 // pred_check_branch
      %213 = sbr.rel (0) target = $region113
    $region112: #{tpu_custom_call.1} parent=1 // pred_region
      %215 = dma.done [#allocation9], 512
    $region113: #{tpu_custom_call.1} parent=1 // pred_fallthru
      _
    // Predicated region
    $region114: #{tpu_custom_call.1} parent=1 // pred_check
      _
    $region115: #{tpu_custom_call.1} parent=1 // pred_check_branch
      %217 = sbr.rel (0) target = $region117
    $region116: #{tpu_custom_call.1} parent=1 // pred_region
      %219 = dma.done [#allocation12], 512
    $region117: #{tpu_custom_call.1} parent=1 // pred_fallthru
      _
    // Predicated region
    $region118: #{tpu_custom_call.1} parent=1 // pred_check
      _
    $region119: #{tpu_custom_call.1} parent=1 // pred_check_branch
      %221 = sbr.rel (0) target = $region121
    $region120: #{tpu_custom_call.1} parent=1 // pred_region
      %223 = dma.done [#allocation12], 256
    $region121: #{tpu_custom_call.1} parent=1 // pred_fallthru
      _
    // Predicated region
    $region122: #{tpu_custom_call.1} parent=1 // pred_check
      _
    $region123: #{tpu_custom_call.1} parent=1 // pred_check_branch
      %225 = sbr.rel (0) target = $region125
    $region124: #{tpu_custom_call.1} parent=1 // pred_region
      %227 = dma.done [#allocation15], 4096
    $region125: #{tpu_custom_call.1} parent=1 // pred_fallthru
      _
    // Predicated region
    $region126: #{tpu_custom_call.1} parent=1 // pred_check
      _
    $region127: #{tpu_custom_call.1} parent=1 // pred_check_branch
      %229 = sbr.rel (0) target = $region129
    $region128: #{tpu_custom_call.1} parent=1 // pred_region
      %231 = dma.done [#allocation15], 32768
    $region129: #{tpu_custom_call.1} parent=1 // pred_fallthru
      _
    // Predicated region
    $region130: #{tpu_custom_call.1} parent=1 // pred_check
      _
    $region131: #{tpu_custom_call.1} parent=1 // pred_check_branch
      %233 = sbr.rel (0) target = $region133
    $region132: #{tpu_custom_call.1} parent=1 // pred_region
      %235 = dma.done [#allocation18], 4096
    $region133: #{tpu_custom_call.1} parent=1 // pred_fallthru
      _
    // Predicated region
    $region134: #{tpu_custom_call.1} parent=1 // pred_check
      _
    $region135: #{tpu_custom_call.1} parent=1 // pred_check_branch
      %237 = sbr.rel (0) target = $region137
    $region136: #{tpu_custom_call.1} parent=1 // pred_region
      %239 = dma.done [#allocation18], 8192
    $region137: #{tpu_custom_call.1} parent=1 // pred_fallthru
      _
    %v241 = vld [vmem:[%s0] sm:$0xff]
    %v242 = vld [vmem:[%s0 + $0x8] sm:$0xff]
    %v243 = vld [vmem:[%s0 + $0x10] sm:$0xff]
    %v244 = vld [vmem:[%s0 + $0x18] sm:$0xff]
    %v245 = vld [vmem:[%s0 + $0x20] sm:$0xff]
    %v246 = vld [vmem:[%s0 + $0x28] sm:$0xff]
    %v247 = vld [vmem:[%s0 + $0x30] sm:$0xff]
    %v248 = vld [vmem:[%s0 + $0x38] sm:$0xff]
    %v249 = vld [vmem:[%s0 + $0x40] sm:$0xff]
    %v250 = vld [vmem:[%s0 + $0x48] sm:$0xff]
    %v251 = vld [vmem:[%s0 + $0x50] sm:$0xff]
    %v252 = vld [vmem:[%s0 + $0x58] sm:$0xff]
    %v253 = vld [vmem:[%s0 + $0x60] sm:$0xff]
    %v254 = vld [vmem:[%s0 + $0x68] sm:$0xff]
    %v255 = vld [vmem:[%s0 + $0x70] sm:$0xff]
    %v256 = vld [vmem:[%s0 + $0x78] sm:$0xff]
    %v257 = vld [vmem:[%s0 + $0x80] sm:$0xff]
    %v258 = vld [vmem:[%s0 + $0x88] sm:$0xff]
    %v259 = vld [vmem:[%s0 + $0x90] sm:$0xff]
    %v260 = vld [vmem:[%s0 + $0x98] sm:$0xff]
    %v261 = vld [vmem:[%s0 + $0xa0] sm:$0xff]
    %v262 = vld [vmem:[%s0 + $0xa8] sm:$0xff]
    %v263 = vld [vmem:[%s0 + $0xb0] sm:$0xff]
    %v264 = vld [vmem:[%s0 + $0xb8] sm:$0xff]
    %v265 = vld [vmem:[%s0 + $0xc0] sm:$0xff]
    %v266 = vld [vmem:[%s0 + $0xc8] sm:$0xff]
    %v267 = vld [vmem:[%s0 + $0xd0] sm:$0xff]
    %v268 = vld [vmem:[%s0 + $0xd8] sm:$0xff]
    %v269 = vld [vmem:[%s0 + $0xe0] sm:$0xff]
    %v270 = vld [vmem:[%s0 + $0xe8] sm:$0xff]
    %v271 = vld [vmem:[%s0 + $0xf0] sm:$0xff]
    %v272 = vld [vmem:[%s0 + $0xf8] sm:$0xff]
    %v273 = vld [vmem:[#allocation2] sm:$0x3]
    %v274 = vld [vmem:[%s4] sm:$0x1]
    %v275 = vld [vmem:[#allocation5] sm:$0xf]
    %v276 = vld [vmem:[#allocation5 + $0x4] sm:$0xf]
    %v277 = vld [vmem:[#allocation5 + $0x8] sm:$0xf]
    %v278 = vld [vmem:[#allocation5 + $0xc] sm:$0xf]
    %v279 = vld [vmem:[#allocation5 + $0x10] sm:$0xf]
    %v280 = vld [vmem:[#allocation5 + $0x14] sm:$0xf]
    %v281 = vld [vmem:[#allocation5 + $0x18] sm:$0xf]
    %v282 = vld [vmem:[#allocation5 + $0x1c] sm:$0xf]
    %v283 = vld [vmem:[#allocation7] sm:$0x1]
    %v284 = vld [vmem:[%s7] sm:$0xff]
    %v285 = vld [vmem:[%s7 + $0x8] sm:$0xff]
    %v286 = vld [vmem:[%s7 + $0x10] sm:$0xff]
    %v287 = vld [vmem:[%s7 + $0x18] sm:$0xff]
    %v288 = vld [vmem:[%s7 + $0x20] sm:$0xff]
    %v289 = vld [vmem:[%s7 + $0x28] sm:$0xff]
    %v290 = vld [vmem:[%s7 + $0x30] sm:$0xff]
    %v291 = vld [vmem:[%s7 + $0x38] sm:$0xff]
    %v292 = vld [vmem:[%s7 + $0x40] sm:$0xff]
    %v293 = vld [vmem:[%s7 + $0x48] sm:$0xff]
    %v294 = vld [vmem:[%s7 + $0x50] sm:$0xff]
    %v295 = vld [vmem:[%s7 + $0x58] sm:$0xff]
    %v296 = vld [vmem:[%s7 + $0x60] sm:$0xff]
    %v297 = vld [vmem:[%s7 + $0x68] sm:$0xff]
    %v298 = vld [vmem:[%s7 + $0x70] sm:$0xff]
    %v299 = vld [vmem:[%s7 + $0x78] sm:$0xff]
    %v300 = vld [vmem:[%s7 + $0x80] sm:$0xff]
    %v301 = vld [vmem:[%s7 + $0x88] sm:$0xff]
    %v302 = vld [vmem:[%s7 + $0x90] sm:$0xff]
    %v303 = vld [vmem:[%s7 + $0x98] sm:$0xff]
    %v304 = vld [vmem:[%s7 + $0xa0] sm:$0xff]
    %v305 = vld [vmem:[%s7 + $0xa8] sm:$0xff]
    %v306 = vld [vmem:[%s7 + $0xb0] sm:$0xff]
    %v307 = vld [vmem:[%s7 + $0xb8] sm:$0xff]
    %v308 = vld [vmem:[%s7 + $0xc0] sm:$0xff]
    %v309 = vld [vmem:[%s7 + $0xc8] sm:$0xff]
    %v310 = vld [vmem:[%s7 + $0xd0] sm:$0xff]
    %v311 = vld [vmem:[%s7 + $0xd8] sm:$0xff]
    %v312 = vld [vmem:[%s7 + $0xe0] sm:$0xff]
    %v313 = vld [vmem:[%s7 + $0xe8] sm:$0xff]
    %v314 = vld [vmem:[%s7 + $0xf0] sm:$0xff]
    %v315 = vld [vmem:[%s7 + $0xf8] sm:$0xff]
    %v316 = vld [vmem:[%s7 + $0x100] sm:$0xff]
    %v317 = vld [vmem:[%s7 + $0x108] sm:$0xff]
    %v318 = vld [vmem:[%s7 + $0x110] sm:$0xff]
    %v319 = vld [vmem:[%s7 + $0x118] sm:$0xff]
    %v320 = vld [vmem:[%s7 + $0x120] sm:$0xff]
    %v321 = vld [vmem:[%s7 + $0x128] sm:$0xff]
    %v322 = vld [vmem:[%s7 + $0x130] sm:$0xff]
    %v323 = vld [vmem:[%s7 + $0x138] sm:$0xff]
    %v324 = vld [vmem:[%s7 + $0x140] sm:$0xff]
    %v325 = vld [vmem:[%s7 + $0x148] sm:$0xff]
    %v326 = vld [vmem:[%s7 + $0x150] sm:$0xff]
    %v327 = vld [vmem:[%s7 + $0x158] sm:$0xff]
    %v328 = vld [vmem:[%s7 + $0x160] sm:$0xff]
    %v329 = vld [vmem:[%s7 + $0x168] sm:$0xff]
    %v330 = vld [vmem:[%s7 + $0x170] sm:$0xff]
    %v331 = vld [vmem:[%s7 + $0x178] sm:$0xff]
    %v332 = vld [vmem:[%s7 + $0x180] sm:$0xff]
    %v333 = vld [vmem:[%s7 + $0x188] sm:$0xff]
    %v334 = vld [vmem:[%s7 + $0x190] sm:$0xff]
    %v335 = vld [vmem:[%s7 + $0x198] sm:$0xff]
    %v336 = vld [vmem:[%s7 + $0x1a0] sm:$0xff]
    %v337 = vld [vmem:[%s7 + $0x1a8] sm:$0xff]
    %v338 = vld [vmem:[%s7 + $0x1b0] sm:$0xff]
    %v339 = vld [vmem:[%s7 + $0x1b8] sm:$0xff]
    %v340 = vld [vmem:[%s7 + $0x1c0] sm:$0xff]
    %v341 = vld [vmem:[%s7 + $0x1c8] sm:$0xff]
    %v342 = vld [vmem:[%s7 + $0x1d0] sm:$0xff]
    %v343 = vld [vmem:[%s7 + $0x1d8] sm:$0xff]
    %v344 = vld [vmem:[%s7 + $0x1e0] sm:$0xff]
    %v345 = vld [vmem:[%s7 + $0x1e8] sm:$0xff]
    %v346 = vld [vmem:[%s7 + $0x1f0] sm:$0xff]
    %v347 = vld [vmem:[%s7 + $0x1f8] sm:$0xff]
    %v348 = vld [vmem:[#allocation8] sm:$0xff]
    %v349 = vpack.c.bf16 %v242, %v241
    %v350 = vpack.c.bf16 %v244, %v243
    %v351 = vpack.c.bf16 %v246, %v245
    %v352 = vpack.c.bf16 %v248, %v247
    %v353 = vpack.c.bf16 %v250, %v249
    %v354 = vpack.c.bf16 %v252, %v251
    %v355 = vpack.c.bf16 %v254, %v253
    %v356 = vpack.c.bf16 %v256, %v255
    %v357 = vpack.c.bf16 %v258, %v257
    %v358 = vpack.c.bf16 %v260, %v259
    %v359 = vpack.c.bf16 %v262, %v261
    %v360 = vpack.c.bf16 %v264, %v263
    %v361 = vpack.c.bf16 %v266, %v265
    %v362 = vpack.c.bf16 %v268, %v267
    %v363 = vpack.c.bf16 %v270, %v269
    %v364 = vpack.c.bf16 %v272, %v271
    %v366 = vperm.slane %v274, 0
    %vm368 = vcmask 23552
    %v370 = vsel %vm368, %v349, 0
    %v373 = vsel %vm368, %v350, 0
    %v376 = vsel %vm368, %v351, 0
    %v379 = vsel %vm368, %v352, 0
    %v382 = vsel %vm368, %v353, 0
    %v385 = vsel %vm368, %v354, 0
    %v388 = vsel %vm368, %v355, 0
    %v391 = vsel %vm368, %v356, 0
    %v394 = vsel %vm368, %v357, 0
    %v397 = vsel %vm368, %v358, 0
    %v400 = vsel %vm368, %v359, 0
    %v403 = vsel %vm368, %v360, 0
    %v406 = vsel %vm368, %v361, 0
    %v409 = vsel %vm368, %v362, 0
    %v412 = vsel %vm368, %v363, 0
    %v415 = vsel %vm368, %v364, 0
    %vm417 = vcmask 1040384
    %vm418 = vcmask 1041408
    %v419 = vsel %vm417, 4294967295, 65535
    %v420 = vsel %vm418, %v419, 0
    %v422 = vand.u32 %v273, %v420
    %424 = vmatpush.bf16.msra.mxu0 0
    %425 = vmatpush.bf16.msra.mxu0 0
    %426 = vmatpush.bf16.msra.mxu0 0
    %427 = vmatpush.bf16.msra.mxu0 0
    %428 = vmatpush.bf16.msra.mxu0 0
    %429 = vmatpush.bf16.msra.mxu0 0
    %430 = vmatpush.bf16.msra.mxu0 0
    %431 = vmatpush.bf16.msra.mxu0 %v422
    %432 = vmatmul.bf16.gmra.mxu0 %v370
    %v433 = vpop.f32.mrf.mxu0
    %v434 = vadd.f32 %v366, %v433
    %v435 = vpop.f32.mrf.mxu0
    %v436 = vadd.f32 %v366, %v435
    %437 = vmatmul.bf16.gmra.mxu0 %v373
    %v438 = vpop.f32.mrf.mxu0
    %v439 = vadd.f32 %v366, %v438
    %v440 = vpop.f32.mrf.mxu0
    %v441 = vadd.f32 %v366, %v440
    %442 = vmatmul.bf16.gmra.mxu0 %v376
    %v443 = vpop.f32.mrf.mxu0
    %v444 = vadd.f32 %v366, %v443
    %v445 = vpop.f32.mrf.mxu0
    %v446 = vadd.f32 %v366, %v445
    %447 = vmatmul.bf16.gmra.mxu0 %v379
    %v448 = vpop.f32.mrf.mxu0
    %v449 = vadd.f32 %v366, %v448
    %v450 = vpop.f32.mrf.mxu0
    %v451 = vadd.f32 %v366, %v450
    %452 = vmatmul.bf16.gmra.mxu0 %v382
    %v453 = vpop.f32.mrf.mxu0
    %v454 = vadd.f32 %v366, %v453
    %v455 = vpop.f32.mrf.mxu0
    %v456 = vadd.f32 %v366, %v455
    %457 = vmatmul.bf16.gmra.mxu0 %v385
    %v458 = vpop.f32.mrf.mxu0
    %v459 = vadd.f32 %v366, %v458
    %v460 = vpop.f32.mrf.mxu0
    %v461 = vadd.f32 %v366, %v460
    %462 = vmatmul.bf16.gmra.mxu0 %v388
    %v463 = vpop.f32.mrf.mxu0
    %v464 = vadd.f32 %v366, %v463
    %v465 = vpop.f32.mrf.mxu0
    %v466 = vadd.f32 %v366, %v465
    %467 = vmatmul.bf16.gmra.mxu0 %v391
    %v468 = vpop.f32.mrf.mxu0
    %v469 = vadd.f32 %v366, %v468
    %v470 = vpop.f32.mrf.mxu0
    %v471 = vadd.f32 %v366, %v470
    %472 = vmatmul.bf16.gmra.mxu0 %v394
    %v473 = vpop.f32.mrf.mxu0
    %v474 = vadd.f32 %v366, %v473
    %v475 = vpop.f32.mrf.mxu0
    %v476 = vadd.f32 %v366, %v475
    %477 = vmatmul.bf16.gmra.mxu0 %v397
    %v478 = vpop.f32.mrf.mxu0
    %v479 = vadd.f32 %v366, %v478
    %v480 = vpop.f32.mrf.mxu0
    %v481 = vadd.f32 %v366, %v480
    %482 = vmatmul.bf16.gmra.mxu0 %v400
    %v483 = vpop.f32.mrf.mxu0
    %v484 = vadd.f32 %v366, %v483
    %v485 = vpop.f32.mrf.mxu0
    %v486 = vadd.f32 %v366, %v485
    %487 = vmatmul.bf16.gmra.mxu0 %v403
    %v488 = vpop.f32.mrf.mxu0
    %v489 = vadd.f32 %v366, %v488
    %v490 = vpop.f32.mrf.mxu0
    %v491 = vadd.f32 %v366, %v490
    %492 = vmatmul.bf16.gmra.mxu0 %v406
    %v493 = vpop.f32.mrf.mxu0
    %v494 = vadd.f32 %v366, %v493
    %v495 = vpop.f32.mrf.mxu0
    %v496 = vadd.f32 %v366, %v495
    %497 = vmatmul.bf16.gmra.mxu0 %v409
    %v498 = vpop.f32.mrf.mxu0
    %v499 = vadd.f32 %v366, %v498
    %v500 = vpop.f32.mrf.mxu0
    %v501 = vadd.f32 %v366, %v500
    %502 = vmatmul.bf16.gmra.mxu0 %v412
    %v503 = vpop.f32.mrf.mxu0
    %v504 = vadd.f32 %v366, %v503
    %v505 = vpop.f32.mrf.mxu0
    %v506 = vadd.f32 %v366, %v505
    %507 = vmatmul.bf16.gmra.mxu0 %v415
    %v508 = vpop.f32.mrf.mxu0
    %v509 = vadd.f32 %v366, %v508
    %v510 = vpop.f32.mrf.mxu0
    %v511 = vadd.f32 %v366, %v510
    %512 = vdwg.mxu0
    %v513 = vmax.f32 %v434, 0.0
    %v514 = vmax.f32 %v436, 0.0
    %v515 = vmax.f32 %v439, 0.0
    %v516 = vmax.f32 %v441, 0.0
    %v517 = vmax.f32 %v444, 0.0
    %v518 = vmax.f32 %v446, 0.0
    %v519 = vmax.f32 %v449, 0.0
    %v520 = vmax.f32 %v451, 0.0
    %v521 = vmax.f32 %v454, 0.0
    %v522 = vmax.f32 %v456, 0.0
    %v523 = vmax.f32 %v459, 0.0
    %v524 = vmax.f32 %v461, 0.0
    %v525 = vmax.f32 %v464, 0.0
    %v526 = vmax.f32 %v466, 0.0
    %v527 = vmax.f32 %v469, 0.0
    %v528 = vmax.f32 %v471, 0.0
    %v529 = vmax.f32 %v474, 0.0
    %v530 = vmax.f32 %v476, 0.0
    %v531 = vmax.f32 %v479, 0.0
    %v532 = vmax.f32 %v481, 0.0
    %v533 = vmax.f32 %v484, 0.0
    %v534 = vmax.f32 %v486, 0.0
    %v535 = vmax.f32 %v489, 0.0
    %v536 = vmax.f32 %v491, 0.0
    %v537 = vmax.f32 %v494, 0.0
    %v538 = vmax.f32 %v496, 0.0
    %v539 = vmax.f32 %v499, 0.0
    %v540 = vmax.f32 %v501, 0.0
    %v541 = vmax.f32 %v504, 0.0
    %v542 = vmax.f32 %v506, 0.0
    %v543 = vmax.f32 %v509, 0.0
    %v544 = vmax.f32 %v511, 0.0
    %v545 = vpack.c.bf16 %v514, %v513
    %v546 = vpack.c.bf16 %v516, %v515
    %v547 = vpack.c.bf16 %v518, %v517
    %v548 = vpack.c.bf16 %v520, %v519
    %v549 = vpack.c.bf16 %v522, %v521
    %v550 = vpack.c.bf16 %v524, %v523
    %v551 = vpack.c.bf16 %v526, %v525
    %v552 = vpack.c.bf16 %v528, %v527
    %v553 = vpack.c.bf16 %v530, %v529
    %v554 = vpack.c.bf16 %v532, %v531
    %v555 = vpack.c.bf16 %v534, %v533
    %v556 = vpack.c.bf16 %v536, %v535
    %v557 = vpack.c.bf16 %v538, %v537
    %v558 = vpack.c.bf16 %v540, %v539
    %v559 = vpack.c.bf16 %v542, %v541
    %v560 = vpack.c.bf16 %v544, %v543
    %v562 = vperm.slane %v283, 0
    %v572 = vunpack.c.l.b16 %v275
    %v573 = vunpack.c.l.b16 %v276
    %v574 = vunpack.c.l.b16 %v277
    %v575 = vunpack.c.l.b16 %v278
    %v576 = vunpack.c.l.b16 %v279
    %v577 = vunpack.c.l.b16 %v280
    %v578 = vunpack.c.l.b16 %v281
    %v579 = vunpack.c.l.b16 %v282
    %v580 = vpack.c.b16 %v573, %v572
    %v581 = vpack.c.b16 %v575, %v574
    %v582 = vpack.c.b16 %v577, %v576
    %v583 = vpack.c.b16 %v579, %v578
    %vm588 = vcmask 523264
    %v590 = vsel %vm588, %v545, 0
    %v593 = vsel %vm588, %v546, 0
    %v596 = vsel %vm588, %v547, 0
    %v599 = vsel %vm588, %v548, 0
    %v602 = vsel %vm588, %v549, 0
    %v605 = vsel %vm588, %v550, 0
    %v608 = vsel %vm588, %v551, 0
    %v611 = vsel %vm588, %v552, 0
    %v614 = vsel %vm588, %v553, 0
    %v617 = vsel %vm588, %v554, 0
    %v620 = vsel %vm588, %v555, 0
    %v623 = vsel %vm588, %v556, 0
    %v626 = vsel %vm588, %v557, 0
    %v629 = vsel %vm588, %v558, 0
    %v632 = vsel %vm588, %v559, 0
    %v635 = vsel %vm588, %v560, 0
    %637 = vmatpush.bf16.msra.mxu0 0
    %638 = vmatpush.bf16.msra.mxu0 0
    %639 = vmatpush.bf16.msra.mxu0 0
    %640 = vmatpush.bf16.msra.mxu0 0
    %641 = vmatpush.bf16.msra.mxu0 %v583
    %642 = vmatpush.bf16.msra.mxu0 %v582
    %643 = vmatpush.bf16.msra.mxu0 %v581
    %644 = vmatpush.bf16.msra.mxu0 %v580
    %645 = vmatmul.bf16.gmra.mxu0 %v590
    %v646 = vpop.f32.mrf.mxu0
    %v647 = vadd.f32 %v562, %v646
    %v648 = vpop.f32.mrf.mxu0
    %v649 = vadd.f32 %v562, %v648
    %650 = vmatmul.bf16.gmra.mxu0 %v593
    %v651 = vpop.f32.mrf.mxu0
    %v652 = vadd.f32 %v562, %v651
    %v653 = vpop.f32.mrf.mxu0
    %v654 = vadd.f32 %v562, %v653
    %655 = vmatmul.bf16.gmra.mxu0 %v596
    %v656 = vpop.f32.mrf.mxu0
    %v657 = vadd.f32 %v562, %v656
    %v658 = vpop.f32.mrf.mxu0
    %v659 = vadd.f32 %v562, %v658
    %660 = vmatmul.bf16.gmra.mxu0 %v599
    %v661 = vpop.f32.mrf.mxu0
    %v662 = vadd.f32 %v562, %v661
    %v663 = vpop.f32.mrf.mxu0
    %v664 = vadd.f32 %v562, %v663
    %665 = vmatmul.bf16.gmra.mxu0 %v602
    %v666 = vpop.f32.mrf.mxu0
    %v667 = vadd.f32 %v562, %v666
    %v668 = vpop.f32.mrf.mxu0
    %v669 = vadd.f32 %v562, %v668
    %670 = vmatmul.bf16.gmra.mxu0 %v605
    %v671 = vpop.f32.mrf.mxu0
    %v672 = vadd.f32 %v562, %v671
    %v673 = vpop.f32.mrf.mxu0
    %v674 = vadd.f32 %v562, %v673
    %675 = vmatmul.bf16.gmra.mxu0 %v608
    %v676 = vpop.f32.mrf.mxu0
    %v677 = vadd.f32 %v562, %v676
    %v678 = vpop.f32.mrf.mxu0
    %v679 = vadd.f32 %v562, %v678
    %680 = vmatmul.bf16.gmra.mxu0 %v611
    %v681 = vpop.f32.mrf.mxu0
    %v682 = vadd.f32 %v562, %v681
    %v683 = vpop.f32.mrf.mxu0
    %v684 = vadd.f32 %v562, %v683
    %685 = vmatmul.bf16.gmra.mxu0 %v614
    %v686 = vpop.f32.mrf.mxu0
    %v687 = vadd.f32 %v562, %v686
    %v688 = vpop.f32.mrf.mxu0
    %v689 = vadd.f32 %v562, %v688
    %690 = vmatmul.bf16.gmra.mxu0 %v617
    %v691 = vpop.f32.mrf.mxu0
    %v692 = vadd.f32 %v562, %v691
    %v693 = vpop.f32.mrf.mxu0
    %v694 = vadd.f32 %v562, %v693
    %695 = vmatmul.bf16.gmra.mxu0 %v620
    %v696 = vpop.f32.mrf.mxu0
    %v697 = vadd.f32 %v562, %v696
    %v698 = vpop.f32.mrf.mxu0
    %v699 = vadd.f32 %v562, %v698
    %700 = vmatmul.bf16.gmra.mxu0 %v623
    %v701 = vpop.f32.mrf.mxu0
    %v702 = vadd.f32 %v562, %v701
    %v703 = vpop.f32.mrf.mxu0
    %v704 = vadd.f32 %v562, %v703
    %705 = vmatmul.bf16.gmra.mxu0 %v626
    %v706 = vpop.f32.mrf.mxu0
    %v707 = vadd.f32 %v562, %v706
    %v708 = vpop.f32.mrf.mxu0
    %v709 = vadd.f32 %v562, %v708
    %710 = vmatmul.bf16.gmra.mxu0 %v629
    %v711 = vpop.f32.mrf.mxu0
    %v712 = vadd.f32 %v562, %v711
    %v713 = vpop.f32.mrf.mxu0
    %v714 = vadd.f32 %v562, %v713
    %715 = vmatmul.bf16.gmra.mxu0 %v632
    %v716 = vpop.f32.mrf.mxu0
    %v717 = vadd.f32 %v562, %v716
    %v718 = vpop.f32.mrf.mxu0
    %v719 = vadd.f32 %v562, %v718
    %720 = vmatmul.bf16.gmra.mxu0 %v635
    %v721 = vpop.f32.mrf.mxu0
    %v722 = vadd.f32 %v562, %v721
    %v723 = vpop.f32.mrf.mxu0
    %v724 = vadd.f32 %v562, %v723
    %725 = vdwg.mxu0
    %v726 = vmax.f32 %v647, 0.0
    %v727 = vmax.f32 %v649, 0.0
    %v728 = vmax.f32 %v652, 0.0
    %v729 = vmax.f32 %v654, 0.0
    %v730 = vmax.f32 %v657, 0.0
    %v731 = vmax.f32 %v659, 0.0
    %v732 = vmax.f32 %v662, 0.0
    %v733 = vmax.f32 %v664, 0.0
    %v734 = vmax.f32 %v667, 0.0
    %v735 = vmax.f32 %v669, 0.0
    %v736 = vmax.f32 %v672, 0.0
    %v737 = vmax.f32 %v674, 0.0
    %v738 = vmax.f32 %v677, 0.0
    %v739 = vmax.f32 %v679, 0.0
    %v740 = vmax.f32 %v682, 0.0
    %v741 = vmax.f32 %v684, 0.0
    %v742 = vmax.f32 %v687, 0.0
    %v743 = vmax.f32 %v689, 0.0
    %v744 = vmax.f32 %v692, 0.0
    %v745 = vmax.f32 %v694, 0.0
    %v746 = vmax.f32 %v697, 0.0
    %v747 = vmax.f32 %v699, 0.0
    %v748 = vmax.f32 %v702, 0.0
    %v749 = vmax.f32 %v704, 0.0
    %v750 = vmax.f32 %v707, 0.0
    %v751 = vmax.f32 %v709, 0.0
    %v752 = vmax.f32 %v712, 0.0
    %v753 = vmax.f32 %v714, 0.0
    %v754 = vmax.f32 %v717, 0.0
    %v755 = vmax.f32 %v719, 0.0
    %v756 = vmax.f32 %v722, 0.0
    %v757 = vmax.f32 %v724, 0.0
    %v758 = vpack.c.bf16 %v727, %v726
    %v759 = vpack.c.bf16 %v729, %v728
    %v760 = vpack.c.bf16 %v731, %v730
    %v761 = vpack.c.bf16 %v733, %v732
    %v762 = vpack.c.bf16 %v735, %v734
    %v763 = vpack.c.bf16 %v737, %v736
    %v764 = vpack.c.bf16 %v739, %v738
    %v765 = vpack.c.bf16 %v741, %v740
    %v766 = vpack.c.bf16 %v743, %v742
    %v767 = vpack.c.bf16 %v745, %v744
    %v768 = vpack.c.bf16 %v747, %v746
    %v769 = vpack.c.bf16 %v749, %v748
    %v770 = vpack.c.bf16 %v751, %v750
    %v771 = vpack.c.bf16 %v753, %v752
    %v772 = vpack.c.bf16 %v755, %v754
    %v773 = vpack.c.bf16 %v757, %v756
    %v775 = vperm.slane %v348, 0
    %v776 = vperm.slane %v348, 1
    %v777 = vperm.slane %v348, 2
    %v778 = vperm.slane %v348, 3
    %v779 = vperm.slane %v348, 4
    %v780 = vperm.slane %v348, 5
    %v781 = vperm.slane %v348, 6
    %v782 = vperm.slane %v348, 7
    %v855 = vunpack.c.l.b16 %v284
    %v856 = vunpack.c.h.b16 %v284
    %v857 = vunpack.c.l.b16 %v285
    %v858 = vunpack.c.h.b16 %v285
    %v859 = vunpack.c.l.b16 %v286
    %v860 = vunpack.c.h.b16 %v286
    %v861 = vunpack.c.l.b16 %v287
    %v862 = vunpack.c.h.b16 %v287
    %v863 = vunpack.c.l.b16 %v288
    %v864 = vunpack.c.h.b16 %v288
    %v865 = vunpack.c.l.b16 %v289
    %v866 = vunpack.c.h.b16 %v289
    %v867 = vunpack.c.l.b16 %v290
    %v868 = vunpack.c.h.b16 %v290
    %v869 = vunpack.c.l.b16 %v291
    %v870 = vunpack.c.h.b16 %v291
    %v871 = vunpack.c.l.b16 %v292
    %v872 = vunpack.c.h.b16 %v292
    %v873 = vunpack.c.l.b16 %v293
    %v874 = vunpack.c.h.b16 %v293
    %v875 = vunpack.c.l.b16 %v294
    %v876 = vunpack.c.h.b16 %v294
    %v877 = vunpack.c.l.b16 %v295
    %v878 = vunpack.c.h.b16 %v295
    %v879 = vunpack.c.l.b16 %v296
    %v880 = vunpack.c.h.b16 %v296
    %v881 = vunpack.c.l.b16 %v297
    %v882 = vunpack.c.h.b16 %v297
    %v883 = vunpack.c.l.b16 %v298
    %v884 = vunpack.c.h.b16 %v298
    %v885 = vunpack.c.l.b16 %v299
    %v886 = vunpack.c.h.b16 %v299
    %v887 = vunpack.c.l.b16 %v300
    %v888 = vunpack.c.h.b16 %v300
    %v889 = vunpack.c.l.b16 %v301
    %v890 = vunpack.c.h.b16 %v301
    %v891 = vunpack.c.l.b16 %v302
    %v892 = vunpack.c.h.b16 %v302
    %v893 = vunpack.c.l.b16 %v303
    %v894 = vunpack.c.h.b16 %v303
    %v895 = vunpack.c.l.b16 %v304
    %v896 = vunpack.c.h.b16 %v304
    %v897 = vunpack.c.l.b16 %v305
    %v898 = vunpack.c.h.b16 %v305
    %v899 = vunpack.c.l.b16 %v306
    %v900 = vunpack.c.h.b16 %v306
    %v901 = vunpack.c.l.b16 %v307
    %v902 = vunpack.c.h.b16 %v307
    %v903 = vunpack.c.l.b16 %v308
    %v904 = vunpack.c.h.b16 %v308
    %v905 = vunpack.c.l.b16 %v309
    %v906 = vunpack.c.h.b16 %v309
    %v907 = vunpack.c.l.b16 %v310
    %v908 = vunpack.c.h.b16 %v310
    %v909 = vunpack.c.l.b16 %v311
    %v910 = vunpack.c.h.b16 %v311
    %v911 = vunpack.c.l.b16 %v312
    %v912 = vunpack.c.h.b16 %v312
    %v913 = vunpack.c.l.b16 %v313
    %v914 = vunpack.c.h.b16 %v313
    %v915 = vunpack.c.l.b16 %v314
    %v916 = vunpack.c.h.b16 %v314
    %v917 = vunpack.c.l.b16 %v315
    %v918 = vunpack.c.h.b16 %v315
    %v919 = vunpack.c.l.b16 %v316
    %v920 = vunpack.c.h.b16 %v316
    %v921 = vunpack.c.l.b16 %v317
    %v922 = vunpack.c.h.b16 %v317
    %v923 = vunpack.c.l.b16 %v318
    %v924 = vunpack.c.h.b16 %v318
    %v925 = vunpack.c.l.b16 %v319
    %v926 = vunpack.c.h.b16 %v319
    %v927 = vunpack.c.l.b16 %v320
    %v928 = vunpack.c.h.b16 %v320
    %v929 = vunpack.c.l.b16 %v321
    %v930 = vunpack.c.h.b16 %v321
    %v931 = vunpack.c.l.b16 %v322
    %v932 = vunpack.c.h.b16 %v322
    %v933 = vunpack.c.l.b16 %v323
    %v934 = vunpack.c.h.b16 %v323
    %v935 = vunpack.c.l.b16 %v324
    %v936 = vunpack.c.h.b16 %v324
    %v937 = vunpack.c.l.b16 %v325
    %v938 = vunpack.c.h.b16 %v325
    %v939 = vunpack.c.l.b16 %v326
    %v940 = vunpack.c.h.b16 %v326
    %v941 = vunpack.c.l.b16 %v327
    %v942 = vunpack.c.h.b16 %v327
    %v943 = vunpack.c.l.b16 %v328
    %v944 = vunpack.c.h.b16 %v328
    %v945 = vunpack.c.l.b16 %v329
    %v946 = vunpack.c.h.b16 %v329
    %v947 = vunpack.c.l.b16 %v330
    %v948 = vunpack.c.h.b16 %v330
    %v949 = vunpack.c.l.b16 %v331
    %v950 = vunpack.c.h.b16 %v331
    %v951 = vunpack.c.l.b16 %v332
    %v952 = vunpack.c.h.b16 %v332
    %v953 = vunpack.c.l.b16 %v333
    %v954 = vunpack.c.h.b16 %v333
    %v955 = vunpack.c.l.b16 %v334
    %v956 = vunpack.c.h.b16 %v334
    %v957 = vunpack.c.l.b16 %v335
    %v958 = vunpack.c.h.b16 %v335
    %v959 = vunpack.c.l.b16 %v336
    %v960 = vunpack.c.h.b16 %v336
    %v961 = vunpack.c.l.b16 %v337
    %v962 = vunpack.c.h.b16 %v337
    %v963 = vunpack.c.l.b16 %v338
    %v964 = vunpack.c.h.b16 %v338
    %v965 = vunpack.c.l.b16 %v339
    %v966 = vunpack.c.h.b16 %v339
    %v967 = vunpack.c.l.b16 %v340
    %v968 = vunpack.c.h.b16 %v340
    %v969 = vunpack.c.l.b16 %v341
    %v970 = vunpack.c.h.b16 %v341
    %v971 = vunpack.c.l.b16 %v342
    %v972 = vunpack.c.h.b16 %v342
    %v973 = vunpack.c.l.b16 %v343
    %v974 = vunpack.c.h.b16 %v343
    %v975 = vunpack.c.l.b16 %v344
    %v976 = vunpack.c.h.b16 %v344
    %v977 = vunpack.c.l.b16 %v345
    %v978 = vunpack.c.h.b16 %v345
    %v979 = vunpack.c.l.b16 %v346
    %v980 = vunpack.c.h.b16 %v346
    %v981 = vunpack.c.l.b16 %v347
    %v982 = vunpack.c.h.b16 %v347
    %v983 = vpack.c.b16 %v863, %v855
    %v984 = vpack.c.b16 %v864, %v856
    %v985 = vpack.c.b16 %v865, %v857
    %v986 = vpack.c.b16 %v866, %v858
    %v987 = vpack.c.b16 %v867, %v859
    %v988 = vpack.c.b16 %v868, %v860
    %v989 = vpack.c.b16 %v869, %v861
    %v990 = vpack.c.b16 %v870, %v862
    %v991 = vpack.c.b16 %v879, %v871
    %v992 = vpack.c.b16 %v880, %v872
    %v993 = vpack.c.b16 %v881, %v873
    %v994 = vpack.c.b16 %v882, %v874
    %v995 = vpack.c.b16 %v883, %v875
    %v996 = vpack.c.b16 %v884, %v876
    %v997 = vpack.c.b16 %v885, %v877
    %v998 = vpack.c.b16 %v886, %v878
    %v999 = vpack.c.b16 %v895, %v887
    %v1000 = vpack.c.b16 %v896, %v888
    %v1001 = vpack.c.b16 %v897, %v889
    %v1002 = vpack.c.b16 %v898, %v890
    %v1003 = vpack.c.b16 %v899, %v891
    %v1004 = vpack.c.b16 %v900, %v892
    %v1005 = vpack.c.b16 %v901, %v893
    %v1006 = vpack.c.b16 %v902, %v894
    %v1007 = vpack.c.b16 %v911, %v903
    %v1008 = vpack.c.b16 %v912, %v904
    %v1009 = vpack.c.b16 %v913, %v905
    %v1010 = vpack.c.b16 %v914, %v906
    %v1011 = vpack.c.b16 %v915, %v907
    %v1012 = vpack.c.b16 %v916, %v908
    %v1013 = vpack.c.b16 %v917, %v909
    %v1014 = vpack.c.b16 %v918, %v910
    %v1015 = vpack.c.b16 %v927, %v919
    %v1016 = vpack.c.b16 %v928, %v920
    %v1017 = vpack.c.b16 %v929, %v921
    %v1018 = vpack.c.b16 %v930, %v922
    %v1019 = vpack.c.b16 %v931, %v923
    %v1020 = vpack.c.b16 %v932, %v924
    %v1021 = vpack.c.b16 %v933, %v925
    %v1022 = vpack.c.b16 %v934, %v926
    %v1023 = vpack.c.b16 %v943, %v935
    %v1024 = vpack.c.b16 %v944, %v936
    %v1025 = vpack.c.b16 %v945, %v937
    %v1026 = vpack.c.b16 %v946, %v938
    %v1027 = vpack.c.b16 %v947, %v939
    %v1028 = vpack.c.b16 %v948, %v940
    %v1029 = vpack.c.b16 %v949, %v941
    %v1030 = vpack.c.b16 %v950, %v942
    %v1031 = vpack.c.b16 %v959, %v951
    %v1032 = vpack.c.b16 %v960, %v952
    %v1033 = vpack.c.b16 %v961, %v953
    %v1034 = vpack.c.b16 %v962, %v954
    %v1035 = vpack.c.b16 %v963, %v955
    %v1036 = vpack.c.b16 %v964, %v956
    %v1037 = vpack.c.b16 %v965, %v957
    %v1038 = vpack.c.b16 %v966, %v958
    %v1039 = vpack.c.b16 %v975, %v967
    %v1040 = vpack.c.b16 %v976, %v968
    %v1041 = vpack.c.b16 %v977, %v969
    %v1042 = vpack.c.b16 %v978, %v970
    %v1043 = vpack.c.b16 %v979, %v971
    %v1044 = vpack.c.b16 %v980, %v972
    %v1045 = vpack.c.b16 %v981, %v973
    %v1046 = vpack.c.b16 %v982, %v974
    %1111 = vmatpush.bf16.msra.mxu0 %v1039
    %1112 = vmatpush.bf16.msra.mxu0 %v1031
    %1113 = vmatpush.bf16.msra.mxu0 %v1023
    %1114 = vmatpush.bf16.msra.mxu0 %v1015
    %1115 = vmatpush.bf16.msra.mxu0 %v1007
    %1116 = vmatpush.bf16.msra.mxu0 %v999
    %1117 = vmatpush.bf16.msra.mxu0 %v991
    %1118 = vmatpush.bf16.msra.mxu0 %v983
    %1119 = vmatmul.bf16.gmra.mxu0 %v758
    %v1120 = vpop.f32.mrf.mxu0
    %v1121 = vadd.f32 %v775, %v1120
    %v1122 = vpop.f32.mrf.mxu0
    %v1123 = vadd.f32 %v775, %v1122
    %1124 = vmatmul.bf16.gmra.mxu0 %v759
    %v1125 = vpop.f32.mrf.mxu0
    %v1126 = vadd.f32 %v775, %v1125
    %v1127 = vpop.f32.mrf.mxu0
    %v1128 = vadd.f32 %v775, %v1127
    %1129 = vmatmul.bf16.gmra.mxu0 %v760
    %v1130 = vpop.f32.mrf.mxu0
    %v1131 = vadd.f32 %v775, %v1130
    %v1132 = vpop.f32.mrf.mxu0
    %v1133 = vadd.f32 %v775, %v1132
    %1134 = vmatmul.bf16.gmra.mxu0 %v761
    %v1135 = vpop.f32.mrf.mxu0
    %v1136 = vadd.f32 %v775, %v1135
    %v1137 = vpop.f32.mrf.mxu0
    %v1138 = vadd.f32 %v775, %v1137
    %1139 = vmatmul.bf16.gmra.mxu0 %v762
    %v1140 = vpop.f32.mrf.mxu0
    %v1141 = vadd.f32 %v775, %v1140
    %v1142 = vpop.f32.mrf.mxu0
    %v1143 = vadd.f32 %v775, %v1142
    %1144 = vmatmul.bf16.gmra.mxu0 %v763
    %v1145 = vpop.f32.mrf.mxu0
    %v1146 = vadd.f32 %v775, %v1145
    %v1147 = vpop.f32.mrf.mxu0
    %v1148 = vadd.f32 %v775, %v1147
    %1149 = vmatmul.bf16.gmra.mxu0 %v764
    %v1150 = vpop.f32.mrf.mxu0
    %v1151 = vadd.f32 %v775, %v1150
    %v1152 = vpop.f32.mrf.mxu0
    %v1153 = vadd.f32 %v775, %v1152
    %1154 = vmatmul.bf16.gmra.mxu0 %v765
    %v1155 = vpop.f32.mrf.mxu0
    %v1156 = vadd.f32 %v775, %v1155
    %v1157 = vpop.f32.mrf.mxu0
    %v1158 = vadd.f32 %v775, %v1157
    %1159 = vmatmul.bf16.gmra.mxu0 %v766
    %v1160 = vpop.f32.mrf.mxu0
    %v1161 = vadd.f32 %v775, %v1160
    %v1162 = vpop.f32.mrf.mxu0
    %v1163 = vadd.f32 %v775, %v1162
    %1164 = vmatmul.bf16.gmra.mxu0 %v767
    %v1165 = vpop.f32.mrf.mxu0
    %v1166 = vadd.f32 %v775, %v1165
    %v1167 = vpop.f32.mrf.mxu0
    %v1168 = vadd.f32 %v775, %v1167
    %1169 = vmatmul.bf16.gmra.mxu0 %v768
    %v1170 = vpop.f32.mrf.mxu0
    %v1171 = vadd.f32 %v775, %v1170
    %v1172 = vpop.f32.mrf.mxu0
    %v1173 = vadd.f32 %v775, %v1172
    %1174 = vmatmul.bf16.gmra.mxu0 %v769
    %v1175 = vpop.f32.mrf.mxu0
    %v1176 = vadd.f32 %v775, %v1175
    %v1177 = vpop.f32.mrf.mxu0
    %v1178 = vadd.f32 %v775, %v1177
    %1179 = vmatmul.bf16.gmra.mxu0 %v770
    %v1180 = vpop.f32.mrf.mxu0
    %v1181 = vadd.f32 %v775, %v1180
    %v1182 = vpop.f32.mrf.mxu0
    %v1183 = vadd.f32 %v775, %v1182
    %1184 = vmatmul.bf16.gmra.mxu0 %v771
    %v1185 = vpop.f32.mrf.mxu0
    %v1186 = vadd.f32 %v775, %v1185
    %v1187 = vpop.f32.mrf.mxu0
    %v1188 = vadd.f32 %v775, %v1187
    %1189 = vmatmul.bf16.gmra.mxu0 %v772
    %v1190 = vpop.f32.mrf.mxu0
    %v1191 = vadd.f32 %v775, %v1190
    %v1192 = vpop.f32.mrf.mxu0
    %v1193 = vadd.f32 %v775, %v1192
    %1194 = vmatmul.bf16.gmra.mxu0 %v773
    %v1195 = vpop.f32.mrf.mxu0
    %v1196 = vadd.f32 %v775, %v1195
    %v1197 = vpop.f32.mrf.mxu0
    %v1198 = vadd.f32 %v775, %v1197
    %1199 = vdwg.mxu0
    %1200 = vmatpush.bf16.msra.mxu0 %v1040
    %1201 = vmatpush.bf16.msra.mxu0 %v1032
    %1202 = vmatpush.bf16.msra.mxu0 %v1024
    %1203 = vmatpush.bf16.msra.mxu0 %v1016
    %1204 = vmatpush.bf16.msra.mxu0 %v1008
    %1205 = vmatpush.bf16.msra.mxu0 %v1000
    %1206 = vmatpush.bf16.msra.mxu0 %v992
    %1207 = vmatpush.bf16.msra.mxu0 %v984
    %1208 = vmatmul.bf16.gmra.mxu0 %v758
    %v1209 = vpop.f32.mrf.mxu0
    %v1210 = vadd.f32 %v776, %v1209
    %v1211 = vpop.f32.mrf.mxu0
    %v1212 = vadd.f32 %v776, %v1211
    %1213 = vmatmul.bf16.gmra.mxu0 %v759
    %v1214 = vpop.f32.mrf.mxu0
    %v1215 = vadd.f32 %v776, %v1214
    %v1216 = vpop.f32.mrf.mxu0
    %v1217 = vadd.f32 %v776, %v1216
    %1218 = vmatmul.bf16.gmra.mxu0 %v760
    %v1219 = vpop.f32.mrf.mxu0
    %v1220 = vadd.f32 %v776, %v1219
    %v1221 = vpop.f32.mrf.mxu0
    %v1222 = vadd.f32 %v776, %v1221
    %1223 = vmatmul.bf16.gmra.mxu0 %v761
    %v1224 = vpop.f32.mrf.mxu0
    %v1225 = vadd.f32 %v776, %v1224
    %v1226 = vpop.f32.mrf.mxu0
    %v1227 = vadd.f32 %v776, %v1226
    %1228 = vmatmul.bf16.gmra.mxu0 %v762
    %v1229 = vpop.f32.mrf.mxu0
    %v1230 = vadd.f32 %v776, %v1229
    %v1231 = vpop.f32.mrf.mxu0
    %v1232 = vadd.f32 %v776, %v1231
    %1233 = vmatmul.bf16.gmra.mxu0 %v763
    %v1234 = vpop.f32.mrf.mxu0
    %v1235 = vadd.f32 %v776, %v1234
    %v1236 = vpop.f32.mrf.mxu0
    %v1237 = vadd.f32 %v776, %v1236
    %1238 = vmatmul.bf16.gmra.mxu0 %v764
    %v1239 = vpop.f32.mrf.mxu0
    %v1240 = vadd.f32 %v776, %v1239
    %v1241 = vpop.f32.mrf.mxu0
    %v1242 = vadd.f32 %v776, %v1241
    %1243 = vmatmul.bf16.gmra.mxu0 %v765
    %v1244 = vpop.f32.mrf.mxu0
    %v1245 = vadd.f32 %v776, %v1244
    %v1246 = vpop.f32.mrf.mxu0
    %v1247 = vadd.f32 %v776, %v1246
    %1248 = vmatmul.bf16.gmra.mxu0 %v766
    %v1249 = vpop.f32.mrf.mxu0
    %v1250 = vadd.f32 %v776, %v1249
    %v1251 = vpop.f32.mrf.mxu0
    %v1252 = vadd.f32 %v776, %v1251
    %1253 = vmatmul.bf16.gmra.mxu0 %v767
    %v1254 = vpop.f32.mrf.mxu0
    %v1255 = vadd.f32 %v776, %v1254
    %v1256 = vpop.f32.mrf.mxu0
    %v1257 = vadd.f32 %v776, %v1256
    %1258 = vmatmul.bf16.gmra.mxu0 %v768
    %v1259 = vpop.f32.mrf.mxu0
    %v1260 = vadd.f32 %v776, %v1259
    %v1261 = vpop.f32.mrf.mxu0
    %v1262 = vadd.f32 %v776, %v1261
    %1263 = vmatmul.bf16.gmra.mxu0 %v769
    %v1264 = vpop.f32.mrf.mxu0
    %v1265 = vadd.f32 %v776, %v1264
    %v1266 = vpop.f32.mrf.mxu0
    %v1267 = vadd.f32 %v776, %v1266
    %1268 = vmatmul.bf16.gmra.mxu0 %v770
    %v1269 = vpop.f32.mrf.mxu0
    %v1270 = vadd.f32 %v776, %v1269
    %v1271 = vpop.f32.mrf.mxu0
    %v1272 = vadd.f32 %v776, %v1271
    %1273 = vmatmul.bf16.gmra.mxu0 %v771
    %v1274 = vpop.f32.mrf.mxu0
    %v1275 = vadd.f32 %v776, %v1274
    %v1276 = vpop.f32.mrf.mxu0
    %v1277 = vadd.f32 %v776, %v1276
    %1278 = vmatmul.bf16.gmra.mxu0 %v772
    %v1279 = vpop.f32.mrf.mxu0
    %v1280 = vadd.f32 %v776, %v1279
    %v1281 = vpop.f32.mrf.mxu0
    %v1282 = vadd.f32 %v776, %v1281
    %1283 = vmatmul.bf16.gmra.mxu0 %v773
    %v1284 = vpop.f32.mrf.mxu0
    %v1285 = vadd.f32 %v776, %v1284
    %v1286 = vpop.f32.mrf.mxu0
    %v1287 = vadd.f32 %v776, %v1286
    %1288 = vdwg.mxu0
    %1289 = vmatpush.bf16.msra.mxu0 %v1041
    %1290 = vmatpush.bf16.msra.mxu0 %v1033
    %1291 = vmatpush.bf16.msra.mxu0 %v1025
    %1292 = vmatpush.bf16.msra.mxu0 %v1017
    %1293 = vmatpush.bf16.msra.mxu0 %v1009
    %1294 = vmatpush.bf16.msra.mxu0 %v1001
    %1295 = vmatpush.bf16.msra.mxu0 %v993
    %1296 = vmatpush.bf16.msra.mxu0 %v985
    %1297 = vmatmul.bf16.gmra.mxu0 %v758
    %v1298 = vpop.f32.mrf.mxu0
    %v1299 = vadd.f32 %v777, %v1298
    %v1300 = vpop.f32.mrf.mxu0
    %v1301 = vadd.f32 %v777, %v1300
    %1302 = vmatmul.bf16.gmra.mxu0 %v759
    %v1303 = vpop.f32.mrf.mxu0
    %v1304 = vadd.f32 %v777, %v1303
    %v1305 = vpop.f32.mrf.mxu0
    %v1306 = vadd.f32 %v777, %v1305
    %1307 = vmatmul.bf16.gmra.mxu0 %v760
    %v1308 = vpop.f32.mrf.mxu0
    %v1309 = vadd.f32 %v777, %v1308
    %v1310 = vpop.f32.mrf.mxu0
    %v1311 = vadd.f32 %v777, %v1310
    %1312 = vmatmul.bf16.gmra.mxu0 %v761
    %v1313 = vpop.f32.mrf.mxu0
    %v1314 = vadd.f32 %v777, %v1313
    %v1315 = vpop.f32.mrf.mxu0
    %v1316 = vadd.f32 %v777, %v1315
    %1317 = vmatmul.bf16.gmra.mxu0 %v762
    %v1318 = vpop.f32.mrf.mxu0
    %v1319 = vadd.f32 %v777, %v1318
    %v1320 = vpop.f32.mrf.mxu0
    %v1321 = vadd.f32 %v777, %v1320
    %1322 = vmatmul.bf16.gmra.mxu0 %v763
    %v1323 = vpop.f32.mrf.mxu0
    %v1324 = vadd.f32 %v777, %v1323
    %v1325 = vpop.f32.mrf.mxu0
    %v1326 = vadd.f32 %v777, %v1325
    %1327 = vmatmul.bf16.gmra.mxu0 %v764
    %v1328 = vpop.f32.mrf.mxu0
    %v1329 = vadd.f32 %v777, %v1328
    %v1330 = vpop.f32.mrf.mxu0
    %v1331 = vadd.f32 %v777, %v1330
    %1332 = vmatmul.bf16.gmra.mxu0 %v765
    %v1333 = vpop.f32.mrf.mxu0
    %v1334 = vadd.f32 %v777, %v1333
    %v1335 = vpop.f32.mrf.mxu0
    %v1336 = vadd.f32 %v777, %v1335
    %1337 = vmatmul.bf16.gmra.mxu0 %v766
    %v1338 = vpop.f32.mrf.mxu0
    %v1339 = vadd.f32 %v777, %v1338
    %v1340 = vpop.f32.mrf.mxu0
    %v1341 = vadd.f32 %v777, %v1340
    %1342 = vmatmul.bf16.gmra.mxu0 %v767
    %v1343 = vpop.f32.mrf.mxu0
    %v1344 = vadd.f32 %v777, %v1343
    %v1345 = vpop.f32.mrf.mxu0
    %v1346 = vadd.f32 %v777, %v1345
    %1347 = vmatmul.bf16.gmra.mxu0 %v768
    %v1348 = vpop.f32.mrf.mxu0
    %v1349 = vadd.f32 %v777, %v1348
    %v1350 = vpop.f32.mrf.mxu0
    %v1351 = vadd.f32 %v777, %v1350
    %1352 = vmatmul.bf16.gmra.mxu0 %v769
    %v1353 = vpop.f32.mrf.mxu0
    %v1354 = vadd.f32 %v777, %v1353
    %v1355 = vpop.f32.mrf.mxu0
    %v1356 = vadd.f32 %v777, %v1355
    %1357 = vmatmul.bf16.gmra.mxu0 %v770
    %v1358 = vpop.f32.mrf.mxu0
    %v1359 = vadd.f32 %v777, %v1358
    %v1360 = vpop.f32.mrf.mxu0
    %v1361 = vadd.f32 %v777, %v1360
    %1362 = vmatmul.bf16.gmra.mxu0 %v771
    %v1363 = vpop.f32.mrf.mxu0
    %v1364 = vadd.f32 %v777, %v1363
    %v1365 = vpop.f32.mrf.mxu0
    %v1366 = vadd.f32 %v777, %v1365
    %1367 = vmatmul.bf16.gmra.mxu0 %v772
    %v1368 = vpop.f32.mrf.mxu0
    %v1369 = vadd.f32 %v777, %v1368
    %v1370 = vpop.f32.mrf.mxu0
    %v1371 = vadd.f32 %v777, %v1370
    %1372 = vmatmul.bf16.gmra.mxu0 %v773
    %v1373 = vpop.f32.mrf.mxu0
    %v1374 = vadd.f32 %v777, %v1373
    %v1375 = vpop.f32.mrf.mxu0
    %v1376 = vadd.f32 %v777, %v1375
    %1377 = vdwg.mxu0
    %1378 = vmatpush.bf16.msra.mxu0 %v1042
    %1379 = vmatpush.bf16.msra.mxu0 %v1034
    %1380 = vmatpush.bf16.msra.mxu0 %v1026
    %1381 = vmatpush.bf16.msra.mxu0 %v1018
    %1382 = vmatpush.bf16.msra.mxu0 %v1010
    %1383 = vmatpush.bf16.msra.mxu0 %v1002
    %1384 = vmatpush.bf16.msra.mxu0 %v994
    %1385 = vmatpush.bf16.msra.mxu0 %v986
    %1386 = vmatmul.bf16.gmra.mxu0 %v758
    %v1387 = vpop.f32.mrf.mxu0
    %v1388 = vadd.f32 %v778, %v1387
    %v1389 = vpop.f32.mrf.mxu0
    %v1390 = vadd.f32 %v778, %v1389
    %1391 = vmatmul.bf16.gmra.mxu0 %v759
    %v1392 = vpop.f32.mrf.mxu0
    %v1393 = vadd.f32 %v778, %v1392
    %v1394 = vpop.f32.mrf.mxu0
    %v1395 = vadd.f32 %v778, %v1394
    %1396 = vmatmul.bf16.gmra.mxu0 %v760
    %v1397 = vpop.f32.mrf.mxu0
    %v1398 = vadd.f32 %v778, %v1397
    %v1399 = vpop.f32.mrf.mxu0
    %v1400 = vadd.f32 %v778, %v1399
    %1401 = vmatmul.bf16.gmra.mxu0 %v761
    %v1402 = vpop.f32.mrf.mxu0
    %v1403 = vadd.f32 %v778, %v1402
    %v1404 = vpop.f32.mrf.mxu0
    %v1405 = vadd.f32 %v778, %v1404
    %1406 = vmatmul.bf16.gmra.mxu0 %v762
    %v1407 = vpop.f32.mrf.mxu0
    %v1408 = vadd.f32 %v778, %v1407
    %v1409 = vpop.f32.mrf.mxu0
    %v1410 = vadd.f32 %v778, %v1409
    %1411 = vmatmul.bf16.gmra.mxu0 %v763
    %v1412 = vpop.f32.mrf.mxu0
    %v1413 = vadd.f32 %v778, %v1412
    %v1414 = vpop.f32.mrf.mxu0
    %v1415 = vadd.f32 %v778, %v1414
    %1416 = vmatmul.bf16.gmra.mxu0 %v764
    %v1417 = vpop.f32.mrf.mxu0
    %v1418 = vadd.f32 %v778, %v1417
    %v1419 = vpop.f32.mrf.mxu0
    %v1420 = vadd.f32 %v778, %v1419
    %1421 = vmatmul.bf16.gmra.mxu0 %v765
    %v1422 = vpop.f32.mrf.mxu0
    %v1423 = vadd.f32 %v778, %v1422
    %v1424 = vpop.f32.mrf.mxu0
    %v1425 = vadd.f32 %v778, %v1424
    %1426 = vmatmul.bf16.gmra.mxu0 %v766
    %v1427 = vpop.f32.mrf.mxu0
    %v1428 = vadd.f32 %v778, %v1427
    %v1429 = vpop.f32.mrf.mxu0
    %v1430 = vadd.f32 %v778, %v1429
    %1431 = vmatmul.bf16.gmra.mxu0 %v767
    %v1432 = vpop.f32.mrf.mxu0
    %v1433 = vadd.f32 %v778, %v1432
    %v1434 = vpop.f32.mrf.mxu0
    %v1435 = vadd.f32 %v778, %v1434
    %1436 = vmatmul.bf16.gmra.mxu0 %v768
    %v1437 = vpop.f32.mrf.mxu0
    %v1438 = vadd.f32 %v778, %v1437
    %v1439 = vpop.f32.mrf.mxu0
    %v1440 = vadd.f32 %v778, %v1439
    %1441 = vmatmul.bf16.gmra.mxu0 %v769
    %v1442 = vpop.f32.mrf.mxu0
    %v1443 = vadd.f32 %v778, %v1442
    %v1444 = vpop.f32.mrf.mxu0
    %v1445 = vadd.f32 %v778, %v1444
    %1446 = vmatmul.bf16.gmra.mxu0 %v770
    %v1447 = vpop.f32.mrf.mxu0
    %v1448 = vadd.f32 %v778, %v1447
    %v1449 = vpop.f32.mrf.mxu0
    %v1450 = vadd.f32 %v778, %v1449
    %1451 = vmatmul.bf16.gmra.mxu0 %v771
    %v1452 = vpop.f32.mrf.mxu0
    %v1453 = vadd.f32 %v778, %v1452
    %v1454 = vpop.f32.mrf.mxu0
    %v1455 = vadd.f32 %v778, %v1454
    %1456 = vmatmul.bf16.gmra.mxu0 %v772
    %v1457 = vpop.f32.mrf.mxu0
    %v1458 = vadd.f32 %v778, %v1457
    %v1459 = vpop.f32.mrf.mxu0
    %v1460 = vadd.f32 %v778, %v1459
    %1461 = vmatmul.bf16.gmra.mxu0 %v773
    %v1462 = vpop.f32.mrf.mxu0
    %v1463 = vadd.f32 %v778, %v1462
    %v1464 = vpop.f32.mrf.mxu0
    %v1465 = vadd.f32 %v778, %v1464
    %1466 = vdwg.mxu0
    %1467 = vmatpush.bf16.msra.mxu0 %v1043
    %1468 = vmatpush.bf16.msra.mxu0 %v1035
    %1469 = vmatpush.bf16.msra.mxu0 %v1027
    %1470 = vmatpush.bf16.msra.mxu0 %v1019
    %1471 = vmatpush.bf16.msra.mxu0 %v1011
    %1472 = vmatpush.bf16.msra.mxu0 %v1003
    %1473 = vmatpush.bf16.msra.mxu0 %v995
    %1474 = vmatpush.bf16.msra.mxu0 %v987
    %1475 = vmatmul.bf16.gmra.mxu0 %v758
    %v1476 = vpop.f32.mrf.mxu0
    %v1477 = vadd.f32 %v779, %v1476
    %v1478 = vpop.f32.mrf.mxu0
    %v1479 = vadd.f32 %v779, %v1478
    %1480 = vmatmul.bf16.gmra.mxu0 %v759
    %v1481 = vpop.f32.mrf.mxu0
    %v1482 = vadd.f32 %v779, %v1481
    %v1483 = vpop.f32.mrf.mxu0
    %v1484 = vadd.f32 %v779, %v1483
    %1485 = vmatmul.bf16.gmra.mxu0 %v760
    %v1486 = vpop.f32.mrf.mxu0
    %v1487 = vadd.f32 %v779, %v1486
    %v1488 = vpop.f32.mrf.mxu0
    %v1489 = vadd.f32 %v779, %v1488
    %1490 = vmatmul.bf16.gmra.mxu0 %v761
    %v1491 = vpop.f32.mrf.mxu0
    %v1492 = vadd.f32 %v779, %v1491
    %v1493 = vpop.f32.mrf.mxu0
    %v1494 = vadd.f32 %v779, %v1493
    %1495 = vmatmul.bf16.gmra.mxu0 %v762
    %v1496 = vpop.f32.mrf.mxu0
    %v1497 = vadd.f32 %v779, %v1496
    %v1498 = vpop.f32.mrf.mxu0
    %v1499 = vadd.f32 %v779, %v1498
    %1500 = vmatmul.bf16.gmra.mxu0 %v763
    %v1501 = vpop.f32.mrf.mxu0
    %v1502 = vadd.f32 %v779, %v1501
    %v1503 = vpop.f32.mrf.mxu0
    %v1504 = vadd.f32 %v779, %v1503
    %1505 = vmatmul.bf16.gmra.mxu0 %v764
    %v1506 = vpop.f32.mrf.mxu0
    %v1507 = vadd.f32 %v779, %v1506
    %v1508 = vpop.f32.mrf.mxu0
    %v1509 = vadd.f32 %v779, %v1508
    %1510 = vmatmul.bf16.gmra.mxu0 %v765
    %v1511 = vpop.f32.mrf.mxu0
    %v1512 = vadd.f32 %v779, %v1511
    %v1513 = vpop.f32.mrf.mxu0
    %v1514 = vadd.f32 %v779, %v1513
    %1515 = vmatmul.bf16.gmra.mxu0 %v766
    %v1516 = vpop.f32.mrf.mxu0
    %v1517 = vadd.f32 %v779, %v1516
    %v1518 = vpop.f32.mrf.mxu0
    %v1519 = vadd.f32 %v779, %v1518
    %1520 = vmatmul.bf16.gmra.mxu0 %v767
    %v1521 = vpop.f32.mrf.mxu0
    %v1522 = vadd.f32 %v779, %v1521
    %v1523 = vpop.f32.mrf.mxu0
    %v1524 = vadd.f32 %v779, %v1523
    %1525 = vmatmul.bf16.gmra.mxu0 %v768
    %v1526 = vpop.f32.mrf.mxu0
    %v1527 = vadd.f32 %v779, %v1526
    %v1528 = vpop.f32.mrf.mxu0
    %v1529 = vadd.f32 %v779, %v1528
    %1530 = vmatmul.bf16.gmra.mxu0 %v769
    %v1531 = vpop.f32.mrf.mxu0
    %v1532 = vadd.f32 %v779, %v1531
    %v1533 = vpop.f32.mrf.mxu0
    %v1534 = vadd.f32 %v779, %v1533
    %1535 = vmatmul.bf16.gmra.mxu0 %v770
    %v1536 = vpop.f32.mrf.mxu0
    %v1537 = vadd.f32 %v779, %v1536
    %v1538 = vpop.f32.mrf.mxu0
    %v1539 = vadd.f32 %v779, %v1538
    %1540 = vmatmul.bf16.gmra.mxu0 %v771
    %v1541 = vpop.f32.mrf.mxu0
    %v1542 = vadd.f32 %v779, %v1541
    %v1543 = vpop.f32.mrf.mxu0
    %v1544 = vadd.f32 %v779, %v1543
    %1545 = vmatmul.bf16.gmra.mxu0 %v772
    %v1546 = vpop.f32.mrf.mxu0
    %v1547 = vadd.f32 %v779, %v1546
    %v1548 = vpop.f32.mrf.mxu0
    %v1549 = vadd.f32 %v779, %v1548
    %1550 = vmatmul.bf16.gmra.mxu0 %v773
    %v1551 = vpop.f32.mrf.mxu0
    %v1552 = vadd.f32 %v779, %v1551
    %v1553 = vpop.f32.mrf.mxu0
    %v1554 = vadd.f32 %v779, %v1553
    %1555 = vdwg.mxu0
    %1556 = vmatpush.bf16.msra.mxu0 %v1044
    %1557 = vmatpush.bf16.msra.mxu0 %v1036
    %1558 = vmatpush.bf16.msra.mxu0 %v1028
    %1559 = vmatpush.bf16.msra.mxu0 %v1020
    %1560 = vmatpush.bf16.msra.mxu0 %v1012
    %1561 = vmatpush.bf16.msra.mxu0 %v1004
    %1562 = vmatpush.bf16.msra.mxu0 %v996
    %1563 = vmatpush.bf16.msra.mxu0 %v988
    %1564 = vmatmul.bf16.gmra.mxu0 %v758
    %v1565 = vpop.f32.mrf.mxu0
    %v1566 = vadd.f32 %v780, %v1565
    %v1567 = vpop.f32.mrf.mxu0
    %v1568 = vadd.f32 %v780, %v1567
    %1569 = vmatmul.bf16.gmra.mxu0 %v759
    %v1570 = vpop.f32.mrf.mxu0
    %v1571 = vadd.f32 %v780, %v1570
    %v1572 = vpop.f32.mrf.mxu0
    %v1573 = vadd.f32 %v780, %v1572
    %1574 = vmatmul.bf16.gmra.mxu0 %v760
    %v1575 = vpop.f32.mrf.mxu0
    %v1576 = vadd.f32 %v780, %v1575
    %v1577 = vpop.f32.mrf.mxu0
    %v1578 = vadd.f32 %v780, %v1577
    %1579 = vmatmul.bf16.gmra.mxu0 %v761
    %v1580 = vpop.f32.mrf.mxu0
    %v1581 = vadd.f32 %v780, %v1580
    %v1582 = vpop.f32.mrf.mxu0
    %v1583 = vadd.f32 %v780, %v1582
    %1584 = vmatmul.bf16.gmra.mxu0 %v762
    %v1585 = vpop.f32.mrf.mxu0
    %v1586 = vadd.f32 %v780, %v1585
    %v1587 = vpop.f32.mrf.mxu0
    %v1588 = vadd.f32 %v780, %v1587
    %1589 = vmatmul.bf16.gmra.mxu0 %v763
    %v1590 = vpop.f32.mrf.mxu0
    %v1591 = vadd.f32 %v780, %v1590
    %v1592 = vpop.f32.mrf.mxu0
    %v1593 = vadd.f32 %v780, %v1592
    %1594 = vmatmul.bf16.gmra.mxu0 %v764
    %v1595 = vpop.f32.mrf.mxu0
    %v1596 = vadd.f32 %v780, %v1595
    %v1597 = vpop.f32.mrf.mxu0
    %v1598 = vadd.f32 %v780, %v1597
    %1599 = vmatmul.bf16.gmra.mxu0 %v765
    %v1600 = vpop.f32.mrf.mxu0
    %v1601 = vadd.f32 %v780, %v1600
    %v1602 = vpop.f32.mrf.mxu0
    %v1603 = vadd.f32 %v780, %v1602
    %1604 = vmatmul.bf16.gmra.mxu0 %v766
    %v1605 = vpop.f32.mrf.mxu0
    %v1606 = vadd.f32 %v780, %v1605
    %v1607 = vpop.f32.mrf.mxu0
    %v1608 = vadd.f32 %v780, %v1607
    %1609 = vmatmul.bf16.gmra.mxu0 %v767
    %v1610 = vpop.f32.mrf.mxu0
    %v1611 = vadd.f32 %v780, %v1610
    %v1612 = vpop.f32.mrf.mxu0
    %v1613 = vadd.f32 %v780, %v1612
    %1614 = vmatmul.bf16.gmra.mxu0 %v768
    %v1615 = vpop.f32.mrf.mxu0
    %v1616 = vadd.f32 %v780, %v1615
    %v1617 = vpop.f32.mrf.mxu0
    %v1618 = vadd.f32 %v780, %v1617
    %1619 = vmatmul.bf16.gmra.mxu0 %v769
    %v1620 = vpop.f32.mrf.mxu0
    %v1621 = vadd.f32 %v780, %v1620
    %v1622 = vpop.f32.mrf.mxu0
    %v1623 = vadd.f32 %v780, %v1622
    %1624 = vmatmul.bf16.gmra.mxu0 %v770
    %v1625 = vpop.f32.mrf.mxu0
    %v1626 = vadd.f32 %v780, %v1625
    %v1627 = vpop.f32.mrf.mxu0
    %v1628 = vadd.f32 %v780, %v1627
    %1629 = vmatmul.bf16.gmra.mxu0 %v771
    %v1630 = vpop.f32.mrf.mxu0
    %v1631 = vadd.f32 %v780, %v1630
    %v1632 = vpop.f32.mrf.mxu0
    %v1633 = vadd.f32 %v780, %v1632
    %1634 = vmatmul.bf16.gmra.mxu0 %v772
    %v1635 = vpop.f32.mrf.mxu0
    %v1636 = vadd.f32 %v780, %v1635
    %v1637 = vpop.f32.mrf.mxu0
    %v1638 = vadd.f32 %v780, %v1637
    %1639 = vmatmul.bf16.gmra.mxu0 %v773
    %v1640 = vpop.f32.mrf.mxu0
    %v1641 = vadd.f32 %v780, %v1640
    %v1642 = vpop.f32.mrf.mxu0
    %v1643 = vadd.f32 %v780, %v1642
    %1644 = vdwg.mxu0
    %1645 = vmatpush.bf16.msra.mxu0 %v1045
    %1646 = vmatpush.bf16.msra.mxu0 %v1037
    %1647 = vmatpush.bf16.msra.mxu0 %v1029
    %1648 = vmatpush.bf16.msra.mxu0 %v1021
    %1649 = vmatpush.bf16.msra.mxu0 %v1013
    %1650 = vmatpush.bf16.msra.mxu0 %v1005
    %1651 = vmatpush.bf16.msra.mxu0 %v997
    %1652 = vmatpush.bf16.msra.mxu0 %v989
    %1653 = vmatmul.bf16.gmra.mxu0 %v758
    %v1654 = vpop.f32.mrf.mxu0
    %v1655 = vadd.f32 %v781, %v1654
    %v1656 = vpop.f32.mrf.mxu0
    %v1657 = vadd.f32 %v781, %v1656
    %1658 = vmatmul.bf16.gmra.mxu0 %v759
    %v1659 = vpop.f32.mrf.mxu0
    %v1660 = vadd.f32 %v781, %v1659
    %v1661 = vpop.f32.mrf.mxu0
    %v1662 = vadd.f32 %v781, %v1661
    %1663 = vmatmul.bf16.gmra.mxu0 %v760
    %v1664 = vpop.f32.mrf.mxu0
    %v1665 = vadd.f32 %v781, %v1664
    %v1666 = vpop.f32.mrf.mxu0
    %v1667 = vadd.f32 %v781, %v1666
    %1668 = vmatmul.bf16.gmra.mxu0 %v761
    %v1669 = vpop.f32.mrf.mxu0
    %v1670 = vadd.f32 %v781, %v1669
    %v1671 = vpop.f32.mrf.mxu0
    %v1672 = vadd.f32 %v781, %v1671
    %1673 = vmatmul.bf16.gmra.mxu0 %v762
    %v1674 = vpop.f32.mrf.mxu0
    %v1675 = vadd.f32 %v781, %v1674
    %v1676 = vpop.f32.mrf.mxu0
    %v1677 = vadd.f32 %v781, %v1676
    %1678 = vmatmul.bf16.gmra.mxu0 %v763
    %v1679 = vpop.f32.mrf.mxu0
    %v1680 = vadd.f32 %v781, %v1679
    %v1681 = vpop.f32.mrf.mxu0
    %v1682 = vadd.f32 %v781, %v1681
    %1683 = vmatmul.bf16.gmra.mxu0 %v764
    %v1684 = vpop.f32.mrf.mxu0
    %v1685 = vadd.f32 %v781, %v1684
    %v1686 = vpop.f32.mrf.mxu0
    %v1687 = vadd.f32 %v781, %v1686
    %1688 = vmatmul.bf16.gmra.mxu0 %v765
    %v1689 = vpop.f32.mrf.mxu0
    %v1690 = vadd.f32 %v781, %v1689
    %v1691 = vpop.f32.mrf.mxu0
    %v1692 = vadd.f32 %v781, %v1691
    %1693 = vmatmul.bf16.gmra.mxu0 %v766
    %v1694 = vpop.f32.mrf.mxu0
    %v1695 = vadd.f32 %v781, %v1694
    %v1696 = vpop.f32.mrf.mxu0
    %v1697 = vadd.f32 %v781, %v1696
    %1698 = vmatmul.bf16.gmra.mxu0 %v767
    %v1699 = vpop.f32.mrf.mxu0
    %v1700 = vadd.f32 %v781, %v1699
    %v1701 = vpop.f32.mrf.mxu0
    %v1702 = vadd.f32 %v781, %v1701
    %1703 = vmatmul.bf16.gmra.mxu0 %v768
    %v1704 = vpop.f32.mrf.mxu0
    %v1705 = vadd.f32 %v781, %v1704
    %v1706 = vpop.f32.mrf.mxu0
    %v1707 = vadd.f32 %v781, %v1706
    %1708 = vmatmul.bf16.gmra.mxu0 %v769
    %v1709 = vpop.f32.mrf.mxu0
    %v1710 = vadd.f32 %v781, %v1709
    %v1711 = vpop.f32.mrf.mxu0
    %v1712 = vadd.f32 %v781, %v1711
    %1713 = vmatmul.bf16.gmra.mxu0 %v770
    %v1714 = vpop.f32.mrf.mxu0
    %v1715 = vadd.f32 %v781, %v1714
    %v1716 = vpop.f32.mrf.mxu0
    %v1717 = vadd.f32 %v781, %v1716
    %1718 = vmatmul.bf16.gmra.mxu0 %v771
    %v1719 = vpop.f32.mrf.mxu0
    %v1720 = vadd.f32 %v781, %v1719
    %v1721 = vpop.f32.mrf.mxu0
    %v1722 = vadd.f32 %v781, %v1721
    %1723 = vmatmul.bf16.gmra.mxu0 %v772
    %v1724 = vpop.f32.mrf.mxu0
    %v1725 = vadd.f32 %v781, %v1724
    %v1726 = vpop.f32.mrf.mxu0
    %v1727 = vadd.f32 %v781, %v1726
    %1728 = vmatmul.bf16.gmra.mxu0 %v773
    %v1729 = vpop.f32.mrf.mxu0
    %v1730 = vadd.f32 %v781, %v1729
    %v1731 = vpop.f32.mrf.mxu0
    %v1732 = vadd.f32 %v781, %v1731
    %1733 = vdwg.mxu0
    %1734 = vmatpush.bf16.msra.mxu0 %v1046
    %1735 = vmatpush.bf16.msra.mxu0 %v1038
    %1736 = vmatpush.bf16.msra.mxu0 %v1030
    %1737 = vmatpush.bf16.msra.mxu0 %v1022
    %1738 = vmatpush.bf16.msra.mxu0 %v1014
    %1739 = vmatpush.bf16.msra.mxu0 %v1006
    %1740 = vmatpush.bf16.msra.mxu0 %v998
    %1741 = vmatpush.bf16.msra.mxu0 %v990
    %1742 = vmatmul.bf16.gmra.mxu0 %v758
    %v1743 = vpop.f32.mrf.mxu0
    %v1744 = vadd.f32 %v782, %v1743
    %v1745 = vpop.f32.mrf.mxu0
    %v1746 = vadd.f32 %v782, %v1745
    %1747 = vmatmul.bf16.gmra.mxu0 %v759
    %v1748 = vpop.f32.mrf.mxu0
    %v1749 = vadd.f32 %v782, %v1748
    %v1750 = vpop.f32.mrf.mxu0
    %v1751 = vadd.f32 %v782, %v1750
    %1752 = vmatmul.bf16.gmra.mxu0 %v760
    %v1753 = vpop.f32.mrf.mxu0
    %v1754 = vadd.f32 %v782, %v1753
    %v1755 = vpop.f32.mrf.mxu0
    %v1756 = vadd.f32 %v782, %v1755
    %1757 = vmatmul.bf16.gmra.mxu0 %v761
    %v1758 = vpop.f32.mrf.mxu0
    %v1759 = vadd.f32 %v782, %v1758
    %v1760 = vpop.f32.mrf.mxu0
    %v1761 = vadd.f32 %v782, %v1760
    %1762 = vmatmul.bf16.gmra.mxu0 %v762
    %v1763 = vpop.f32.mrf.mxu0
    %v1764 = vadd.f32 %v782, %v1763
    %v1765 = vpop.f32.mrf.mxu0
    %v1766 = vadd.f32 %v782, %v1765
    %1767 = vmatmul.bf16.gmra.mxu0 %v763
    %v1768 = vpop.f32.mrf.mxu0
    %v1769 = vadd.f32 %v782, %v1768
    %v1770 = vpop.f32.mrf.mxu0
    %v1771 = vadd.f32 %v782, %v1770
    %1772 = vmatmul.bf16.gmra.mxu0 %v764
    %v1773 = vpop.f32.mrf.mxu0
    %v1774 = vadd.f32 %v782, %v1773
    %v1775 = vpop.f32.mrf.mxu0
    %v1776 = vadd.f32 %v782, %v1775
    %1777 = vmatmul.bf16.gmra.mxu0 %v765
    %v1778 = vpop.f32.mrf.mxu0
    %v1779 = vadd.f32 %v782, %v1778
    %v1780 = vpop.f32.mrf.mxu0
    %v1781 = vadd.f32 %v782, %v1780
    %1782 = vmatmul.bf16.gmra.mxu0 %v766
    %v1783 = vpop.f32.mrf.mxu0
    %v1784 = vadd.f32 %v782, %v1783
    %v1785 = vpop.f32.mrf.mxu0
    %v1786 = vadd.f32 %v782, %v1785
    %1787 = vmatmul.bf16.gmra.mxu0 %v767
    %v1788 = vpop.f32.mrf.mxu0
    %v1789 = vadd.f32 %v782, %v1788
    %v1790 = vpop.f32.mrf.mxu0
    %v1791 = vadd.f32 %v782, %v1790
    %1792 = vmatmul.bf16.gmra.mxu0 %v768
    %v1793 = vpop.f32.mrf.mxu0
    %v1794 = vadd.f32 %v782, %v1793
    %v1795 = vpop.f32.mrf.mxu0
    %v1796 = vadd.f32 %v782, %v1795
    %1797 = vmatmul.bf16.gmra.mxu0 %v769
    %v1798 = vpop.f32.mrf.mxu0
    %v1799 = vadd.f32 %v782, %v1798
    %v1800 = vpop.f32.mrf.mxu0
    %v1801 = vadd.f32 %v782, %v1800
    %1802 = vmatmul.bf16.gmra.mxu0 %v770
    %v1803 = vpop.f32.mrf.mxu0
    %v1804 = vadd.f32 %v782, %v1803
    %v1805 = vpop.f32.mrf.mxu0
    %v1806 = vadd.f32 %v782, %v1805
    %1807 = vmatmul.bf16.gmra.mxu0 %v771
    %v1808 = vpop.f32.mrf.mxu0
    %v1809 = vadd.f32 %v782, %v1808
    %v1810 = vpop.f32.mrf.mxu0
    %v1811 = vadd.f32 %v782, %v1810
    %1812 = vmatmul.bf16.gmra.mxu0 %v772
    %v1813 = vpop.f32.mrf.mxu0
    %v1814 = vadd.f32 %v782, %v1813
    %v1815 = vpop.f32.mrf.mxu0
    %v1816 = vadd.f32 %v782, %v1815
    %1817 = vmatmul.bf16.gmra.mxu0 %v773
    %v1818 = vpop.f32.mrf.mxu0
    %v1819 = vadd.f32 %v782, %v1818
    %v1820 = vpop.f32.mrf.mxu0
    %v1821 = vadd.f32 %v782, %v1820
    %1822 = vdwg.mxu0
    %v1823 = vmax.f32 %v1121, %v1141
    %v1824 = vmax.f32 %v1210, %v1230
    %v1825 = vmax.f32 %v1299, %v1319
    %v1826 = vmax.f32 %v1388, %v1408
    %v1827 = vmax.f32 %v1477, %v1497
    %v1828 = vmax.f32 %v1566, %v1586
    %v1829 = vmax.f32 %v1655, %v1675
    %v1830 = vmax.f32 %v1744, %v1764
    %v1831 = vmax.f32 %v1123, %v1143
    %v1832 = vmax.f32 %v1212, %v1232
    %v1833 = vmax.f32 %v1301, %v1321
    %v1834 = vmax.f32 %v1390, %v1410
    %v1835 = vmax.f32 %v1479, %v1499
    %v1836 = vmax.f32 %v1568, %v1588
    %v1837 = vmax.f32 %v1657, %v1677
    %v1838 = vmax.f32 %v1746, %v1766
    %v1839 = vmax.f32 %v1126, %v1146
    %v1840 = vmax.f32 %v1215, %v1235
    %v1841 = vmax.f32 %v1304, %v1324
    %v1842 = vmax.f32 %v1393, %v1413
    %v1843 = vmax.f32 %v1482, %v1502
    %v1844 = vmax.f32 %v1571, %v1591
    %v1845 = vmax.f32 %v1660, %v1680
    %v1846 = vmax.f32 %v1749, %v1769
    %v1847 = vmax.f32 %v1128, %v1148
    %v1848 = vmax.f32 %v1217, %v1237
    %v1849 = vmax.f32 %v1306, %v1326
    %v1850 = vmax.f32 %v1395, %v1415
    %v1851 = vmax.f32 %v1484, %v1504
    %v1852 = vmax.f32 %v1573, %v1593
    %v1853 = vmax.f32 %v1662, %v1682
    %v1854 = vmax.f32 %v1751, %v1771
    %v1855 = vmax.f32 %v1131, %v1151
    %v1856 = vmax.f32 %v1220, %v1240
    %v1857 = vmax.f32 %v1309, %v1329
    %v1858 = vmax.f32 %v1398, %v1418
    %v1859 = vmax.f32 %v1487, %v1507
    %v1860 = vmax.f32 %v1576, %v1596
    %v1861 = vmax.f32 %v1665, %v1685
    %v1862 = vmax.f32 %v1754, %v1774
    %v1863 = vmax.f32 %v1133, %v1153
    %v1864 = vmax.f32 %v1222, %v1242
    %v1865 = vmax.f32 %v1311, %v1331
    %v1866 = vmax.f32 %v1400, %v1420
    %v1867 = vmax.f32 %v1489, %v1509
    %v1868 = vmax.f32 %v1578, %v1598
    %v1869 = vmax.f32 %v1667, %v1687
    %v1870 = vmax.f32 %v1756, %v1776
    %v1871 = vmax.f32 %v1136, %v1156
    %v1872 = vmax.f32 %v1225, %v1245
    %v1873 = vmax.f32 %v1314, %v1334
    %v1874 = vmax.f32 %v1403, %v1423
    %v1875 = vmax.f32 %v1492, %v1512
    %v1876 = vmax.f32 %v1581, %v1601
    %v1877 = vmax.f32 %v1670, %v1690
    %v1878 = vmax.f32 %v1759, %v1779
    %v1879 = vmax.f32 %v1138, %v1158
    %v1880 = vmax.f32 %v1227, %v1247
    %v1881 = vmax.f32 %v1316, %v1336
    %v1882 = vmax.f32 %v1405, %v1425
    %v1883 = vmax.f32 %v1494, %v1514
    %v1884 = vmax.f32 %v1583, %v1603
    %v1885 = vmax.f32 %v1672, %v1692
    %v1886 = vmax.f32 %v1761, %v1781
    %v1887 = vmax.f32 %v1161, %v1181
    %v1888 = vmax.f32 %v1250, %v1270
    %v1889 = vmax.f32 %v1339, %v1359
    %v1890 = vmax.f32 %v1428, %v1448
    %v1891 = vmax.f32 %v1517, %v1537
    %v1892 = vmax.f32 %v1606, %v1626
    %v1893 = vmax.f32 %v1695, %v1715
    %v1894 = vmax.f32 %v1784, %v1804
    %v1895 = vmax.f32 %v1163, %v1183
    %v1896 = vmax.f32 %v1252, %v1272
    %v1897 = vmax.f32 %v1341, %v1361
    %v1898 = vmax.f32 %v1430, %v1450
    %v1899 = vmax.f32 %v1519, %v1539
    %v1900 = vmax.f32 %v1608, %v1628
    %v1901 = vmax.f32 %v1697, %v1717
    %v1902 = vmax.f32 %v1786, %v1806
    %v1903 = vmax.f32 %v1166, %v1186
    %v1904 = vmax.f32 %v1255, %v1275
    %v1905 = vmax.f32 %v1344, %v1364
    %v1906 = vmax.f32 %v1433, %v1453
    %v1907 = vmax.f32 %v1522, %v1542
    %v1908 = vmax.f32 %v1611, %v1631
    %v1909 = vmax.f32 %v1700, %v1720
    %v1910 = vmax.f32 %v1789, %v1809
    %v1911 = vmax.f32 %v1168, %v1188
    %v1912 = vmax.f32 %v1257, %v1277
    %v1913 = vmax.f32 %v1346, %v1366
    %v1914 = vmax.f32 %v1435, %v1455
    %v1915 = vmax.f32 %v1524, %v1544
    %v1916 = vmax.f32 %v1613, %v1633
    %v1917 = vmax.f32 %v1702, %v1722
    %v1918 = vmax.f32 %v1791, %v1811
    %v1919 = vmax.f32 %v1171, %v1191
    %v1920 = vmax.f32 %v1260, %v1280
    %v1921 = vmax.f32 %v1349, %v1369
    %v1922 = vmax.f32 %v1438, %v1458
    %v1923 = vmax.f32 %v1527, %v1547
    %v1924 = vmax.f32 %v1616, %v1636
    %v1925 = vmax.f32 %v1705, %v1725
    %v1926 = vmax.f32 %v1794, %v1814
    %v1927 = vmax.f32 %v1173, %v1193
    %v1928 = vmax.f32 %v1262, %v1282
    %v1929 = vmax.f32 %v1351, %v1371
    %v1930 = vmax.f32 %v1440, %v1460
    %v1931 = vmax.f32 %v1529, %v1549
    %v1932 = vmax.f32 %v1618, %v1638
    %v1933 = vmax.f32 %v1707, %v1727
    %v1934 = vmax.f32 %v1796, %v1816
    %v1935 = vmax.f32 %v1176, %v1196
    %v1936 = vmax.f32 %v1265, %v1285
    %v1937 = vmax.f32 %v1354, %v1374
    %v1938 = vmax.f32 %v1443, %v1463
    %v1939 = vmax.f32 %v1532, %v1552
    %v1940 = vmax.f32 %v1621, %v1641
    %v1941 = vmax.f32 %v1710, %v1730
    %v1942 = vmax.f32 %v1799, %v1819
    %v1943 = vmax.f32 %v1178, %v1198
    %v1944 = vmax.f32 %v1267, %v1287
    %v1945 = vmax.f32 %v1356, %v1376
    %v1946 = vmax.f32 %v1445, %v1465
    %v1947 = vmax.f32 %v1534, %v1554
    %v1948 = vmax.f32 %v1623, %v1643
    %v1949 = vmax.f32 %v1712, %v1732
    %v1950 = vmax.f32 %v1801, %v1821
    %v1951 = vmax.f32 %v1823, %v1855
    %v1952 = vmax.f32 %v1824, %v1856
    %v1953 = vmax.f32 %v1825, %v1857
    %v1954 = vmax.f32 %v1826, %v1858
    %v1955 = vmax.f32 %v1827, %v1859
    %v1956 = vmax.f32 %v1828, %v1860
    %v1957 = vmax.f32 %v1829, %v1861
    %v1958 = vmax.f32 %v1830, %v1862
    %v1959 = vmax.f32 %v1831, %v1863
    %v1960 = vmax.f32 %v1832, %v1864
    %v1961 = vmax.f32 %v1833, %v1865
    %v1962 = vmax.f32 %v1834, %v1866
    %v1963 = vmax.f32 %v1835, %v1867
    %v1964 = vmax.f32 %v1836, %v1868
    %v1965 = vmax.f32 %v1837, %v1869
    %v1966 = vmax.f32 %v1838, %v1870
    %v1967 = vmax.f32 %v1839, %v1871
    %v1968 = vmax.f32 %v1840, %v1872
    %v1969 = vmax.f32 %v1841, %v1873
    %v1970 = vmax.f32 %v1842, %v1874
    %v1971 = vmax.f32 %v1843, %v1875
    %v1972 = vmax.f32 %v1844, %v1876
    %v1973 = vmax.f32 %v1845, %v1877
    %v1974 = vmax.f32 %v1846, %v1878
    %v1975 = vmax.f32 %v1847, %v1879
    %v1976 = vmax.f32 %v1848, %v1880
    %v1977 = vmax.f32 %v1849, %v1881
    %v1978 = vmax.f32 %v1850, %v1882
    %v1979 = vmax.f32 %v1851, %v1883
    %v1980 = vmax.f32 %v1852, %v1884
    %v1981 = vmax.f32 %v1853, %v1885
    %v1982 = vmax.f32 %v1854, %v1886
    %v1983 = vmax.f32 %v1887, %v1919
    %v1984 = vmax.f32 %v1888, %v1920
    %v1985 = vmax.f32 %v1889, %v1921
    %v1986 = vmax.f32 %v1890, %v1922
    %v1987 = vmax.f32 %v1891, %v1923
    %v1988 = vmax.f32 %v1892, %v1924
    %v1989 = vmax.f32 %v1893, %v1925
    %v1990 = vmax.f32 %v1894, %v1926
    %v1991 = vmax.f32 %v1895, %v1927
    %v1992 = vmax.f32 %v1896, %v1928
    %v1993 = vmax.f32 %v1897, %v1929
    %v1994 = vmax.f32 %v1898, %v1930
    %v1995 = vmax.f32 %v1899, %v1931
    %v1996 = vmax.f32 %v1900, %v1932
    %v1997 = vmax.f32 %v1901, %v1933
    %v1998 = vmax.f32 %v1902, %v1934
    %v1999 = vmax.f32 %v1903, %v1935
    %v2000 = vmax.f32 %v1904, %v1936
    %v2001 = vmax.f32 %v1905, %v1937
    %v2002 = vmax.f32 %v1906, %v1938
    %v2003 = vmax.f32 %v1907, %v1939
    %v2004 = vmax.f32 %v1908, %v1940
    %v2005 = vmax.f32 %v1909, %v1941
    %v2006 = vmax.f32 %v1910, %v1942
    %v2007 = vmax.f32 %v1911, %v1943
    %v2008 = vmax.f32 %v1912, %v1944
    %v2009 = vmax.f32 %v1913, %v1945
    %v2010 = vmax.f32 %v1914, %v1946
    %v2011 = vmax.f32 %v1915, %v1947
    %v2012 = vmax.f32 %v1916, %v1948
    %v2013 = vmax.f32 %v1917, %v1949
    %v2014 = vmax.f32 %v1918, %v1950
    %v2015 = vmax.f32 %v1951, %v1967
    %v2016 = vmax.f32 %v1952, %v1968
    %v2017 = vmax.f32 %v1953, %v1969
    %v2018 = vmax.f32 %v1954, %v1970
    %v2019 = vmax.f32 %v1955, %v1971
    %v2020 = vmax.f32 %v1956, %v1972
    %v2021 = vmax.f32 %v1957, %v1973
    %v2022 = vmax.f32 %v1958, %v1974
    %v2023 = vmax.f32 %v1959, %v1975
    %v2024 = vmax.f32 %v1960, %v1976
    %v2025 = vmax.f32 %v1961, %v1977
    %v2026 = vmax.f32 %v1962, %v1978
    %v2027 = vmax.f32 %v1963, %v1979
    %v2028 = vmax.f32 %v1964, %v1980
    %v2029 = vmax.f32 %v1965, %v1981
    %v2030 = vmax.f32 %v1966, %v1982
    %v2031 = vmax.f32 %v1983, %v1999
    %v2032 = vmax.f32 %v1984, %v2000
    %v2033 = vmax.f32 %v1985, %v2001
    %v2034 = vmax.f32 %v1986, %v2002
    %v2035 = vmax.f32 %v1987, %v2003
    %v2036 = vmax.f32 %v1988, %v2004
    %v2037 = vmax.f32 %v1989, %v2005
    %v2038 = vmax.f32 %v1990, %v2006
    %v2039 = vmax.f32 %v1991, %v2007
    %v2040 = vmax.f32 %v1992, %v2008
    %v2041 = vmax.f32 %v1993, %v2009
    %v2042 = vmax.f32 %v1994, %v2010
    %v2043 = vmax.f32 %v1995, %v2011
    %v2044 = vmax.f32 %v1996, %v2012
    %v2045 = vmax.f32 %v1997, %v2013
    %v2046 = vmax.f32 %v1998, %v2014
    %v2047 = vmax.f32 %v2015, %v2023
    %v2048 = vmax.f32 %v2016, %v2024
    %v2049 = vmax.f32 %v2017, %v2025
    %v2050 = vmax.f32 %v2018, %v2026
    %v2051 = vmax.f32 %v2019, %v2027
    %v2052 = vmax.f32 %v2020, %v2028
    %v2053 = vmax.f32 %v2021, %v2029
    %v2054 = vmax.f32 %v2022, %v2030
    %v2055 = vmax.f32 %v2031, %v2039
    %v2056 = vmax.f32 %v2032, %v2040
    %v2057 = vmax.f32 %v2033, %v2041
    %v2058 = vmax.f32 %v2034, %v2042
    %v2059 = vmax.f32 %v2035, %v2043
    %v2060 = vmax.f32 %v2036, %v2044
    %v2061 = vmax.f32 %v2037, %v2045
    %v2062 = vmax.f32 %v2038, %v2046
    %v2063 = vrot.slane %v2047, 4
    %v2064 = vmax.f32 %v2047, %v2063
    %v2065 = vrot.slane %v2064, 2
    %v2066 = vmax.f32 %v2064, %v2065
    %v2067 = vrot.slane %v2066, 1
    %v2068 = vmax.f32 %v2066, %v2067
    %v2069 = vrot.slane %v2048, 4
    %v2070 = vmax.f32 %v2048, %v2069
    %v2071 = vrot.slane %v2070, 2
    %v2072 = vmax.f32 %v2070, %v2071
    %v2073 = vrot.slane %v2072, 1
    %v2074 = vmax.f32 %v2072, %v2073
    %v2075 = vrot.slane %v2049, 4
    %v2076 = vmax.f32 %v2049, %v2075
    %v2077 = vrot.slane %v2076, 2
    %v2078 = vmax.f32 %v2076, %v2077
    %v2079 = vrot.slane %v2078, 1
    %v2080 = vmax.f32 %v2078, %v2079
    %v2081 = vrot.slane %v2050, 4
    %v2082 = vmax.f32 %v2050, %v2081
    %v2083 = vrot.slane %v2082, 2
    %v2084 = vmax.f32 %v2082, %v2083
    %v2085 = vrot.slane %v2084, 1
    %v2086 = vmax.f32 %v2084, %v2085
    %v2087 = vrot.slane %v2051, 4
    %v2088 = vmax.f32 %v2051, %v2087
    %v2089 = vrot.slane %v2088, 2
    %v2090 = vmax.f32 %v2088, %v2089
    %v2091 = vrot.slane %v2090, 1
    %v2092 = vmax.f32 %v2090, %v2091
    %v2093 = vrot.slane %v2052, 4
    %v2094 = vmax.f32 %v2052, %v2093
    %v2095 = vrot.slane %v2094, 2
    %v2096 = vmax.f32 %v2094, %v2095
    %v2097 = vrot.slane %v2096, 1
    %v2098 = vmax.f32 %v2096, %v2097
    %v2099 = vrot.slane %v2053, 4
    %v2100 = vmax.f32 %v2053, %v2099
    %v2101 = vrot.slane %v2100, 2
    %v2102 = vmax.f32 %v2100, %v2101
    %v2103 = vrot.slane %v2102, 1
    %v2104 = vmax.f32 %v2102, %v2103
    %v2105 = vrot.slane %v2054, 4
    %v2106 = vmax.f32 %v2054, %v2105
    %v2107 = vrot.slane %v2106, 2
    %v2108 = vmax.f32 %v2106, %v2107
    %v2109 = vrot.slane %v2108, 1
    %v2110 = vmax.f32 %v2108, %v2109
    %v2111 = vrot.slane %v2055, 4
    %v2112 = vmax.f32 %v2055, %v2111
    %v2113 = vrot.slane %v2112, 2
    %v2114 = vmax.f32 %v2112, %v2113
    %v2115 = vrot.slane %v2114, 1
    %v2116 = vmax.f32 %v2114, %v2115
    %v2117 = vrot.slane %v2056, 4
    %v2118 = vmax.f32 %v2056, %v2117
    %v2119 = vrot.slane %v2118, 2
    %v2120 = vmax.f32 %v2118, %v2119
    %v2121 = vrot.slane %v2120, 1
    %v2122 = vmax.f32 %v2120, %v2121
    %v2123 = vrot.slane %v2057, 4
    %v2124 = vmax.f32 %v2057, %v2123
    %v2125 = vrot.slane %v2124, 2
    %v2126 = vmax.f32 %v2124, %v2125
    %v2127 = vrot.slane %v2126, 1
    %v2128 = vmax.f32 %v2126, %v2127
    %v2129 = vrot.slane %v2058, 4
    %v2130 = vmax.f32 %v2058, %v2129
    %v2131 = vrot.slane %v2130, 2
    %v2132 = vmax.f32 %v2130, %v2131
    %v2133 = vrot.slane %v2132, 1
    %v2134 = vmax.f32 %v2132, %v2133
    %v2135 = vrot.slane %v2059, 4
    %v2136 = vmax.f32 %v2059, %v2135
    %v2137 = vrot.slane %v2136, 2
    %v2138 = vmax.f32 %v2136, %v2137
    %v2139 = vrot.slane %v2138, 1
    %v2140 = vmax.f32 %v2138, %v2139
    %v2141 = vrot.slane %v2060, 4
    %v2142 = vmax.f32 %v2060, %v2141
    %v2143 = vrot.slane %v2142, 2
    %v2144 = vmax.f32 %v2142, %v2143
    %v2145 = vrot.slane %v2144, 1
    %v2146 = vmax.f32 %v2144, %v2145
    %v2147 = vrot.slane %v2061, 4
    %v2148 = vmax.f32 %v2061, %v2147
    %v2149 = vrot.slane %v2148, 2
    %v2150 = vmax.f32 %v2148, %v2149
    %v2151 = vrot.slane %v2150, 1
    %v2152 = vmax.f32 %v2150, %v2151
    %v2153 = vrot.slane %v2062, 4
    %v2154 = vmax.f32 %v2062, %v2153
    %v2155 = vrot.slane %v2154, 2
    %v2156 = vmax.f32 %v2154, %v2155
    %v2157 = vrot.slane %v2156, 1
    %v2158 = vmax.f32 %v2156, %v2157
    %v2159 = vld [vmem:[%s1] sm:$0x3]
    %v2160 = vld [vmem:[%s2] sm:$0x3]
    %v2161 = vld [vmem:[%s9] sm:$0x1]
    %v2162 = vld [vmem:[#allocation10] sm:$0xf]
    %v2163 = vld [vmem:[#allocation10 + $0x4] sm:$0xf]
    %v2164 = vld [vmem:[#allocation10 + $0x8] sm:$0xf]
    %v2165 = vld [vmem:[#allocation10 + $0xc] sm:$0xf]
    %v2166 = vld [vmem:[#allocation10 + $0x10] sm:$0xf]
    %v2167 = vld [vmem:[#allocation10 + $0x14] sm:$0xf]
    %v2168 = vld [vmem:[#allocation10 + $0x18] sm:$0xf]
    %v2169 = vld [vmem:[#allocation10 + $0x1c] sm:$0xf]
    %v2170 = vld [vmem:[#allocation11] sm:$0xf]
    %v2171 = vld [vmem:[#allocation11 + $0x4] sm:$0xf]
    %v2172 = vld [vmem:[#allocation11 + $0x8] sm:$0xf]
    %v2173 = vld [vmem:[#allocation11 + $0xc] sm:$0xf]
    %v2174 = vld [vmem:[#allocation11 + $0x10] sm:$0xf]
    %v2175 = vld [vmem:[#allocation11 + $0x14] sm:$0xf]
    %v2176 = vld [vmem:[#allocation11 + $0x18] sm:$0xf]
    %v2177 = vld [vmem:[#allocation11 + $0x1c] sm:$0xf]
    %v2178 = vld [vmem:[%s12] sm:$0x1]
    %v2179 = vld [vmem:[#allocation13] sm:$0xff]
    %v2180 = vld [vmem:[#allocation13 + $0x8] sm:$0x11]
    %v2181 = vld [vmem:[%s14] sm:$0x3]
    %v2182 = vld [vmem:[#allocation14] sm:$0xff]
    %v2183 = vld [vmem:[#allocation14 + $0x8] sm:$0xff]
    %v2184 = vld [vmem:[#allocation14 + $0x10] sm:$0xff]
    %v2185 = vld [vmem:[#allocation14 + $0x18] sm:$0xff]
    %v2186 = vld [vmem:[#allocation14 + $0x20] sm:$0xff]
    %v2187 = vld [vmem:[#allocation14 + $0x28] sm:$0xff]
    %v2188 = vld [vmem:[#allocation14 + $0x30] sm:$0xff]
    %v2189 = vld [vmem:[#allocation14 + $0x38] sm:$0xff]
    %v2190 = vld [vmem:[#allocation14 + $0x40] sm:$0xff]
    %v2191 = vld [vmem:[#allocation14 + $0x48] sm:$0xff]
    %v2192 = vld [vmem:[#allocation14 + $0x50] sm:$0xff]
    %v2193 = vld [vmem:[#allocation14 + $0x58] sm:$0xff]
    %v2194 = vld [vmem:[#allocation14 + $0x60] sm:$0xff]
    %v2195 = vld [vmem:[#allocation14 + $0x68] sm:$0xff]
    %v2196 = vld [vmem:[#allocation14 + $0x70] sm:$0xff]
    %v2197 = vld [vmem:[#allocation14 + $0x78] sm:$0xff]
    %v2198 = vld [vmem:[#allocation14 + $0x80] sm:$0xff]
    %v2199 = vld [vmem:[#allocation14 + $0x88] sm:$0xff]
    %v2200 = vld [vmem:[#allocation14 + $0x90] sm:$0xff]
    %v2201 = vld [vmem:[#allocation14 + $0x98] sm:$0xff]
    %v2202 = vld [vmem:[#allocation14 + $0xa0] sm:$0xff]
    %v2203 = vld [vmem:[#allocation14 + $0xa8] sm:$0xff]
    %v2204 = vld [vmem:[#allocation14 + $0xb0] sm:$0xff]
    %v2205 = vld [vmem:[#allocation14 + $0xb8] sm:$0xff]
    %v2206 = vld [vmem:[#allocation14 + $0xc0] sm:$0xff]
    %v2207 = vld [vmem:[#allocation14 + $0xc8] sm:$0xff]
    %v2208 = vld [vmem:[#allocation14 + $0xd0] sm:$0xff]
    %v2209 = vld [vmem:[#allocation14 + $0xd8] sm:$0xff]
    %v2210 = vld [vmem:[#allocation14 + $0xe0] sm:$0xff]
    %v2211 = vld [vmem:[#allocation14 + $0xe8] sm:$0xff]
    %v2212 = vld [vmem:[#allocation14 + $0xf0] sm:$0xff]
    %v2213 = vld [vmem:[#allocation14 + $0xf8] sm:$0xff]
    %v2214 = vld [vmem:[%s16] sm:$0x3]
    %v2215 = vld [vmem:[#allocation16] sm:$0xff]
    %v2216 = vld [vmem:[#allocation16 + $0x8] sm:$0xff]
    %v2217 = vld [vmem:[#allocation16 + $0x10] sm:$0xff]
    %v2218 = vld [vmem:[#allocation16 + $0x18] sm:$0xff]
    %v2219 = vld [vmem:[#allocation16 + $0x20] sm:$0xff]
    %v2220 = vld [vmem:[#allocation16 + $0x28] sm:$0xff]
    %v2221 = vld [vmem:[#allocation16 + $0x30] sm:$0xff]
    %v2222 = vld [vmem:[#allocation16 + $0x38] sm:$0xff]
    %v2223 = vld [vmem:[#allocation16 + $0x40] sm:$0xff]
    %v2224 = vld [vmem:[#allocation16 + $0x48] sm:$0xff]
    %v2225 = vld [vmem:[#allocation16 + $0x50] sm:$0xff]
    %v2226 = vld [vmem:[#allocation16 + $0x58] sm:$0xff]
    %v2227 = vld [vmem:[#allocation16 + $0x60] sm:$0xff]
    %v2228 = vld [vmem:[#allocation16 + $0x68] sm:$0xff]
    %v2229 = vld [vmem:[#allocation16 + $0x70] sm:$0xff]
    %v2230 = vld [vmem:[#allocation16 + $0x78] sm:$0xff]
    %v2231 = vld [vmem:[#allocation16 + $0x80] sm:$0xff]
    %v2232 = vld [vmem:[#allocation16 + $0x88] sm:$0xff]
    %v2233 = vld [vmem:[#allocation16 + $0x90] sm:$0xff]
    %v2234 = vld [vmem:[#allocation16 + $0x98] sm:$0xff]
    %v2235 = vld [vmem:[#allocation16 + $0xa0] sm:$0xff]
    %v2236 = vld [vmem:[#allocation16 + $0xa8] sm:$0xff]
    %v2237 = vld [vmem:[#allocation16 + $0xb0] sm:$0xff]
    %v2238 = vld [vmem:[#allocation16 + $0xb8] sm:$0xff]
    %v2239 = vld [vmem:[#allocation16 + $0xc0] sm:$0xff]
    %v2240 = vld [vmem:[#allocation16 + $0xc8] sm:$0xff]
    %v2241 = vld [vmem:[#allocation16 + $0xd0] sm:$0xff]
    %v2242 = vld [vmem:[#allocation16 + $0xd8] sm:$0xff]
    %v2243 = vld [vmem:[#allocation16 + $0xe0] sm:$0xff]
    %v2244 = vld [vmem:[#allocation16 + $0xe8] sm:$0xff]
    %v2245 = vld [vmem:[#allocation16 + $0xf0] sm:$0xff]
    %v2246 = vld [vmem:[#allocation16 + $0xf8] sm:$0xff]
    %v2247 = vld [vmem:[#allocation16 + $0x100] sm:$0xff]
    %v2248 = vld [vmem:[#allocation16 + $0x108] sm:$0xff]
    %v2249 = vld [vmem:[#allocation16 + $0x110] sm:$0xff]
    %v2250 = vld [vmem:[#allocation16 + $0x118] sm:$0xff]
    %v2251 = vld [vmem:[#allocation16 + $0x120] sm:$0xff]
    %v2252 = vld [vmem:[#allocation16 + $0x128] sm:$0xff]
    %v2253 = vld [vmem:[#allocation16 + $0x130] sm:$0xff]
    %v2254 = vld [vmem:[#allocation16 + $0x138] sm:$0xff]
    %v2255 = vld [vmem:[#allocation16 + $0x140] sm:$0xff]
    %v2256 = vld [vmem:[#allocation16 + $0x148] sm:$0xff]
    %v2257 = vld [vmem:[#allocation16 + $0x150] sm:$0xff]
    %v2258 = vld [vmem:[#allocation16 + $0x158] sm:$0xff]
    %v2259 = vld [vmem:[#allocation16 + $0x160] sm:$0xff]
    %v2260 = vld [vmem:[#allocation16 + $0x168] sm:$0xff]
    %v2261 = vld [vmem:[#allocation16 + $0x170] sm:$0xff]
    %v2262 = vld [vmem:[#allocation16 + $0x178] sm:$0xff]
    %v2263 = vld [vmem:[#allocation16 + $0x180] sm:$0xff]
    %v2264 = vld [vmem:[#allocation16 + $0x188] sm:$0xff]
    %v2265 = vld [vmem:[#allocation16 + $0x190] sm:$0xff]
    %v2266 = vld [vmem:[#allocation16 + $0x198] sm:$0xff]
    %v2267 = vld [vmem:[#allocation16 + $0x1a0] sm:$0xff]
    %v2268 = vld [vmem:[#allocation16 + $0x1a8] sm:$0xff]
    %v2269 = vld [vmem:[#allocation16 + $0x1b0] sm:$0xff]
    %v2270 = vld [vmem:[#allocation16 + $0x1b8] sm:$0xff]
    %v2271 = vld [vmem:[#allocation16 + $0x1c0] sm:$0xff]
    %v2272 = vld [vmem:[#allocation16 + $0x1c8] sm:$0xff]
    %v2273 = vld [vmem:[#allocation16 + $0x1d0] sm:$0xff]
    %v2274 = vld [vmem:[#allocation16 + $0x1d8] sm:$0xff]
    %v2275 = vld [vmem:[#allocation16 + $0x1e0] sm:$0xff]
    %v2276 = vld [vmem:[#allocation16 + $0x1e8] sm:$0xff]
    %v2277 = vld [vmem:[#allocation16 + $0x1f0] sm:$0xff]
    %v2278 = vld [vmem:[#allocation16 + $0x1f8] sm:$0xff]
    %v2279 = vld [vmem:[#allocation16 + $0x200] sm:$0xff]
    %v2280 = vld [vmem:[#allocation16 + $0x208] sm:$0xff]
    %v2281 = vld [vmem:[#allocation16 + $0x210] sm:$0xff]
    %v2282 = vld [vmem:[#allocation16 + $0x218] sm:$0xff]
    %v2283 = vld [vmem:[#allocation16 + $0x220] sm:$0xff]
    %v2284 = vld [vmem:[#allocation16 + $0x228] sm:$0xff]
    %v2285 = vld [vmem:[#allocation16 + $0x230] sm:$0xff]
    %v2286 = vld [vmem:[#allocation16 + $0x238] sm:$0xff]
    %v2287 = vld [vmem:[#allocation16 + $0x240] sm:$0xff]
    %v2288 = vld [vmem:[#allocation16 + $0x248] sm:$0xff]
    %v2289 = vld [vmem:[#allocation16 + $0x250] sm:$0xff]
    %v2290 = vld [vmem:[#allocation16 + $0x258] sm:$0xff]
    %v2291 = vld [vmem:[#allocation16 + $0x260] sm:$0xff]
    %v2292 = vld [vmem:[#allocation16 + $0x268] sm:$0xff]
    %v2293 = vld [vmem:[#allocation16 + $0x270] sm:$0xff]
    %v2294 = vld [vmem:[#allocation16 + $0x278] sm:$0xff]
    %v2295 = vld [vmem:[#allocation16 + $0x280] sm:$0xff]
    %v2296 = vld [vmem:[#allocation16 + $0x288] sm:$0xff]
    %v2297 = vld [vmem:[#allocation16 + $0x290] sm:$0xff]
    %v2298 = vld [vmem:[#allocation16 + $0x298] sm:$0xff]
    %v2299 = vld [vmem:[#allocation16 + $0x2a0] sm:$0xff]
    %v2300 = vld [vmem:[#allocation16 + $0x2a8] sm:$0xff]
    %v2301 = vld [vmem:[#allocation16 + $0x2b0] sm:$0xff]
    %v2302 = vld [vmem:[#allocation16 + $0x2b8] sm:$0xff]
    %v2303 = vld [vmem:[#allocation16 + $0x2c0] sm:$0xff]
    %v2304 = vld [vmem:[#allocation16 + $0x2c8] sm:$0xff]
    %v2305 = vld [vmem:[#allocation16 + $0x2d0] sm:$0xff]
    %v2306 = vld [vmem:[#allocation16 + $0x2d8] sm:$0xff]
    %v2307 = vld [vmem:[#allocation16 + $0x2e0] sm:$0xff]
    %v2308 = vld [vmem:[#allocation16 + $0x2e8] sm:$0xff]
    %v2309 = vld [vmem:[#allocation16 + $0x2f0] sm:$0xff]
    %v2310 = vld [vmem:[#allocation16 + $0x2f8] sm:$0xff]
    %v2311 = vld [vmem:[#allocation16 + $0x300] sm:$0xff]
    %v2312 = vld [vmem:[#allocation16 + $0x308] sm:$0xff]
    %v2313 = vld [vmem:[#allocation16 + $0x310] sm:$0xff]
    %v2314 = vld [vmem:[#allocation16 + $0x318] sm:$0xff]
    %v2315 = vld [vmem:[#allocation16 + $0x320] sm:$0xff]
    %v2316 = vld [vmem:[#allocation16 + $0x328] sm:$0xff]
    %v2317 = vld [vmem:[#allocation16 + $0x330] sm:$0xff]
    %v2318 = vld [vmem:[#allocation16 + $0x338] sm:$0xff]
    %v2319 = vld [vmem:[#allocation16 + $0x340] sm:$0xff]
    %v2320 = vld [vmem:[#allocation16 + $0x348] sm:$0xff]
    %v2321 = vld [vmem:[#allocation16 + $0x350] sm:$0xff]
    %v2322 = vld [vmem:[#allocation16 + $0x358] sm:$0xff]
    %v2323 = vld [vmem:[#allocation16 + $0x360] sm:$0xff]
    %v2324 = vld [vmem:[#allocation16 + $0x368] sm:$0xff]
    %v2325 = vld [vmem:[#allocation16 + $0x370] sm:$0xff]
    %v2326 = vld [vmem:[#allocation16 + $0x378] sm:$0xff]
    %v2327 = vld [vmem:[#allocation16 + $0x380] sm:$0xff]
    %v2328 = vld [vmem:[#allocation16 + $0x388] sm:$0xff]
    %v2329 = vld [vmem:[#allocation16 + $0x390] sm:$0xff]
    %v2330 = vld [vmem:[#allocation16 + $0x398] sm:$0xff]
    %v2331 = vld [vmem:[#allocation16 + $0x3a0] sm:$0xff]
    %v2332 = vld [vmem:[#allocation16 + $0x3a8] sm:$0xff]
    %v2333 = vld [vmem:[#allocation16 + $0x3b0] sm:$0xff]
    %v2334 = vld [vmem:[#allocation16 + $0x3b8] sm:$0xff]
    %v2335 = vld [vmem:[#allocation16 + $0x3c0] sm:$0xff]
    %v2336 = vld [vmem:[#allocation16 + $0x3c8] sm:$0xff]
    %v2337 = vld [vmem:[#allocation16 + $0x3d0] sm:$0xff]
    %v2338 = vld [vmem:[#allocation16 + $0x3d8] sm:$0xff]
    %v2339 = vld [vmem:[#allocation16 + $0x3e0] sm:$0xff]
    %v2340 = vld [vmem:[#allocation16 + $0x3e8] sm:$0xff]
    %v2341 = vld [vmem:[#allocation16 + $0x3f0] sm:$0xff]
    %v2342 = vld [vmem:[#allocation16 + $0x3f8] sm:$0xff]
    %v2343 = vld [vmem:[#allocation16 + $0x400] sm:$0xff]
    %v2344 = vld [vmem:[#allocation16 + $0x408] sm:$0xff]
    %v2345 = vld [vmem:[#allocation16 + $0x410] sm:$0xff]
    %v2346 = vld [vmem:[#allocation16 + $0x418] sm:$0xff]
    %v2347 = vld [vmem:[#allocation16 + $0x420] sm:$0xff]
    %v2348 = vld [vmem:[#allocation16 + $0x428] sm:$0xff]
    %v2349 = vld [vmem:[#allocation16 + $0x430] sm:$0xff]
    %v2350 = vld [vmem:[#allocation16 + $0x438] sm:$0xff]
    %v2351 = vld [vmem:[#allocation16 + $0x440] sm:$0xff]
    %v2352 = vld [vmem:[#allocation16 + $0x448] sm:$0xff]
    %v2353 = vld [vmem:[#allocation16 + $0x450] sm:$0xff]
    %v2354 = vld [vmem:[#allocation16 + $0x458] sm:$0xff]
    %v2355 = vld [vmem:[#allocation16 + $0x460] sm:$0xff]
    %v2356 = vld [vmem:[#allocation16 + $0x468] sm:$0xff]
    %v2357 = vld [vmem:[#allocation16 + $0x470] sm:$0xff]
    %v2358 = vld [vmem:[#allocation16 + $0x478] sm:$0xff]
    %v2359 = vld [vmem:[#allocation16 + $0x480] sm:$0xff]
    %v2360 = vld [vmem:[#allocation16 + $0x488] sm:$0xff]
    %v2361 = vld [vmem:[#allocation16 + $0x490] sm:$0xff]
    %v2362 = vld [vmem:[#allocation16 + $0x498] sm:$0xff]
    %v2363 = vld [vmem:[#allocation16 + $0x4a0] sm:$0xff]
    %v2364 = vld [vmem:[#allocation16 + $0x4a8] sm:$0xff]
    %v2365 = vld [vmem:[#allocation16 + $0x4b0] sm:$0xff]
    %v2366 = vld [vmem:[#allocation16 + $0x4b8] sm:$0xff]
    %v2367 = vld [vmem:[#allocation16 + $0x4c0] sm:$0xff]
    %v2368 = vld [vmem:[#allocation16 + $0x4c8] sm:$0xff]
    %v2369 = vld [vmem:[#allocation16 + $0x4d0] sm:$0xff]
    %v2370 = vld [vmem:[#allocation16 + $0x4d8] sm:$0xff]
    %v2371 = vld [vmem:[#allocation16 + $0x4e0] sm:$0xff]
    %v2372 = vld [vmem:[#allocation16 + $0x4e8] sm:$0xff]
    %v2373 = vld [vmem:[#allocation16 + $0x4f0] sm:$0xff]
    %v2374 = vld [vmem:[#allocation16 + $0x4f8] sm:$0xff]
    %v2375 = vld [vmem:[#allocation16 + $0x500] sm:$0xff]
    %v2376 = vld [vmem:[#allocation16 + $0x508] sm:$0xff]
    %v2377 = vld [vmem:[#allocation16 + $0x510] sm:$0xff]
    %v2378 = vld [vmem:[#allocation16 + $0x518] sm:$0xff]
    %v2379 = vld [vmem:[#allocation16 + $0x520] sm:$0xff]
    %v2380 = vld [vmem:[#allocation16 + $0x528] sm:$0xff]
    %v2381 = vld [vmem:[#allocation16 + $0x530] sm:$0xff]
    %v2382 = vld [vmem:[#allocation16 + $0x538] sm:$0xff]
    %v2383 = vld [vmem:[#allocation16 + $0x540] sm:$0xff]
    %v2384 = vld [vmem:[#allocation16 + $0x548] sm:$0xff]
    %v2385 = vld [vmem:[#allocation16 + $0x550] sm:$0xff]
    %v2386 = vld [vmem:[#allocation16 + $0x558] sm:$0xff]
    %v2387 = vld [vmem:[#allocation16 + $0x560] sm:$0xff]
    %v2388 = vld [vmem:[#allocation16 + $0x568] sm:$0xff]
    %v2389 = vld [vmem:[#allocation16 + $0x570] sm:$0xff]
    %v2390 = vld [vmem:[#allocation16 + $0x578] sm:$0xff]
    %v2391 = vld [vmem:[#allocation16 + $0x580] sm:$0xff]
    %v2392 = vld [vmem:[#allocation16 + $0x588] sm:$0xff]
    %v2393 = vld [vmem:[#allocation16 + $0x590] sm:$0xff]
    %v2394 = vld [vmem:[#allocation16 + $0x598] sm:$0xff]
    %v2395 = vld [vmem:[#allocation16 + $0x5a0] sm:$0xff]
    %v2396 = vld [vmem:[#allocation16 + $0x5a8] sm:$0xff]
    %v2397 = vld [vmem:[#allocation16 + $0x5b0] sm:$0xff]
    %v2398 = vld [vmem:[#allocation16 + $0x5b8] sm:$0xff]
    %v2399 = vld [vmem:[#allocation16 + $0x5c0] sm:$0xff]
    %v2400 = vld [vmem:[#allocation16 + $0x5c8] sm:$0xff]
    %v2401 = vld [vmem:[#allocation16 + $0x5d0] sm:$0xff]
    %v2402 = vld [vmem:[#allocation16 + $0x5d8] sm:$0xff]
    %v2403 = vld [vmem:[#allocation16 + $0x5e0] sm:$0xff]
    %v2404 = vld [vmem:[#allocation16 + $0x5e8] sm:$0xff]
    %v2405 = vld [vmem:[#allocation16 + $0x5f0] sm:$0xff]
    %v2406 = vld [vmem:[#allocation16 + $0x5f8] sm:$0xff]
    %v2407 = vld [vmem:[#allocation16 + $0x600] sm:$0xff]
    %v2408 = vld [vmem:[#allocation16 + $0x608] sm:$0xff]
    %v2409 = vld [vmem:[#allocation16 + $0x610] sm:$0xff]
    %v2410 = vld [vmem:[#allocation16 + $0x618] sm:$0xff]
    %v2411 = vld [vmem:[#allocation16 + $0x620] sm:$0xff]
    %v2412 = vld [vmem:[#allocation16 + $0x628] sm:$0xff]
    %v2413 = vld [vmem:[#allocation16 + $0x630] sm:$0xff]
    %v2414 = vld [vmem:[#allocation16 + $0x638] sm:$0xff]
    %v2415 = vld [vmem:[#allocation16 + $0x640] sm:$0xff]
    %v2416 = vld [vmem:[#allocation16 + $0x648] sm:$0xff]
    %v2417 = vld [vmem:[#allocation16 + $0x650] sm:$0xff]
    %v2418 = vld [vmem:[#allocation16 + $0x658] sm:$0xff]
    %v2419 = vld [vmem:[#allocation16 + $0x660] sm:$0xff]
    %v2420 = vld [vmem:[#allocation16 + $0x668] sm:$0xff]
    %v2421 = vld [vmem:[#allocation16 + $0x670] sm:$0xff]
    %v2422 = vld [vmem:[#allocation16 + $0x678] sm:$0xff]
    %v2423 = vld [vmem:[#allocation16 + $0x680] sm:$0xff]
    %v2424 = vld [vmem:[#allocation16 + $0x688] sm:$0xff]
    %v2425 = vld [vmem:[#allocation16 + $0x690] sm:$0xff]
    %v2426 = vld [vmem:[#allocation16 + $0x698] sm:$0xff]
    %v2427 = vld [vmem:[#allocation16 + $0x6a0] sm:$0xff]
    %v2428 = vld [vmem:[#allocation16 + $0x6a8] sm:$0xff]
    %v2429 = vld [vmem:[#allocation16 + $0x6b0] sm:$0xff]
    %v2430 = vld [vmem:[#allocation16 + $0x6b8] sm:$0xff]
    %v2431 = vld [vmem:[#allocation16 + $0x6c0] sm:$0xff]
    %v2432 = vld [vmem:[#allocation16 + $0x6c8] sm:$0xff]
    %v2433 = vld [vmem:[#allocation16 + $0x6d0] sm:$0xff]
    %v2434 = vld [vmem:[#allocation16 + $0x6d8] sm:$0xff]
    %v2435 = vld [vmem:[#allocation16 + $0x6e0] sm:$0xff]
    %v2436 = vld [vmem:[#allocation16 + $0x6e8] sm:$0xff]
    %v2437 = vld [vmem:[#allocation16 + $0x6f0] sm:$0xff]
    %v2438 = vld [vmem:[#allocation16 + $0x6f8] sm:$0xff]
    %v2439 = vld [vmem:[#allocation16 + $0x700] sm:$0xff]
    %v2440 = vld [vmem:[#allocation16 + $0x708] sm:$0xff]
    %v2441 = vld [vmem:[#allocation16 + $0x710] sm:$0xff]
    %v2442 = vld [vmem:[#allocation16 + $0x718] sm:$0xff]
    %v2443 = vld [vmem:[#allocation16 + $0x720] sm:$0xff]
    %v2444 = vld [vmem:[#allocation16 + $0x728] sm:$0xff]
    %v2445 = vld [vmem:[#allocation16 + $0x730] sm:$0xff]
    %v2446 = vld [vmem:[#allocation16 + $0x738] sm:$0xff]
    %v2447 = vld [vmem:[#allocation16 + $0x740] sm:$0xff]
    %v2448 = vld [vmem:[#allocation16 + $0x748] sm:$0xff]
    %v2449 = vld [vmem:[#allocation16 + $0x750] sm:$0xff]
    %v2450 = vld [vmem:[#allocation16 + $0x758] sm:$0xff]
    %v2451 = vld [vmem:[#allocation16 + $0x760] sm:$0xff]
    %v2452 = vld [vmem:[#allocation16 + $0x768] sm:$0xff]
    %v2453 = vld [vmem:[#allocation16 + $0x770] sm:$0xff]
    %v2454 = vld [vmem:[#allocation16 + $0x778] sm:$0xff]
    %v2455 = vld [vmem:[#allocation16 + $0x780] sm:$0xff]
    %v2456 = vld [vmem:[#allocation16 + $0x788] sm:$0xff]
    %v2457 = vld [vmem:[#allocation16 + $0x790] sm:$0xff]
    %v2458 = vld [vmem:[#allocation16 + $0x798] sm:$0xff]
    %v2459 = vld [vmem:[#allocation16 + $0x7a0] sm:$0xff]
    %v2460 = vld [vmem:[#allocation16 + $0x7a8] sm:$0xff]
    %v2461 = vld [vmem:[#allocation16 + $0x7b0] sm:$0xff]
    %v2462 = vld [vmem:[#allocation16 + $0x7b8] sm:$0xff]
    %v2463 = vld [vmem:[#allocation16 + $0x7c0] sm:$0xff]
    %v2464 = vld [vmem:[#allocation16 + $0x7c8] sm:$0xff]
    %v2465 = vld [vmem:[#allocation16 + $0x7d0] sm:$0xff]
    %v2466 = vld [vmem:[#allocation16 + $0x7d8] sm:$0xff]
    %v2467 = vld [vmem:[#allocation16 + $0x7e0] sm:$0xff]
    %v2468 = vld [vmem:[#allocation16 + $0x7e8] sm:$0xff]
    %v2469 = vld [vmem:[#allocation16 + $0x7f0] sm:$0xff]
    %v2470 = vld [vmem:[#allocation16 + $0x7f8] sm:$0xff]
    %v2471 = vld [vmem:[#allocation17] sm:$0xff]
    %v2472 = vld [vmem:[#allocation17 + $0x8] sm:$0xff]
    %v2473 = vld [vmem:[#allocation17 + $0x10] sm:$0xff]
    %v2474 = vld [vmem:[#allocation17 + $0x18] sm:$0xff]
    %v2475 = vld [vmem:[#allocation17 + $0x20] sm:$0xff]
    %v2476 = vld [vmem:[#allocation17 + $0x28] sm:$0xff]
    %v2477 = vld [vmem:[#allocation17 + $0x30] sm:$0xff]
    %v2478 = vld [vmem:[#allocation17 + $0x38] sm:$0xff]
    %v2479 = vld [vmem:[#allocation17 + $0x40] sm:$0xff]
    %v2480 = vld [vmem:[#allocation17 + $0x48] sm:$0xff]
    %v2481 = vld [vmem:[#allocation17 + $0x50] sm:$0xff]
    %v2482 = vld [vmem:[#allocation17 + $0x58] sm:$0xff]
    %v2483 = vld [vmem:[#allocation17 + $0x60] sm:$0xff]
    %v2484 = vld [vmem:[#allocation17 + $0x68] sm:$0xff]
    %v2485 = vld [vmem:[#allocation17 + $0x70] sm:$0xff]
    %v2486 = vld [vmem:[#allocation17 + $0x78] sm:$0xff]
    %v2487 = vld [vmem:[#allocation17 + $0x80] sm:$0xff]
    %v2488 = vld [vmem:[#allocation17 + $0x88] sm:$0xff]
    %v2489 = vld [vmem:[#allocation17 + $0x90] sm:$0xff]
    %v2490 = vld [vmem:[#allocation17 + $0x98] sm:$0xff]
    %v2491 = vld [vmem:[#allocation17 + $0xa0] sm:$0xff]
    %v2492 = vld [vmem:[#allocation17 + $0xa8] sm:$0xff]
    %v2493 = vld [vmem:[#allocation17 + $0xb0] sm:$0xff]
    %v2494 = vld [vmem:[#allocation17 + $0xb8] sm:$0xff]
    %v2495 = vld [vmem:[#allocation17 + $0xc0] sm:$0xff]
    %v2496 = vld [vmem:[#allocation17 + $0xc8] sm:$0xff]
    %v2497 = vld [vmem:[#allocation17 + $0xd0] sm:$0xff]
    %v2498 = vld [vmem:[#allocation17 + $0xd8] sm:$0xff]
    %v2499 = vld [vmem:[#allocation17 + $0xe0] sm:$0xff]
    %v2500 = vld [vmem:[#allocation17 + $0xe8] sm:$0xff]
    %v2501 = vld [vmem:[#allocation17 + $0xf0] sm:$0xff]
    %v2502 = vld [vmem:[#allocation17 + $0xf8] sm:$0xff]
    %v2503 = vld [vmem:[#allocation19] sm:$0xff]
    %v2504 = vld [vmem:[#allocation19 + $0x8] sm:$0xff]
    %v2505 = vld [vmem:[#allocation19 + $0x10] sm:$0xff]
    %v2506 = vld [vmem:[#allocation19 + $0x18] sm:$0xff]
    %v2507 = vld [vmem:[#allocation19 + $0x20] sm:$0xff]
    %v2508 = vld [vmem:[#allocation19 + $0x28] sm:$0xff]
    %v2509 = vld [vmem:[#allocation19 + $0x30] sm:$0xff]
    %v2510 = vld [vmem:[#allocation19 + $0x38] sm:$0xff]
    %v2511 = vld [vmem:[#allocation19 + $0x40] sm:$0xff]
    %v2512 = vld [vmem:[#allocation19 + $0x48] sm:$0xff]
    %v2513 = vld [vmem:[#allocation19 + $0x50] sm:$0xff]
    %v2514 = vld [vmem:[#allocation19 + $0x58] sm:$0xff]
    %v2515 = vld [vmem:[#allocation19 + $0x60] sm:$0xff]
    %v2516 = vld [vmem:[#allocation19 + $0x68] sm:$0xff]
    %v2517 = vld [vmem:[#allocation19 + $0x70] sm:$0xff]
    %v2518 = vld [vmem:[#allocation19 + $0x78] sm:$0xff]
    %v2519 = vld [vmem:[#allocation19 + $0x80] sm:$0xff]
    %v2520 = vld [vmem:[#allocation19 + $0x88] sm:$0xff]
    %v2521 = vld [vmem:[#allocation19 + $0x90] sm:$0xff]
    %v2522 = vld [vmem:[#allocation19 + $0x98] sm:$0xff]
    %v2523 = vld [vmem:[#allocation19 + $0xa0] sm:$0xff]
    %v2524 = vld [vmem:[#allocation19 + $0xa8] sm:$0xff]
    %v2525 = vld [vmem:[#allocation19 + $0xb0] sm:$0xff]
    %v2526 = vld [vmem:[#allocation19 + $0xb8] sm:$0xff]
    %v2527 = vld [vmem:[#allocation19 + $0xc0] sm:$0xff]
    %v2528 = vld [vmem:[#allocation19 + $0xc8] sm:$0xff]
    %v2529 = vld [vmem:[#allocation19 + $0xd0] sm:$0xff]
    %v2530 = vld [vmem:[#allocation19 + $0xd8] sm:$0xff]
    %v2531 = vld [vmem:[#allocation19 + $0xe0] sm:$0xff]
    %v2532 = vld [vmem:[#allocation19 + $0xe8] sm:$0xff]
    %v2533 = vld [vmem:[#allocation19 + $0xf0] sm:$0xff]
    %v2534 = vld [vmem:[#allocation19 + $0xf8] sm:$0xff]
    %v2535 = vld [vmem:[#allocation19 + $0x100] sm:$0xff]
    %v2536 = vld [vmem:[#allocation19 + $0x108] sm:$0xff]
    %v2537 = vld [vmem:[#allocation19 + $0x110] sm:$0xff]
    %v2538 = vld [vmem:[#allocation19 + $0x118] sm:$0xff]
    %v2539 = vld [vmem:[#allocation19 + $0x120] sm:$0xff]
    %v2540 = vld [vmem:[#allocation19 + $0x128] sm:$0xff]
    %v2541 = vld [vmem:[#allocation19 + $0x130] sm:$0xff]
    %v2542 = vld [vmem:[#allocation19 + $0x138] sm:$0xff]
    %v2543 = vld [vmem:[#allocation19 + $0x140] sm:$0xff]
    %v2544 = vld [vmem:[#allocation19 + $0x148] sm:$0xff]
    %v2545 = vld [vmem:[#allocation19 + $0x150] sm:$0xff]
    %v2546 = vld [vmem:[#allocation19 + $0x158] sm:$0xff]
    %v2547 = vld [vmem:[#allocation19 + $0x160] sm:$0xff]
    %v2548 = vld [vmem:[#allocation19 + $0x168] sm:$0xff]
    %v2549 = vld [vmem:[#allocation19 + $0x170] sm:$0xff]
    %v2550 = vld [vmem:[#allocation19 + $0x178] sm:$0xff]
    %v2551 = vld [vmem:[#allocation19 + $0x180] sm:$0xff]
    %v2552 = vld [vmem:[#allocation19 + $0x188] sm:$0xff]
    %v2553 = vld [vmem:[#allocation19 + $0x190] sm:$0xff]
    %v2554 = vld [vmem:[#allocation19 + $0x198] sm:$0xff]
    %v2555 = vld [vmem:[#allocation19 + $0x1a0] sm:$0xff]
    %v2556 = vld [vmem:[#allocation19 + $0x1a8] sm:$0xff]
    %v2557 = vld [vmem:[#allocation19 + $0x1b0] sm:$0xff]
    %v2558 = vld [vmem:[#allocation19 + $0x1b8] sm:$0xff]
    %v2559 = vld [vmem:[#allocation19 + $0x1c0] sm:$0xff]
    %v2560 = vld [vmem:[#allocation19 + $0x1c8] sm:$0xff]
    %v2561 = vld [vmem:[#allocation19 + $0x1d0] sm:$0xff]
    %v2562 = vld [vmem:[#allocation19 + $0x1d8] sm:$0xff]
    %v2563 = vld [vmem:[#allocation19 + $0x1e0] sm:$0xff]
    %v2564 = vld [vmem:[#allocation19 + $0x1e8] sm:$0xff]
    %v2565 = vld [vmem:[#allocation19 + $0x1f0] sm:$0xff]
    %v2566 = vld [vmem:[#allocation19 + $0x1f8] sm:$0xff]
    %v2567 = vld [vmem:[%s20] sm:$0xf]
    %v2568 = vld [vmem:[%s21] sm:$0xf]
    %v2569 = vld [vmem:[%s21 + $0x4] sm:$0xf]
    %v2570 = vld [vmem:[%s21 + $0x8] sm:$0xf]
    %v2571 = vld [vmem:[%s21 + $0xc] sm:$0xf]
    %v2572 = vld [vmem:[%s21 + $0x10] sm:$0xf]
    %v2573 = vld [vmem:[%s21 + $0x14] sm:$0xf]
    %v2574 = vld [vmem:[%s21 + $0x18] sm:$0xf]
    %v2575 = vld [vmem:[%s21 + $0x1c] sm:$0xf]
    %v2576 = vld [vmem:[%s21 + $0x20] sm:$0xf]
    %v2577 = vld [vmem:[%s21 + $0x24] sm:$0xf]
    %v2578 = vld [vmem:[%s21 + $0x28] sm:$0xf]
    %v2579 = vld [vmem:[%s21 + $0x2c] sm:$0xf]
    %v2580 = vld [vmem:[%s21 + $0x30] sm:$0xf]
    %v2581 = vld [vmem:[%s21 + $0x34] sm:$0xf]
    %v2582 = vld [vmem:[%s21 + $0x38] sm:$0xf]
    %v2583 = vld [vmem:[%s21 + $0x3c] sm:$0xf]
    %v2584 = vld [vmem:[%s21 + $0x40] sm:$0xf]
    %v2585 = vld [vmem:[%s21 + $0x44] sm:$0xf]
    %v2586 = vld [vmem:[%s21 + $0x48] sm:$0xf]
    %v2587 = vld [vmem:[%s21 + $0x4c] sm:$0xf]
    %v2588 = vld [vmem:[%s21 + $0x50] sm:$0xf]
    %v2589 = vld [vmem:[%s21 + $0x54] sm:$0xf]
    %v2590 = vld [vmem:[%s21 + $0x58] sm:$0xf]
    %v2591 = vld [vmem:[%s21 + $0x5c] sm:$0xf]
    %v2592 = vld [vmem:[%s21 + $0x60] sm:$0xf]
    %v2593 = vld [vmem:[%s21 + $0x64] sm:$0xf]
    %v2594 = vld [vmem:[%s21 + $0x68] sm:$0xf]
    %v2595 = vld [vmem:[%s21 + $0x6c] sm:$0xf]
    %v2596 = vld [vmem:[%s21 + $0x70] sm:$0xf]
    %v2597 = vld [vmem:[%s21 + $0x74] sm:$0xf]
    %v2598 = vld [vmem:[%s21 + $0x78] sm:$0xf]
    %v2599 = vld [vmem:[%s21 + $0x7c] sm:$0xf]
    %v2600 = vld [vmem:[%s21 + $0x80] sm:$0xf]
    %v2601 = vld [vmem:[%s21 + $0x84] sm:$0xf]
    %v2602 = vld [vmem:[%s21 + $0x88] sm:$0xf]
    %v2603 = vld [vmem:[%s21 + $0x8c] sm:$0xf]
    %v2604 = vld [vmem:[%s21 + $0x90] sm:$0xf]
    %v2605 = vld [vmem:[%s21 + $0x94] sm:$0xf]
    %v2606 = vld [vmem:[%s21 + $0x98] sm:$0xf]
    %v2607 = vld [vmem:[%s21 + $0x9c] sm:$0xf]
    %v2608 = vld [vmem:[%s21 + $0xa0] sm:$0xf]
    %v2609 = vld [vmem:[%s21 + $0xa4] sm:$0xf]
    %v2610 = vld [vmem:[%s21 + $0xa8] sm:$0xf]
    %v2611 = vld [vmem:[%s21 + $0xac] sm:$0xf]
    %v2612 = vld [vmem:[%s21 + $0xb0] sm:$0xf]
    %v2613 = vld [vmem:[%s21 + $0xb4] sm:$0xf]
    %v2614 = vld [vmem:[%s21 + $0xb8] sm:$0xf]
    %v2615 = vld [vmem:[%s21 + $0xbc] sm:$0xf]
    %v2616 = vld [vmem:[%s21 + $0xc0] sm:$0xf]
    %v2617 = vld [vmem:[%s21 + $0xc4] sm:$0xf]
    %v2618 = vld [vmem:[%s21 + $0xc8] sm:$0xf]
    %v2619 = vld [vmem:[%s21 + $0xcc] sm:$0xf]
    %v2620 = vld [vmem:[%s21 + $0xd0] sm:$0xf]
    %v2621 = vld [vmem:[%s21 + $0xd4] sm:$0xf]
    %v2622 = vld [vmem:[%s21 + $0xd8] sm:$0xf]
    %v2623 = vld [vmem:[%s21 + $0xdc] sm:$0xf]
    %v2624 = vld [vmem:[%s21 + $0xe0] sm:$0xf]
    %v2625 = vld [vmem:[%s21 + $0xe4] sm:$0xf]
    %v2626 = vld [vmem:[%s21 + $0xe8] sm:$0xf]
    %v2627 = vld [vmem:[%s21 + $0xec] sm:$0xf]
    %v2628 = vld [vmem:[%s21 + $0xf0] sm:$0xf]
    %v2629 = vld [vmem:[%s21 + $0xf4] sm:$0xf]
    %v2630 = vld [vmem:[%s21 + $0xf8] sm:$0xf]
    %v2631 = vld [vmem:[%s21 + $0xfc] sm:$0xf]
    %v2632 = vld [vmem:[%s22] sm:$0x1]
    %2634 = vset.pattern.permute.xlu0 0
    %2635 = vperm.xlu0 %2634, %v2160
    %v2636 = vpop.permute.xlu0 %2635
    %v2639 = vperm.slane %v2161, 0
    %v2641 = vmul.f32 %v2636, %v2639
    %v2642 = vand.u32 2147483647, %v2641
    %vm2643 = vcmp.le.f32.partialorder %v2642, 0.7853982
    %vm2644 = vcmp.lt.s32.totalorder %v2641, 0
    %v2645 = vand.u32 %v2641, 2139095040
    %v2646 = vshrl.u32 %v2645, 23
    %v2647 = vsub.s32 %v2646, 127
    %v2648 = vand.u32 2147483647, %v2641
    %v2649 = vand.u32 %v2648, 8388607
    %v2650 = vor.u32 %v2649, 8388608
    %v2651 = vsub.s32 0, %v2650
    %v2652 = vadd.s32 %v2647, 1
    %vm2653 = vcmp.gt.s32.totalorder %v2652, 0
    %v2654 = vsel %vm2653, %v2652, 0
    %v2655 = vshrl.u32 %v2654, 5
    %v2656 = vand.u32 %v2654, 31
    %v2657 = vsub.s32 32, %v2656
    %v2658 = vshrl.u32 683565275, %v2657
    %v2659 = vshll.u32 683565275, %v2656
    %v2660 = vshrl.u32 2475754826, %v2657
    %v2661 = vor.u32 %v2659, %v2660
    %v2662 = vshll.u32 2475754826, %v2656
    %v2663 = vshrl.u32 2131351028, %v2657
    %v2664 = vor.u32 %v2662, %v2663
    %v2665 = vshll.u32 2131351028, %v2656
    %v2666 = vshrl.u32 2102212464, %v2657
    %v2667 = vor.u32 %v2665, %v2666
    %v2668 = vshll.u32 2102212464, %v2656
    %v2669 = vshrl.u32 920167782, %v2657
    %v2670 = vor.u32 %v2668, %v2669
    %v2671 = vshll.u32 920167782, %v2656
    %v2672 = vshrl.u32 1326507024, %v2657
    %v2673 = vor.u32 %v2671, %v2672
    %vm2674 = vcmp.lt.s32.totalorder %v2655, 1
    %vm2675 = vcmp.lt.s32.totalorder %v2655, 2
    %vm2676 = vcmp.lt.s32.totalorder %v2655, 3
    %vm2677 = vcmp.lt.s32.totalorder %v2655, 4
    %v2678 = vsel %vm2674, %v2658, %v2661
    %v2679 = vsel %vm2677, %v2667, 2102212464
    %v2680 = vsel %vm2676, %v2664, %v2679
    %v2681 = vsel %vm2675, %v2678, %v2680
    %v2682 = vsel %vm2674, %v2661, %v2664
    %v2683 = vsel %vm2677, %v2670, 920167782
    %v2684 = vsel %vm2676, %v2667, %v2683
    %v2685 = vsel %vm2675, %v2682, %v2684
    %v2686 = vsel %vm2674, %v2664, %v2667
    %v2687 = vsel %vm2677, %v2673, 1326507024
    %v2688 = vsel %vm2676, %v2670, %v2687
    %v2689 = vsel %vm2675, %v2686, %v2688
    %v2690 = vshll.u32 %v2650, 8
    %v2691 = vand.u32 %v2690, 65535
    %v2692 = vshrl.u32 %v2690, 16
    %v2693 = vand.u32 %v2689, 65535
    %v2694 = vshrl.u32 %v2689, 16
    %v2695 = vmul.u32 %v2691, %v2693
    %v2696 = vmul.u32 %v2691, %v2694
    %v2697 = vmul.u32 %v2692, %v2693
    %v2698 = vmul.u32 %v2692, %v2694
    %v2699 = vshll.u32 %v2696, 16
    %v2700 = vshrl.u32 %v2696, 16
    %v2701 = vshll.u32 %v2697, 16
    %v2702 = vshrl.u32 %v2697, 16
    %vm2703 = vc.u32 %v2695, %v2699
    %v2704 = vsel %vm2703, 1, 0
    %v2705 = vadd.s32 %v2695, %v2699
    %v2706 = vadd.s32 %v2698, %v2704
    %vm2707 = vc.u32 %v2705, %v2701
    %v2708 = vsel %vm2707, 1, 0
    %v2709 = vadd.s32 %v2705, %v2701
    %v2710 = vadd.s32 %v2706, %v2708
    %v2711 = vadd.s32 %v2710, %v2700
    %v2712 = vadd.s32 %v2711, %v2702
    %v2713 = vand.u32 %v2690, 65535
    %v2714 = vshrl.u32 %v2690, 16
    %v2715 = vand.u32 %v2685, 65535
    %v2716 = vshrl.u32 %v2685, 16
    %v2717 = vmul.u32 %v2713, %v2715
    %v2718 = vmul.u32 %v2713, %v2716
    %v2719 = vmul.u32 %v2714, %v2715
    %v2720 = vmul.u32 %v2714, %v2716
    %v2721 = vshll.u32 %v2718, 16
    %v2722 = vshrl.u32 %v2718, 16
    %v2723 = vshll.u32 %v2719, 16
    %v2724 = vshrl.u32 %v2719, 16
    %vm2725 = vc.u32 %v2717, %v2721
    %v2726 = vsel %vm2725, 1, 0
    %v2727 = vadd.s32 %v2717, %v2721
    %v2728 = vadd.s32 %v2720, %v2726
    %vm2729 = vc.u32 %v2727, %v2723
    %v2730 = vsel %vm2729, 1, 0
    %v2731 = vadd.s32 %v2727, %v2723
    %v2732 = vadd.s32 %v2728, %v2730
    %v2733 = vadd.s32 %v2732, %v2722
    %v2734 = vadd.s32 %v2733, %v2724
    %v2735 = vmul.u32 %v2690, %v2681
    %v2736 = vadd.s32 %v2712, %v2731
    %vm2737 = vc.u32 %v2712, %v2731
    %v2738 = vadd.s32 %v2734, 1
    %v2739 = vsel %vm2737, %v2738, %v2734
    %v2740 = vadd.s32 %v2735, %v2739
    %v2741 = vadd.s32 %v2740, 536870912
    %v2742 = vshrl.u32 %v2741, 30
    %v2743 = vshll.u32 %v2742, 30
    %v2744 = vsub.s32 %v2740, %v2743
    %vm2745 = vcmp.lt.s32.totalorder %v2744, 0
    %v2746 = vsub.s32 0, %v2744
    %v2747 = vsel %vm2745, %v2746, %v2744
    %v2748 = vclz %v2747
    %v2749 = vsub.s32 %v2748, 2
    %vm2750 = vcmp.gt.s32.totalorder 0, %v2749
    %v2751 = vsel %vm2750, 0, %v2749
    %v2752 = vsub.s32 32, %v2751
    %v2753 = vshll.u32 %v2744, %v2751
    %v2754 = vshrl.u32 %v2736, %v2752
    %v2755 = vor.u32 %v2753, %v2754
    %v2756 = vsub.s32 4294967266, %v2751
    %v2757 = vadd.s32 %v2756, 127
    %v2758 = vshll.u32 %v2757, 23
    %v2759 = vor.u32 4788187, %v2758
    %v2760 = vand.u32 2147483647, %v2759
    %v2762 = vcvt.s32.f32 %v2755
    %v2763 = vmul.f32 %v2762, %v2760
    %v2764 = vxor.u32 %v2763, 2147483648
    %v2765 = vsel %vm2644, %v2764, %v2763
    %v2766 = vsub.s32 4, %v2742
    %v2767 = vsel %vm2644, %v2766, %v2742
    %v2768 = vsel %vm2643, %v2641, %v2765
    %v2769 = vsel %vm2643, 0, %v2767
    %v2770 = vmul.f32 %v2768, %v2768
    %v2771 = vmul.f32 %v2770, -0.001358992
    %v2772 = vadd.f32 %v2771, 0.041655596
    %v2773 = vmul.f32 %v2770, %v2772
    %v2774 = vadd.f32 %v2773, -0.4999988
    %v2775 = vmul.f32 %v2770, %v2774
    %v2776 = vadd.f32 1.0, %v2775
    %v2777 = vmul.f32 %v2768, %v2768
    %v2778 = vmul.f32 %v2777, -0.00019511016
    %v2779 = vadd.f32 %v2778, 0.008332121
    %v2780 = vmul.f32 %v2777, %v2779
    %v2781 = vadd.f32 %v2780, -0.16666654
    %v2782 = vmul.f32 %v2777, %v2781
    %v2783 = vadd.f32 %v2782, 1.0
    %v2784 = vmul.f32 %v2783, %v2768
    %vm2785 = vweird.f32 %v2641
    %v2786 = vadd.s32 %v2769, 3
    %v2787 = vand.u32 %v2786, 3
    %vm2788 = vcmp.lt.s32.totalorder %v2787, 2
    %vm2789 = vcmp.eq.s32.totalorder %v2787, 0
    %v2790 = vxor.u32 %v2784, 2147483648
    %v2791 = vsel %vm2789, %v2776, %v2790
    %vm2792 = vcmp.eq.s32.totalorder %v2787, 2
    %v2793 = vxor.u32 %v2776, 2147483648
    %v2794 = vsel %vm2792, %v2793, %v2784
    %v2795 = vsel %vm2788, %v2791, %v2794
    %v2796 = vsel %vm2785, nan, %v2795
    %v2797 = vand.u32 2147483647, %v2641
    %vm2798 = vcmp.le.f32.partialorder %v2797, 0.7853982
    %vm2799 = vcmp.lt.s32.totalorder %v2641, 0
    %v2800 = vand.u32 %v2641, 2139095040
    %v2801 = vshrl.u32 %v2800, 23
    %v2802 = vsub.s32 %v2801, 127
    %v2803 = vand.u32 2147483647, %v2641
    %v2804 = vand.u32 %v2803, 8388607
    %v2805 = vor.u32 %v2804, 8388608
    %v2806 = vsub.s32 0, %v2805
    %v2807 = vadd.s32 %v2802, 1
    %vm2808 = vcmp.gt.s32.totalorder %v2807, 0
    %v2809 = vsel %vm2808, %v2807, 0
    %v2810 = vshrl.u32 %v2809, 5
    %v2811 = vand.u32 %v2809, 31
    %v2812 = vsub.s32 32, %v2811
    %v2813 = vshrl.u32 683565275, %v2812
    %v2814 = vshll.u32 683565275, %v2811
    %v2815 = vshrl.u32 2475754826, %v2812
    %v2816 = vor.u32 %v2814, %v2815
    %v2817 = vshll.u32 2475754826, %v2811
    %v2818 = vshrl.u32 2131351028, %v2812
    %v2819 = vor.u32 %v2817, %v2818
    %v2820 = vshll.u32 2131351028, %v2811
    %v2821 = vshrl.u32 2102212464, %v2812
    %v2822 = vor.u32 %v2820, %v2821
    %v2823 = vshll.u32 2102212464, %v2811
    %v2824 = vshrl.u32 920167782, %v2812
    %v2825 = vor.u32 %v2823, %v2824
    %v2826 = vshll.u32 920167782, %v2811
    %v2827 = vshrl.u32 1326507024, %v2812
    %v2828 = vor.u32 %v2826, %v2827
    %vm2829 = vcmp.lt.s32.totalorder %v2810, 1
    %vm2830 = vcmp.lt.s32.totalorder %v2810, 2
    %vm2831 = vcmp.lt.s32.totalorder %v2810, 3
    %vm2832 = vcmp.lt.s32.totalorder %v2810, 4
    %v2833 = vsel %vm2829, %v2813, %v2816
    %v2834 = vsel %vm2832, %v2822, 2102212464
    %v2835 = vsel %vm2831, %v2819, %v2834
    %v2836 = vsel %vm2830, %v2833, %v2835
    %v2837 = vsel %vm2829, %v2816, %v2819
    %v2838 = vsel %vm2832, %v2825, 920167782
    %v2839 = vsel %vm2831, %v2822, %v2838
    %v2840 = vsel %vm2830, %v2837, %v2839
    %v2841 = vsel %vm2829, %v2819, %v2822
    %v2842 = vsel %vm2832, %v2828, 1326507024
    %v2843 = vsel %vm2831, %v2825, %v2842
    %v2844 = vsel %vm2830, %v2841, %v2843
    %v2845 = vshll.u32 %v2805, 8
    %v2846 = vand.u32 %v2845, 65535
    %v2847 = vshrl.u32 %v2845, 16
    %v2848 = vand.u32 %v2844, 65535
    %v2849 = vshrl.u32 %v2844, 16
    %v2850 = vmul.u32 %v2846, %v2848
    %v2851 = vmul.u32 %v2846, %v2849
    %v2852 = vmul.u32 %v2847, %v2848
    %v2853 = vmul.u32 %v2847, %v2849
    %v2854 = vshll.u32 %v2851, 16
    %v2855 = vshrl.u32 %v2851, 16
    %v2856 = vshll.u32 %v2852, 16
    %v2857 = vshrl.u32 %v2852, 16
    %vm2858 = vc.u32 %v2850, %v2854
    %v2859 = vsel %vm2858, 1, 0
    %v2860 = vadd.s32 %v2850, %v2854
    %v2861 = vadd.s32 %v2853, %v2859
    %vm2862 = vc.u32 %v2860, %v2856
    %v2863 = vsel %vm2862, 1, 0
    %v2864 = vadd.s32 %v2860, %v2856
    %v2865 = vadd.s32 %v2861, %v2863
    %v2866 = vadd.s32 %v2865, %v2855
    %v2867 = vadd.s32 %v2866, %v2857
    %v2868 = vand.u32 %v2845, 65535
    %v2869 = vshrl.u32 %v2845, 16
    %v2870 = vand.u32 %v2840, 65535
    %v2871 = vshrl.u32 %v2840, 16
    %v2872 = vmul.u32 %v2868, %v2870
    %v2873 = vmul.u32 %v2868, %v2871
    %v2874 = vmul.u32 %v2869, %v2870
    %v2875 = vmul.u32 %v2869, %v2871
    %v2876 = vshll.u32 %v2873, 16
    %v2877 = vshrl.u32 %v2873, 16
    %v2878 = vshll.u32 %v2874, 16
    %v2879 = vshrl.u32 %v2874, 16
    %vm2880 = vc.u32 %v2872, %v2876
    %v2881 = vsel %vm2880, 1, 0
    %v2882 = vadd.s32 %v2872, %v2876
    %v2883 = vadd.s32 %v2875, %v2881
    %vm2884 = vc.u32 %v2882, %v2878
    %v2885 = vsel %vm2884, 1, 0
    %v2886 = vadd.s32 %v2882, %v2878
    %v2887 = vadd.s32 %v2883, %v2885
    %v2888 = vadd.s32 %v2887, %v2877
    %v2889 = vadd.s32 %v2888, %v2879
    %v2890 = vmul.u32 %v2845, %v2836
    %v2891 = vadd.s32 %v2867, %v2886
    %vm2892 = vc.u32 %v2867, %v2886
    %v2893 = vadd.s32 %v2889, 1
    %v2894 = vsel %vm2892, %v2893, %v2889
    %v2895 = vadd.s32 %v2890, %v2894
    %v2896 = vadd.s32 %v2895, 536870912
    %v2897 = vshrl.u32 %v2896, 30
    %v2898 = vshll.u32 %v2897, 30
    %v2899 = vsub.s32 %v2895, %v2898
    %vm2900 = vcmp.lt.s32.totalorder %v2899, 0
    %v2901 = vsub.s32 0, %v2899
    %v2902 = vsel %vm2900, %v2901, %v2899
    %v2903 = vclz %v2902
    %v2904 = vsub.s32 %v2903, 2
    %vm2905 = vcmp.gt.s32.totalorder 0, %v2904
    %v2906 = vsel %vm2905, 0, %v2904
    %v2907 = vsub.s32 32, %v2906
    %v2908 = vshll.u32 %v2899, %v2906
    %v2909 = vshrl.u32 %v2891, %v2907
    %v2910 = vor.u32 %v2908, %v2909
    %v2911 = vsub.s32 4294967266, %v2906
    %v2912 = vadd.s32 %v2911, 127
    %v2913 = vshll.u32 %v2912, 23
    %v2914 = vor.u32 4788187, %v2913
    %v2915 = vand.u32 2147483647, %v2914
    %v2917 = vcvt.s32.f32 %v2910
    %v2918 = vmul.f32 %v2917, %v2915
    %v2919 = vxor.u32 %v2918, 2147483648
    %v2920 = vsel %vm2799, %v2919, %v2918
    %v2921 = vsub.s32 4, %v2897
    %v2922 = vsel %vm2799, %v2921, %v2897
    %v2923 = vsel %vm2798, %v2641, %v2920
    %v2924 = vsel %vm2798, 0, %v2922
    %v2925 = vmul.f32 %v2923, %v2923
    %v2926 = vmul.f32 %v2925, -0.001358992
    %v2927 = vadd.f32 %v2926, 0.041655596
    %v2928 = vmul.f32 %v2925, %v2927
    %v2929 = vadd.f32 %v2928, -0.4999988
    %v2930 = vmul.f32 %v2925, %v2929
    %v2931 = vadd.f32 1.0, %v2930
    %v2932 = vmul.f32 %v2923, %v2923
    %v2933 = vmul.f32 %v2932, -0.00019511016
    %v2934 = vadd.f32 %v2933, 0.008332121
    %v2935 = vmul.f32 %v2932, %v2934
    %v2936 = vadd.f32 %v2935, -0.16666654
    %v2937 = vmul.f32 %v2932, %v2936
    %v2938 = vadd.f32 %v2937, 1.0
    %v2939 = vmul.f32 %v2938, %v2923
    %vm2940 = vweird.f32 %v2641
    %v2941 = vand.u32 %v2924, 3
    %vm2942 = vcmp.lt.s32.totalorder %v2941, 2
    %vm2943 = vcmp.eq.s32.totalorder %v2941, 0
    %v2944 = vxor.u32 %v2939, 2147483648
    %v2945 = vsel %vm2943, %v2931, %v2944
    %vm2946 = vcmp.eq.s32.totalorder %v2941, 2
    %v2947 = vxor.u32 %v2931, 2147483648
    %v2948 = vsel %vm2946, %v2947, %v2939
    %v2949 = vsel %vm2942, %v2945, %v2948
    %v2950 = vsel %vm2940, nan, %v2949
    %v2951 = vpack.c.bf16 %v2796, %v2796
    %v2952 = vpack.c.bf16 %v2950, %v2950
    %v2961 = vunpack.c.l.b16 %v2170
    %v2962 = vunpack.c.l.b16 %v2171
    %v2963 = vunpack.c.l.b16 %v2172
    %v2964 = vunpack.c.l.b16 %v2173
    %v2965 = vunpack.c.l.b16 %v2174
    %v2966 = vunpack.c.l.b16 %v2175
    %v2967 = vunpack.c.l.b16 %v2176
    %v2968 = vunpack.c.l.b16 %v2177
    %v2969 = vpack.c.b16 %v2962, %v2961
    %v2970 = vpack.c.b16 %v2964, %v2963
    %v2971 = vpack.c.b16 %v2966, %v2965
    %v2972 = vpack.c.b16 %v2968, %v2967
    %v2978 = vsel %vm588, %v2952, 0
    %2980 = vmatpush.bf16.msra.mxu0 0
    %2981 = vmatpush.bf16.msra.mxu0 0
    %2982 = vmatpush.bf16.msra.mxu0 0
    %2983 = vmatpush.bf16.msra.mxu0 0
    %2984 = vmatpush.bf16.msra.mxu0 %v2972
    %2985 = vmatpush.bf16.msra.mxu0 %v2971
    %2986 = vmatpush.bf16.msra.mxu0 %v2970
    %2987 = vmatpush.bf16.msra.mxu0 %v2969
    %2988 = vmatmul.bf16.gmra.mxu0 %v2978
    %v2989 = vpop.f32.mrf.mxu0
    %v2990 = vadd.f32 0.0, %v2989
    %v2991 = vpop.f32.mrf.mxu0
    %2992 = vdwg.mxu0
    %v3001 = vunpack.c.l.b16 %v2162
    %v3002 = vunpack.c.l.b16 %v2163
    %v3003 = vunpack.c.l.b16 %v2164
    %v3004 = vunpack.c.l.b16 %v2165
    %v3005 = vunpack.c.l.b16 %v2166
    %v3006 = vunpack.c.l.b16 %v2167
    %v3007 = vunpack.c.l.b16 %v2168
    %v3008 = vunpack.c.l.b16 %v2169
    %v3009 = vpack.c.b16 %v3002, %v3001
    %v3010 = vpack.c.b16 %v3004, %v3003
    %v3011 = vpack.c.b16 %v3006, %v3005
    %v3012 = vpack.c.b16 %v3008, %v3007
    %v3018 = vsel %vm588, %v2951, 0
    %3020 = vmatpush.bf16.msra.mxu0 0
    %3021 = vmatpush.bf16.msra.mxu0 0
    %3022 = vmatpush.bf16.msra.mxu0 0
    %3023 = vmatpush.bf16.msra.mxu0 0
    %3024 = vmatpush.bf16.msra.mxu0 %v3012
    %3025 = vmatpush.bf16.msra.mxu0 %v3011
    %3026 = vmatpush.bf16.msra.mxu0 %v3010
    %3027 = vmatpush.bf16.msra.mxu0 %v3009
    %3028 = vmatmul.bf16.gmra.mxu0 %v3018
    %v3029 = vpop.f32.mrf.mxu0
    %v3030 = vadd.f32 %v2990, %v3029
    %v3031 = vpop.f32.mrf.mxu0
    %3032 = vdwg.mxu0
    %v3034 = vperm.slane %v2178, 0
    %v3036 = vadd.f32 %v3030, %v3034
    %v3037 = vmax.f32 %v3036, 0.0
    %v3038 = vpack.c.bf16 %v2159, %v2159
    %v3040 = vperm.slane %v2181, 0
    %v3041 = vperm.slane %v2181, 1
    %v3046 = vunpack.c.l.b16 %v2179
    %v3047 = vunpack.c.h.b16 %v2179
    %v3048 = vunpack.c.l.b16 %v2180
    %v3049 = vunpack.c.h.b16 %v2180
    %v3050 = vpack.c.b16 %v3048, %v3046
    %v3051 = vpack.c.b16 %v3049, %v3047
    %vm3052 = vcmask 72704
    %v3054 = vsel %vm3052, %v3038, 0
    %vm3056 = vcmask 1043456
    %vm3057 = vcmask 1044480
    %v3058 = vsel %vm3056, 4294967295, 65535
    %v3059 = vsel %vm3057, %v3058, 0
    %v3061 = vand.u32 %v3050, %v3059
    %v3064 = vand.u32 %v3051, %v3059
    %3066 = vmatpush.bf16.msra.mxu0 0
    %3067 = vmatpush.bf16.msra.mxu0 0
    %3068 = vmatpush.bf16.msra.mxu0 0
    %3069 = vmatpush.bf16.msra.mxu0 0
    %3070 = vmatpush.bf16.msra.mxu0 0
    %3071 = vmatpush.bf16.msra.mxu0 0
    %3072 = vmatpush.bf16.msra.mxu0 0
    %3073 = vmatpush.bf16.msra.mxu0 %v3061
    %3074 = vmatmul.bf16.gmra.mxu0 %v3054
    %v3075 = vpop.f32.mrf.mxu0
    %v3076 = vadd.f32 %v3040, %v3075
    %v3077 = vpop.f32.mrf.mxu0
    %3078 = vdwg.mxu0
    %3079 = vmatpush.bf16.msra.mxu0 0
    %3080 = vmatpush.bf16.msra.mxu0 0
    %3081 = vmatpush.bf16.msra.mxu0 0
    %3082 = vmatpush.bf16.msra.mxu0 0
    %3083 = vmatpush.bf16.msra.mxu0 0
    %3084 = vmatpush.bf16.msra.mxu0 0
    %3085 = vmatpush.bf16.msra.mxu0 0
    %3086 = vmatpush.bf16.msra.mxu0 %v3064
    %3087 = vmatmul.bf16.gmra.mxu0 %v3054
    %v3088 = vpop.f32.mrf.mxu0
    %v3089 = vadd.f32 %v3041, %v3088
    %v3090 = vpop.f32.mrf.mxu0
    %3091 = vdwg.mxu0
    %v3092 = vmax.f32 %v3076, 0.0
    %v3093 = vmax.f32 %v3089, 0.0
    %v3094 = vpack.c.bf16 %v3092, %v3092
    %v3095 = vpack.c.bf16 %v3093, %v3093
    %v3097 = vperm.slane %v2214, 0
    %v3098 = vperm.slane %v2214, 1
    %v3133 = vunpack.c.l.b16 %v2182
    %v3134 = vunpack.c.h.b16 %v2182
    %v3135 = vunpack.c.l.b16 %v2183
    %v3136 = vunpack.c.h.b16 %v2183
    %v3137 = vunpack.c.l.b16 %v2184
    %v3138 = vunpack.c.h.b16 %v2184
    %v3139 = vunpack.c.l.b16 %v2185
    %v3140 = vunpack.c.h.b16 %v2185
    %v3141 = vunpack.c.l.b16 %v2186
    %v3142 = vunpack.c.h.b16 %v2186
    %v3143 = vunpack.c.l.b16 %v2187
    %v3144 = vunpack.c.h.b16 %v2187
    %v3145 = vunpack.c.l.b16 %v2188
    %v3146 = vunpack.c.h.b16 %v2188
    %v3147 = vunpack.c.l.b16 %v2189
    %v3148 = vunpack.c.h.b16 %v2189
    %v3149 = vunpack.c.l.b16 %v2190
    %v3150 = vunpack.c.h.b16 %v2190
    %v3151 = vunpack.c.l.b16 %v2191
    %v3152 = vunpack.c.h.b16 %v2191
    %v3153 = vunpack.c.l.b16 %v2192
    %v3154 = vunpack.c.h.b16 %v2192
    %v3155 = vunpack.c.l.b16 %v2193
    %v3156 = vunpack.c.h.b16 %v2193
    %v3157 = vunpack.c.l.b16 %v2194
    %v3158 = vunpack.c.h.b16 %v2194
    %v3159 = vunpack.c.l.b16 %v2195
    %v3160 = vunpack.c.h.b16 %v2195
    %v3161 = vunpack.c.l.b16 %v2196
    %v3162 = vunpack.c.h.b16 %v2196
    %v3163 = vunpack.c.l.b16 %v2197
    %v3164 = vunpack.c.h.b16 %v2197
    %v3165 = vunpack.c.l.b16 %v2198
    %v3166 = vunpack.c.h.b16 %v2198
    %v3167 = vunpack.c.l.b16 %v2199
    %v3168 = vunpack.c.h.b16 %v2199
    %v3169 = vunpack.c.l.b16 %v2200
    %v3170 = vunpack.c.h.b16 %v2200
    %v3171 = vunpack.c.l.b16 %v2201
    %v3172 = vunpack.c.h.b16 %v2201
    %v3173 = vunpack.c.l.b16 %v2202
    %v3174 = vunpack.c.h.b16 %v2202
    %v3175 = vunpack.c.l.b16 %v2203
    %v3176 = vunpack.c.h.b16 %v2203
    %v3177 = vunpack.c.l.b16 %v2204
    %v3178 = vunpack.c.h.b16 %v2204
    %v3179 = vunpack.c.l.b16 %v2205
    %v3180 = vunpack.c.h.b16 %v2205
    %v3181 = vunpack.c.l.b16 %v2206
    %v3182 = vunpack.c.h.b16 %v2206
    %v3183 = vunpack.c.l.b16 %v2207
    %v3184 = vunpack.c.h.b16 %v2207
    %v3185 = vunpack.c.l.b16 %v2208
    %v3186 = vunpack.c.h.b16 %v2208
    %v3187 = vunpack.c.l.b16 %v2209
    %v3188 = vunpack.c.h.b16 %v2209
    %v3189 = vunpack.c.l.b16 %v2210
    %v3190 = vunpack.c.h.b16 %v2210
    %v3191 = vunpack.c.l.b16 %v2211
    %v3192 = vunpack.c.h.b16 %v2211
    %v3193 = vunpack.c.l.b16 %v2212
    %v3194 = vunpack.c.h.b16 %v2212
    %v3195 = vunpack.c.l.b16 %v2213
    %v3196 = vunpack.c.h.b16 %v2213
    %v3197 = vpack.c.b16 %v3135, %v3133
    %v3198 = vpack.c.b16 %v3136, %v3134
    %v3199 = vpack.c.b16 %v3139, %v3137
    %v3200 = vpack.c.b16 %v3140, %v3138
    %v3201 = vpack.c.b16 %v3143, %v3141
    %v3202 = vpack.c.b16 %v3144, %v3142
    %v3203 = vpack.c.b16 %v3147, %v3145
    %v3204 = vpack.c.b16 %v3148, %v3146
    %v3205 = vpack.c.b16 %v3151, %v3149
    %v3206 = vpack.c.b16 %v3152, %v3150
    %v3207 = vpack.c.b16 %v3155, %v3153
    %v3208 = vpack.c.b16 %v3156, %v3154
    %v3209 = vpack.c.b16 %v3159, %v3157
    %v3210 = vpack.c.b16 %v3160, %v3158
    %v3211 = vpack.c.b16 %v3163, %v3161
    %v3212 = vpack.c.b16 %v3164, %v3162
    %v3213 = vpack.c.b16 %v3167, %v3165
    %v3214 = vpack.c.b16 %v3168, %v3166
    %v3215 = vpack.c.b16 %v3171, %v3169
    %v3216 = vpack.c.b16 %v3172, %v3170
    %v3217 = vpack.c.b16 %v3175, %v3173
    %v3218 = vpack.c.b16 %v3176, %v3174
    %v3219 = vpack.c.b16 %v3179, %v3177
    %v3220 = vpack.c.b16 %v3180, %v3178
    %v3221 = vpack.c.b16 %v3183, %v3181
    %v3222 = vpack.c.b16 %v3184, %v3182
    %v3223 = vpack.c.b16 %v3187, %v3185
    %v3224 = vpack.c.b16 %v3188, %v3186
    %v3225 = vpack.c.b16 %v3191, %v3189
    %v3226 = vpack.c.b16 %v3192, %v3190
    %v3227 = vpack.c.b16 %v3195, %v3193
    %v3228 = vpack.c.b16 %v3196, %v3194
    %3261 = vmatpush.bf16.msra.mxu0 %v3211
    %3262 = vmatpush.bf16.msra.mxu0 %v3209
    %3263 = vmatpush.bf16.msra.mxu0 %v3207
    %3264 = vmatpush.bf16.msra.mxu0 %v3205
    %3265 = vmatpush.bf16.msra.mxu0 %v3203
    %3266 = vmatpush.bf16.msra.mxu0 %v3201
    %3267 = vmatpush.bf16.msra.mxu0 %v3199
    %3268 = vmatpush.bf16.msra.mxu0 %v3197
    %3269 = vmatmul.bf16.gmra.mxu0 %v3094
    %v3270 = vpop.f32.mrf.mxu0
    %v3271 = vadd.f32 %v3097, %v3270
    %v3272 = vpop.f32.mrf.mxu0
    %3273 = vdwg.mxu0
    %3274 = vmatpush.bf16.msra.mxu0 %v3227
    %3275 = vmatpush.bf16.msra.mxu0 %v3225
    %3276 = vmatpush.bf16.msra.mxu0 %v3223
    %3277 = vmatpush.bf16.msra.mxu0 %v3221
    %3278 = vmatpush.bf16.msra.mxu0 %v3219
    %3279 = vmatpush.bf16.msra.mxu0 %v3217
    %3280 = vmatpush.bf16.msra.mxu0 %v3215
    %3281 = vmatpush.bf16.msra.mxu0 %v3213
    %3282 = vmatmul.bf16.gmra.mxu0 %v3095
    %v3283 = vpop.f32.mrf.mxu0
    %v3284 = vadd.f32 %v3271, %v3283
    %v3285 = vpop.f32.mrf.mxu0
    %3286 = vdwg.mxu0
    %3287 = vmatpush.bf16.msra.mxu0 %v3212
    %3288 = vmatpush.bf16.msra.mxu0 %v3210
    %3289 = vmatpush.bf16.msra.mxu0 %v3208
    %3290 = vmatpush.bf16.msra.mxu0 %v3206
    %3291 = vmatpush.bf16.msra.mxu0 %v3204
    %3292 = vmatpush.bf16.msra.mxu0 %v3202
    %3293 = vmatpush.bf16.msra.mxu0 %v3200
    %3294 = vmatpush.bf16.msra.mxu0 %v3198
    %3295 = vmatmul.bf16.gmra.mxu0 %v3094
    %v3296 = vpop.f32.mrf.mxu0
    %v3297 = vadd.f32 %v3098, %v3296
    %v3298 = vpop.f32.mrf.mxu0
    %3299 = vdwg.mxu0
    %3300 = vmatpush.bf16.msra.mxu0 %v3228
    %3301 = vmatpush.bf16.msra.mxu0 %v3226
    %3302 = vmatpush.bf16.msra.mxu0 %v3224
    %3303 = vmatpush.bf16.msra.mxu0 %v3222
    %3304 = vmatpush.bf16.msra.mxu0 %v3220
    %3305 = vmatpush.bf16.msra.mxu0 %v3218
    %3306 = vmatpush.bf16.msra.mxu0 %v3216
    %3307 = vmatpush.bf16.msra.mxu0 %v3214
    %3308 = vmatmul.bf16.gmra.mxu0 %v3095
    %v3309 = vpop.f32.mrf.mxu0
    %v3310 = vadd.f32 %v3297, %v3309
    %v3311 = vpop.f32.mrf.mxu0
    %3312 = vdwg.mxu0
    %v3313 = vmax.f32 %v3284, 0.0
    %v3314 = vmax.f32 %v3310, 0.0
    %v3315 = vpack.c.bf16 %v2068, %v2068
    %v3316 = vpack.c.bf16 %v2074, %v2074
    %v3317 = vpack.c.bf16 %v2080, %v2080
    %v3318 = vpack.c.bf16 %v2086, %v2086
    %v3319 = vpack.c.bf16 %v2092, %v2092
    %v3320 = vpack.c.bf16 %v2098, %v2098
    %v3321 = vpack.c.bf16 %v2104, %v2104
    %v3322 = vpack.c.bf16 %v2110, %v2110
    %v3323 = vpack.c.bf16 %v2116, %v2116
    %v3324 = vpack.c.bf16 %v2122, %v2122
    %v3325 = vpack.c.bf16 %v2128, %v2128
    %v3326 = vpack.c.bf16 %v2134, %v2134
    %v3327 = vpack.c.bf16 %v2140, %v2140
    %v3328 = vpack.c.bf16 %v2146, %v2146
    %v3329 = vpack.c.bf16 %v2152, %v2152
    %v3330 = vpack.c.bf16 %v2158, %v2158
    %v3331 = vpack.c.bf16 %v3037, %v3037
    %v3364 = vunpack.c.l.b16 %v2471
    %v3365 = vunpack.c.h.b16 %v2471
    %v3366 = vunpack.c.l.b16 %v2472
    %v3367 = vunpack.c.h.b16 %v2472
    %v3368 = vunpack.c.l.b16 %v2473
    %v3369 = vunpack.c.h.b16 %v2473
    %v3370 = vunpack.c.l.b16 %v2474
    %v3371 = vunpack.c.h.b16 %v2474
    %v3372 = vunpack.c.l.b16 %v2475
    %v3373 = vunpack.c.h.b16 %v2475
    %v3374 = vunpack.c.l.b16 %v2476
    %v3375 = vunpack.c.h.b16 %v2476
    %v3376 = vunpack.c.l.b16 %v2477
    %v3377 = vunpack.c.h.b16 %v2477
    %v3378 = vunpack.c.l.b16 %v2478
    %v3379 = vunpack.c.h.b16 %v2478
    %v3380 = vunpack.c.l.b16 %v2479
    %v3381 = vunpack.c.h.b16 %v2479
    %v3382 = vunpack.c.l.b16 %v2480
    %v3383 = vunpack.c.h.b16 %v2480
    %v3384 = vunpack.c.l.b16 %v2481
    %v3385 = vunpack.c.h.b16 %v2481
    %v3386 = vunpack.c.l.b16 %v2482
    %v3387 = vunpack.c.h.b16 %v2482
    %v3388 = vunpack.c.l.b16 %v2483
    %v3389 = vunpack.c.h.b16 %v2483
    %v3390 = vunpack.c.l.b16 %v2484
    %v3391 = vunpack.c.h.b16 %v2484
    %v3392 = vunpack.c.l.b16 %v2485
    %v3393 = vunpack.c.h.b16 %v2485
    %v3394 = vunpack.c.l.b16 %v2486
    %v3395 = vunpack.c.h.b16 %v2486
    %v3396 = vunpack.c.l.b16 %v2487
    %v3397 = vunpack.c.h.b16 %v2487
    %v3398 = vunpack.c.l.b16 %v2488
    %v3399 = vunpack.c.h.b16 %v2488
    %v3400 = vunpack.c.l.b16 %v2489
    %v3401 = vunpack.c.h.b16 %v2489
    %v3402 = vunpack.c.l.b16 %v2490
    %v3403 = vunpack.c.h.b16 %v2490
    %v3404 = vunpack.c.l.b16 %v2491
    %v3405 = vunpack.c.h.b16 %v2491
    %v3406 = vunpack.c.l.b16 %v2492
    %v3407 = vunpack.c.h.b16 %v2492
    %v3408 = vunpack.c.l.b16 %v2493
    %v3409 = vunpack.c.h.b16 %v2493
    %v3410 = vunpack.c.l.b16 %v2494
    %v3411 = vunpack.c.h.b16 %v2494
    %v3412 = vunpack.c.l.b16 %v2495
    %v3413 = vunpack.c.h.b16 %v2495
    %v3414 = vunpack.c.l.b16 %v2496
    %v3415 = vunpack.c.h.b16 %v2496
    %v3416 = vunpack.c.l.b16 %v2497
    %v3417 = vunpack.c.h.b16 %v2497
    %v3418 = vunpack.c.l.b16 %v2498
    %v3419 = vunpack.c.h.b16 %v2498
    %v3420 = vunpack.c.l.b16 %v2499
    %v3421 = vunpack.c.h.b16 %v2499
    %v3422 = vunpack.c.l.b16 %v2500
    %v3423 = vunpack.c.h.b16 %v2500
    %v3424 = vunpack.c.l.b16 %v2501
    %v3425 = vunpack.c.h.b16 %v2501
    %v3426 = vunpack.c.l.b16 %v2502
    %v3427 = vunpack.c.h.b16 %v2502
    %v3428 = vpack.c.b16 %v3368, %v3364
    %v3429 = vpack.c.b16 %v3369, %v3365
    %v3430 = vpack.c.b16 %v3370, %v3366
    %v3431 = vpack.c.b16 %v3371, %v3367
    %v3432 = vpack.c.b16 %v3376, %v3372
    %v3433 = vpack.c.b16 %v3377, %v3373
    %v3434 = vpack.c.b16 %v3378, %v3374
    %v3435 = vpack.c.b16 %v3379, %v3375
    %v3436 = vpack.c.b16 %v3384, %v3380
    %v3437 = vpack.c.b16 %v3385, %v3381
    %v3438 = vpack.c.b16 %v3386, %v3382
    %v3439 = vpack.c.b16 %v3387, %v3383
    %v3440 = vpack.c.b16 %v3392, %v3388
    %v3441 = vpack.c.b16 %v3393, %v3389
    %v3442 = vpack.c.b16 %v3394, %v3390
    %v3443 = vpack.c.b16 %v3395, %v3391
    %v3444 = vpack.c.b16 %v3400, %v3396
    %v3445 = vpack.c.b16 %v3401, %v3397
    %v3446 = vpack.c.b16 %v3402, %v3398
    %v3447 = vpack.c.b16 %v3403, %v3399
    %v3448 = vpack.c.b16 %v3408, %v3404
    %v3449 = vpack.c.b16 %v3409, %v3405
    %v3450 = vpack.c.b16 %v3410, %v3406
    %v3451 = vpack.c.b16 %v3411, %v3407
    %v3452 = vpack.c.b16 %v3416, %v3412
    %v3453 = vpack.c.b16 %v3417, %v3413
    %v3454 = vpack.c.b16 %v3418, %v3414
    %v3455 = vpack.c.b16 %v3419, %v3415
    %v3456 = vpack.c.b16 %v3424, %v3420
    %v3457 = vpack.c.b16 %v3425, %v3421
    %v3458 = vpack.c.b16 %v3426, %v3422
    %v3459 = vpack.c.b16 %v3427, %v3423
    %3492 = vmatpush.bf16.msra.mxu0 %v3456
    %3493 = vmatpush.bf16.msra.mxu0 %v3452
    %3494 = vmatpush.bf16.msra.mxu0 %v3448
    %3495 = vmatpush.bf16.msra.mxu0 %v3444
    %3496 = vmatpush.bf16.msra.mxu0 %v3440
    %3497 = vmatpush.bf16.msra.mxu0 %v3436
    %3498 = vmatpush.bf16.msra.mxu0 %v3432
    %3499 = vmatpush.bf16.msra.mxu0 %v3428
    %3500 = vmatmul.bf16.gmra.mxu0 %v3331
    %v3501 = vpop.f32.mrf.mxu0
    %v3502 = vadd.f32 0.0, %v3501
    %v3503 = vpop.f32.mrf.mxu0
    %3504 = vdwg.mxu0
    %3505 = vmatpush.bf16.msra.mxu0 %v3457
    %3506 = vmatpush.bf16.msra.mxu0 %v3453
    %3507 = vmatpush.bf16.msra.mxu0 %v3449
    %3508 = vmatpush.bf16.msra.mxu0 %v3445
    %3509 = vmatpush.bf16.msra.mxu0 %v3441
    %3510 = vmatpush.bf16.msra.mxu0 %v3437
    %3511 = vmatpush.bf16.msra.mxu0 %v3433
    %3512 = vmatpush.bf16.msra.mxu0 %v3429
    %3513 = vmatmul.bf16.gmra.mxu0 %v3331
    %v3514 = vpop.f32.mrf.mxu0
    %v3515 = vadd.f32 0.0, %v3514
    %v3516 = vpop.f32.mrf.mxu0
    %3517 = vdwg.mxu0
    %3518 = vmatpush.bf16.msra.mxu0 %v3458
    %3519 = vmatpush.bf16.msra.mxu0 %v3454
    %3520 = vmatpush.bf16.msra.mxu0 %v3450
    %3521 = vmatpush.bf16.msra.mxu0 %v3446
    %3522 = vmatpush.bf16.msra.mxu0 %v3442
    %3523 = vmatpush.bf16.msra.mxu0 %v3438
    %3524 = vmatpush.bf16.msra.mxu0 %v3434
    %3525 = vmatpush.bf16.msra.mxu0 %v3430
    %3526 = vmatmul.bf16.gmra.mxu0 %v3331
    %v3527 = vpop.f32.mrf.mxu0
    %v3528 = vadd.f32 0.0, %v3527
    %v3529 = vpop.f32.mrf.mxu0
    %3530 = vdwg.mxu0
    %3531 = vmatpush.bf16.msra.mxu0 %v3459
    %3532 = vmatpush.bf16.msra.mxu0 %v3455
    %3533 = vmatpush.bf16.msra.mxu0 %v3451
    %3534 = vmatpush.bf16.msra.mxu0 %v3447
    %3535 = vmatpush.bf16.msra.mxu0 %v3443
    %3536 = vmatpush.bf16.msra.mxu0 %v3439
    %3537 = vmatpush.bf16.msra.mxu0 %v3435
    %3538 = vmatpush.bf16.msra.mxu0 %v3431
    %3539 = vmatmul.bf16.gmra.mxu0 %v3331
    %v3540 = vpop.f32.mrf.mxu0
    %v3541 = vadd.f32 0.0, %v3540
    %v3542 = vpop.f32.mrf.mxu0
    %3543 = vdwg.mxu0
    %v3560 = vunpack.c.l.b16 %v3315
    %v3561 = vunpack.c.l.b16 %v3316
    %v3562 = vunpack.c.l.b16 %v3317
    %v3563 = vunpack.c.l.b16 %v3318
    %v3564 = vunpack.c.l.b16 %v3319
    %v3565 = vunpack.c.l.b16 %v3320
    %v3566 = vunpack.c.l.b16 %v3321
    %v3567 = vunpack.c.l.b16 %v3322
    %v3568 = vunpack.c.l.b16 %v3323
    %v3569 = vunpack.c.l.b16 %v3324
    %v3570 = vunpack.c.l.b16 %v3325
    %v3571 = vunpack.c.l.b16 %v3326
    %v3572 = vunpack.c.l.b16 %v3327
    %v3573 = vunpack.c.l.b16 %v3328
    %v3574 = vunpack.c.l.b16 %v3329
    %v3575 = vunpack.c.l.b16 %v3330
    %vm3576 = vcmask 1041409
    %v3577 = vsel %vm3576, %v3568, %v3560
    %v3578 = vsel %vm3576, %v3569, %v3561
    %v3579 = vsel %vm3576, %v3570, %v3562
    %v3580 = vsel %vm3576, %v3571, %v3563
    %v3581 = vsel %vm3576, %v3572, %v3564
    %v3582 = vsel %vm3576, %v3573, %v3565
    %v3583 = vsel %vm3576, %v3574, %v3566
    %v3584 = vsel %vm3576, %v3575, %v3567
    %v3585 = vpack.c.b16 %v3577, %v3577
    %v3586 = vpack.c.b16 %v3578, %v3578
    %v3587 = vpack.c.b16 %v3579, %v3579
    %v3588 = vpack.c.b16 %v3580, %v3580
    %v3589 = vpack.c.b16 %v3581, %v3581
    %v3590 = vpack.c.b16 %v3582, %v3582
    %v3591 = vpack.c.b16 %v3583, %v3583
    %v3592 = vpack.c.b16 %v3584, %v3584
    %v3857 = vunpack.c.l.b16 %v2215
    %v3858 = vunpack.c.h.b16 %v2215
    %v3859 = vunpack.c.l.b16 %v2216
    %v3860 = vunpack.c.h.b16 %v2216
    %v3861 = vunpack.c.l.b16 %v2217
    %v3862 = vunpack.c.h.b16 %v2217
    %v3863 = vunpack.c.l.b16 %v2218
    %v3864 = vunpack.c.h.b16 %v2218
    %v3865 = vunpack.c.l.b16 %v2219
    %v3866 = vunpack.c.h.b16 %v2219
    %v3867 = vunpack.c.l.b16 %v2220
    %v3868 = vunpack.c.h.b16 %v2220
    %v3869 = vunpack.c.l.b16 %v2221
    %v3870 = vunpack.c.h.b16 %v2221
    %v3871 = vunpack.c.l.b16 %v2222
    %v3872 = vunpack.c.h.b16 %v2222
    %v3873 = vunpack.c.l.b16 %v2223
    %v3874 = vunpack.c.h.b16 %v2223
    %v3875 = vunpack.c.l.b16 %v2224
    %v3876 = vunpack.c.h.b16 %v2224
    %v3877 = vunpack.c.l.b16 %v2225
    %v3878 = vunpack.c.h.b16 %v2225
    %v3879 = vunpack.c.l.b16 %v2226
    %v3880 = vunpack.c.h.b16 %v2226
    %v3881 = vunpack.c.l.b16 %v2227
    %v3882 = vunpack.c.h.b16 %v2227
    %v3883 = vunpack.c.l.b16 %v2228
    %v3884 = vunpack.c.h.b16 %v2228
    %v3885 = vunpack.c.l.b16 %v2229
    %v3886 = vunpack.c.h.b16 %v2229
    %v3887 = vunpack.c.l.b16 %v2230
    %v3888 = vunpack.c.h.b16 %v2230
    %v3889 = vunpack.c.l.b16 %v2231
    %v3890 = vunpack.c.h.b16 %v2231
    %v3891 = vunpack.c.l.b16 %v2232
    %v3892 = vunpack.c.h.b16 %v2232
    %v3893 = vunpack.c.l.b16 %v2233
    %v3894 = vunpack.c.h.b16 %v2233
    %v3895 = vunpack.c.l.b16 %v2234
    %v3896 = vunpack.c.h.b16 %v2234
    %v3897 = vunpack.c.l.b16 %v2235
    %v3898 = vunpack.c.h.b16 %v2235
    %v3899 = vunpack.c.l.b16 %v2236
    %v3900 = vunpack.c.h.b16 %v2236
    %v3901 = vunpack.c.l.b16 %v2237
    %v3902 = vunpack.c.h.b16 %v2237
    %v3903 = vunpack.c.l.b16 %v2238
    %v3904 = vunpack.c.h.b16 %v2238
    %v3905 = vunpack.c.l.b16 %v2239
    %v3906 = vunpack.c.h.b16 %v2239
    %v3907 = vunpack.c.l.b16 %v2240
    %v3908 = vunpack.c.h.b16 %v2240
    %v3909 = vunpack.c.l.b16 %v2241
    %v3910 = vunpack.c.h.b16 %v2241
    %v3911 = vunpack.c.l.b16 %v2242
    %v3912 = vunpack.c.h.b16 %v2242
    %v3913 = vunpack.c.l.b16 %v2243
    %v3914 = vunpack.c.h.b16 %v2243
    %v3915 = vunpack.c.l.b16 %v2244
    %v3916 = vunpack.c.h.b16 %v2244
    %v3917 = vunpack.c.l.b16 %v2245
    %v3918 = vunpack.c.h.b16 %v2245
    %v3919 = vunpack.c.l.b16 %v2246
    %v3920 = vunpack.c.h.b16 %v2246
    %v3921 = vunpack.c.l.b16 %v2247
    %v3922 = vunpack.c.h.b16 %v2247
    %v3923 = vunpack.c.l.b16 %v2248
    %v3924 = vunpack.c.h.b16 %v2248
    %v3925 = vunpack.c.l.b16 %v2249
    %v3926 = vunpack.c.h.b16 %v2249
    %v3927 = vunpack.c.l.b16 %v2250
    %v3928 = vunpack.c.h.b16 %v2250
    %v3929 = vunpack.c.l.b16 %v2251
    %v3930 = vunpack.c.h.b16 %v2251
    %v3931 = vunpack.c.l.b16 %v2252
    %v3932 = vunpack.c.h.b16 %v2252
    %v3933 = vunpack.c.l.b16 %v2253
    %v3934 = vunpack.c.h.b16 %v2253
    %v3935 = vunpack.c.l.b16 %v2254
    %v3936 = vunpack.c.h.b16 %v2254
    %v3937 = vunpack.c.l.b16 %v2255
    %v3938 = vunpack.c.h.b16 %v2255
    %v3939 = vunpack.c.l.b16 %v2256
    %v3940 = vunpack.c.h.b16 %v2256
    %v3941 = vunpack.c.l.b16 %v2257
    %v3942 = vunpack.c.h.b16 %v2257
    %v3943 = vunpack.c.l.b16 %v2258
    %v3944 = vunpack.c.h.b16 %v2258
    %v3945 = vunpack.c.l.b16 %v2259
    %v3946 = vunpack.c.h.b16 %v2259
    %v3947 = vunpack.c.l.b16 %v2260
    %v3948 = vunpack.c.h.b16 %v2260
    %v3949 = vunpack.c.l.b16 %v2261
    %v3950 = vunpack.c.h.b16 %v2261
    %v3951 = vunpack.c.l.b16 %v2262
    %v3952 = vunpack.c.h.b16 %v2262
    %v3953 = vunpack.c.l.b16 %v2263
    %v3954 = vunpack.c.h.b16 %v2263
    %v3955 = vunpack.c.l.b16 %v2264
    %v3956 = vunpack.c.h.b16 %v2264
    %v3957 = vunpack.c.l.b16 %v2265
    %v3958 = vunpack.c.h.b16 %v2265
    %v3959 = vunpack.c.l.b16 %v2266
    %v3960 = vunpack.c.h.b16 %v2266
    %v3961 = vunpack.c.l.b16 %v2267
    %v3962 = vunpack.c.h.b16 %v2267
    %v3963 = vunpack.c.l.b16 %v2268
    %v3964 = vunpack.c.h.b16 %v2268
    %v3965 = vunpack.c.l.b16 %v2269
    %v3966 = vunpack.c.h.b16 %v2269
    %v3967 = vunpack.c.l.b16 %v2270
    %v3968 = vunpack.c.h.b16 %v2270
    %v3969 = vunpack.c.l.b16 %v2271
    %v3970 = vunpack.c.h.b16 %v2271
    %v3971 = vunpack.c.l.b16 %v2272
    %v3972 = vunpack.c.h.b16 %v2272
    %v3973 = vunpack.c.l.b16 %v2273
    %v3974 = vunpack.c.h.b16 %v2273
    %v3975 = vunpack.c.l.b16 %v2274
    %v3976 = vunpack.c.h.b16 %v2274
    %v3977 = vunpack.c.l.b16 %v2275
    %v3978 = vunpack.c.h.b16 %v2275
    %v3979 = vunpack.c.l.b16 %v2276
    %v3980 = vunpack.c.h.b16 %v2276
    %v3981 = vunpack.c.l.b16 %v2277
    %v3982 = vunpack.c.h.b16 %v2277
    %v3983 = vunpack.c.l.b16 %v2278
    %v3984 = vunpack.c.h.b16 %v2278
    %v3985 = vunpack.c.l.b16 %v2279
    %v3986 = vunpack.c.h.b16 %v2279
    %v3987 = vunpack.c.l.b16 %v2280
    %v3988 = vunpack.c.h.b16 %v2280
    %v3989 = vunpack.c.l.b16 %v2281
    %v3990 = vunpack.c.h.b16 %v2281
    %v3991 = vunpack.c.l.b16 %v2282
    %v3992 = vunpack.c.h.b16 %v2282
    %v3993 = vunpack.c.l.b16 %v2283
    %v3994 = vunpack.c.h.b16 %v2283
    %v3995 = vunpack.c.l.b16 %v2284
    %v3996 = vunpack.c.h.b16 %v2284
    %v3997 = vunpack.c.l.b16 %v2285
    %v3998 = vunpack.c.h.b16 %v2285
    %v3999 = vunpack.c.l.b16 %v2286
    %v4000 = vunpack.c.h.b16 %v2286
    %v4001 = vunpack.c.l.b16 %v2287
    %v4002 = vunpack.c.h.b16 %v2287
    %v4003 = vunpack.c.l.b16 %v2288
    %v4004 = vunpack.c.h.b16 %v2288
    %v4005 = vunpack.c.l.b16 %v2289
    %v4006 = vunpack.c.h.b16 %v2289
    %v4007 = vunpack.c.l.b16 %v2290
    %v4008 = vunpack.c.h.b16 %v2290
    %v4009 = vunpack.c.l.b16 %v2291
    %v4010 = vunpack.c.h.b16 %v2291
    %v4011 = vunpack.c.l.b16 %v2292
    %v4012 = vunpack.c.h.b16 %v2292
    %v4013 = vunpack.c.l.b16 %v2293
    %v4014 = vunpack.c.h.b16 %v2293
    %v4015 = vunpack.c.l.b16 %v2294
    %v4016 = vunpack.c.h.b16 %v2294
    %v4017 = vunpack.c.l.b16 %v2295
    %v4018 = vunpack.c.h.b16 %v2295
    %v4019 = vunpack.c.l.b16 %v2296
    %v4020 = vunpack.c.h.b16 %v2296
    %v4021 = vunpack.c.l.b16 %v2297
    %v4022 = vunpack.c.h.b16 %v2297
    %v4023 = vunpack.c.l.b16 %v2298
    %v4024 = vunpack.c.h.b16 %v2298
    %v4025 = vunpack.c.l.b16 %v2299
    %v4026 = vunpack.c.h.b16 %v2299
    %v4027 = vunpack.c.l.b16 %v2300
    %v4028 = vunpack.c.h.b16 %v2300
    %v4029 = vunpack.c.l.b16 %v2301
    %v4030 = vunpack.c.h.b16 %v2301
    %v4031 = vunpack.c.l.b16 %v2302
    %v4032 = vunpack.c.h.b16 %v2302
    %v4033 = vunpack.c.l.b16 %v2303
    %v4034 = vunpack.c.h.b16 %v2303
    %v4035 = vunpack.c.l.b16 %v2304
    %v4036 = vunpack.c.h.b16 %v2304
    %v4037 = vunpack.c.l.b16 %v2305
    %v4038 = vunpack.c.h.b16 %v2305
    %v4039 = vunpack.c.l.b16 %v2306
    %v4040 = vunpack.c.h.b16 %v2306
    %v4041 = vunpack.c.l.b16 %v2307
    %v4042 = vunpack.c.h.b16 %v2307
    %v4043 = vunpack.c.l.b16 %v2308
    %v4044 = vunpack.c.h.b16 %v2308
    %v4045 = vunpack.c.l.b16 %v2309
    %v4046 = vunpack.c.h.b16 %v2309
    %v4047 = vunpack.c.l.b16 %v2310
    %v4048 = vunpack.c.h.b16 %v2310
    %v4049 = vunpack.c.l.b16 %v2311
    %v4050 = vunpack.c.h.b16 %v2311
    %v4051 = vunpack.c.l.b16 %v2312
    %v4052 = vunpack.c.h.b16 %v2312
    %v4053 = vunpack.c.l.b16 %v2313
    %v4054 = vunpack.c.h.b16 %v2313
    %v4055 = vunpack.c.l.b16 %v2314
    %v4056 = vunpack.c.h.b16 %v2314
    %v4057 = vunpack.c.l.b16 %v2315
    %v4058 = vunpack.c.h.b16 %v2315
    %v4059 = vunpack.c.l.b16 %v2316
    %v4060 = vunpack.c.h.b16 %v2316
    %v4061 = vunpack.c.l.b16 %v2317
    %v4062 = vunpack.c.h.b16 %v2317
    %v4063 = vunpack.c.l.b16 %v2318
    %v4064 = vunpack.c.h.b16 %v2318
    %v4065 = vunpack.c.l.b16 %v2319
    %v4066 = vunpack.c.h.b16 %v2319
    %v4067 = vunpack.c.l.b16 %v2320
    %v4068 = vunpack.c.h.b16 %v2320
    %v4069 = vunpack.c.l.b16 %v2321
    %v4070 = vunpack.c.h.b16 %v2321
    %v4071 = vunpack.c.l.b16 %v2322
    %v4072 = vunpack.c.h.b16 %v2322
    %v4073 = vunpack.c.l.b16 %v2323
    %v4074 = vunpack.c.h.b16 %v2323
    %v4075 = vunpack.c.l.b16 %v2324
    %v4076 = vunpack.c.h.b16 %v2324
    %v4077 = vunpack.c.l.b16 %v2325
    %v4078 = vunpack.c.h.b16 %v2325
    %v4079 = vunpack.c.l.b16 %v2326
    %v4080 = vunpack.c.h.b16 %v2326
    %v4081 = vunpack.c.l.b16 %v2327
    %v4082 = vunpack.c.h.b16 %v2327
    %v4083 = vunpack.c.l.b16 %v2328
    %v4084 = vunpack.c.h.b16 %v2328
    %v4085 = vunpack.c.l.b16 %v2329
    %v4086 = vunpack.c.h.b16 %v2329
    %v4087 = vunpack.c.l.b16 %v2330
    %v4088 = vunpack.c.h.b16 %v2330
    %v4089 = vunpack.c.l.b16 %v2331
    %v4090 = vunpack.c.h.b16 %v2331
    %v4091 = vunpack.c.l.b16 %v2332
    %v4092 = vunpack.c.h.b16 %v2332
    %v4093 = vunpack.c.l.b16 %v2333
    %v4094 = vunpack.c.h.b16 %v2333
    %v4095 = vunpack.c.l.b16 %v2334
    %v4096 = vunpack.c.h.b16 %v2334
    %v4097 = vunpack.c.l.b16 %v2335
    %v4098 = vunpack.c.h.b16 %v2335
    %v4099 = vunpack.c.l.b16 %v2336
    %v4100 = vunpack.c.h.b16 %v2336
    %v4101 = vunpack.c.l.b16 %v2337
    %v4102 = vunpack.c.h.b16 %v2337
    %v4103 = vunpack.c.l.b16 %v2338
    %v4104 = vunpack.c.h.b16 %v2338
    %v4105 = vunpack.c.l.b16 %v2339
    %v4106 = vunpack.c.h.b16 %v2339
    %v4107 = vunpack.c.l.b16 %v2340
    %v4108 = vunpack.c.h.b16 %v2340
    %v4109 = vunpack.c.l.b16 %v2341
    %v4110 = vunpack.c.h.b16 %v2341
    %v4111 = vunpack.c.l.b16 %v2342
    %v4112 = vunpack.c.h.b16 %v2342
    %v4113 = vunpack.c.l.b16 %v2343
    %v4114 = vunpack.c.h.b16 %v2343
    %v4115 = vunpack.c.l.b16 %v2344
    %v4116 = vunpack.c.h.b16 %v2344
    %v4117 = vunpack.c.l.b16 %v2345
    %v4118 = vunpack.c.h.b16 %v2345
    %v4119 = vunpack.c.l.b16 %v2346
    %v4120 = vunpack.c.h.b16 %v2346
    %v4121 = vunpack.c.l.b16 %v2347
    %v4122 = vunpack.c.h.b16 %v2347
    %v4123 = vunpack.c.l.b16 %v2348
    %v4124 = vunpack.c.h.b16 %v2348
    %v4125 = vunpack.c.l.b16 %v2349
    %v4126 = vunpack.c.h.b16 %v2349
    %v4127 = vunpack.c.l.b16 %v2350
    %v4128 = vunpack.c.h.b16 %v2350
    %v4129 = vunpack.c.l.b16 %v2351
    %v4130 = vunpack.c.h.b16 %v2351
    %v4131 = vunpack.c.l.b16 %v2352
    %v4132 = vunpack.c.h.b16 %v2352
    %v4133 = vunpack.c.l.b16 %v2353
    %v4134 = vunpack.c.h.b16 %v2353
    %v4135 = vunpack.c.l.b16 %v2354
    %v4136 = vunpack.c.h.b16 %v2354
    %v4137 = vunpack.c.l.b16 %v2355
    %v4138 = vunpack.c.h.b16 %v2355
    %v4139 = vunpack.c.l.b16 %v2356
    %v4140 = vunpack.c.h.b16 %v2356
    %v4141 = vunpack.c.l.b16 %v2357
    %v4142 = vunpack.c.h.b16 %v2357
    %v4143 = vunpack.c.l.b16 %v2358
    %v4144 = vunpack.c.h.b16 %v2358
    %v4145 = vunpack.c.l.b16 %v2359
    %v4146 = vunpack.c.h.b16 %v2359
    %v4147 = vunpack.c.l.b16 %v2360
    %v4148 = vunpack.c.h.b16 %v2360
    %v4149 = vunpack.c.l.b16 %v2361
    %v4150 = vunpack.c.h.b16 %v2361
    %v4151 = vunpack.c.l.b16 %v2362
    %v4152 = vunpack.c.h.b16 %v2362
    %v4153 = vunpack.c.l.b16 %v2363
    %v4154 = vunpack.c.h.b16 %v2363
    %v4155 = vunpack.c.l.b16 %v2364
    %v4156 = vunpack.c.h.b16 %v2364
    %v4157 = vunpack.c.l.b16 %v2365
    %v4158 = vunpack.c.h.b16 %v2365
    %v4159 = vunpack.c.l.b16 %v2366
    %v4160 = vunpack.c.h.b16 %v2366
    %v4161 = vunpack.c.l.b16 %v2367
    %v4162 = vunpack.c.h.b16 %v2367
    %v4163 = vunpack.c.l.b16 %v2368
    %v4164 = vunpack.c.h.b16 %v2368
    %v4165 = vunpack.c.l.b16 %v2369
    %v4166 = vunpack.c.h.b16 %v2369
    %v4167 = vunpack.c.l.b16 %v2370
    %v4168 = vunpack.c.h.b16 %v2370
    %v4169 = vunpack.c.l.b16 %v2371
    %v4170 = vunpack.c.h.b16 %v2371
    %v4171 = vunpack.c.l.b16 %v2372
    %v4172 = vunpack.c.h.b16 %v2372
    %v4173 = vunpack.c.l.b16 %v2373
    %v4174 = vunpack.c.h.b16 %v2373
    %v4175 = vunpack.c.l.b16 %v2374
    %v4176 = vunpack.c.h.b16 %v2374
    %v4177 = vunpack.c.l.b16 %v2375
    %v4178 = vunpack.c.h.b16 %v2375
    %v4179 = vunpack.c.l.b16 %v2376
    %v4180 = vunpack.c.h.b16 %v2376
    %v4181 = vunpack.c.l.b16 %v2377
    %v4182 = vunpack.c.h.b16 %v2377
    %v4183 = vunpack.c.l.b16 %v2378
    %v4184 = vunpack.c.h.b16 %v2378
    %v4185 = vunpack.c.l.b16 %v2379
    %v4186 = vunpack.c.h.b16 %v2379
    %v4187 = vunpack.c.l.b16 %v2380
    %v4188 = vunpack.c.h.b16 %v2380
    %v4189 = vunpack.c.l.b16 %v2381
    %v4190 = vunpack.c.h.b16 %v2381
    %v4191 = vunpack.c.l.b16 %v2382
    %v4192 = vunpack.c.h.b16 %v2382
    %v4193 = vunpack.c.l.b16 %v2383
    %v4194 = vunpack.c.h.b16 %v2383
    %v4195 = vunpack.c.l.b16 %v2384
    %v4196 = vunpack.c.h.b16 %v2384
    %v4197 = vunpack.c.l.b16 %v2385
    %v4198 = vunpack.c.h.b16 %v2385
    %v4199 = vunpack.c.l.b16 %v2386
    %v4200 = vunpack.c.h.b16 %v2386
    %v4201 = vunpack.c.l.b16 %v2387
    %v4202 = vunpack.c.h.b16 %v2387
    %v4203 = vunpack.c.l.b16 %v2388
    %v4204 = vunpack.c.h.b16 %v2388
    %v4205 = vunpack.c.l.b16 %v2389
    %v4206 = vunpack.c.h.b16 %v2389
    %v4207 = vunpack.c.l.b16 %v2390
    %v4208 = vunpack.c.h.b16 %v2390
    %v4209 = vunpack.c.l.b16 %v2391
    %v4210 = vunpack.c.h.b16 %v2391
    %v4211 = vunpack.c.l.b16 %v2392
    %v4212 = vunpack.c.h.b16 %v2392
    %v4213 = vunpack.c.l.b16 %v2393
    %v4214 = vunpack.c.h.b16 %v2393
    %v4215 = vunpack.c.l.b16 %v2394
    %v4216 = vunpack.c.h.b16 %v2394
    %v4217 = vunpack.c.l.b16 %v2395
    %v4218 = vunpack.c.h.b16 %v2395
    %v4219 = vunpack.c.l.b16 %v2396
    %v4220 = vunpack.c.h.b16 %v2396
    %v4221 = vunpack.c.l.b16 %v2397
    %v4222 = vunpack.c.h.b16 %v2397
    %v4223 = vunpack.c.l.b16 %v2398
    %v4224 = vunpack.c.h.b16 %v2398
    %v4225 = vunpack.c.l.b16 %v2399
    %v4226 = vunpack.c.h.b16 %v2399
    %v4227 = vunpack.c.l.b16 %v2400
    %v4228 = vunpack.c.h.b16 %v2400
    %v4229 = vunpack.c.l.b16 %v2401
    %v4230 = vunpack.c.h.b16 %v2401
    %v4231 = vunpack.c.l.b16 %v2402
    %v4232 = vunpack.c.h.b16 %v2402
    %v4233 = vunpack.c.l.b16 %v2403
    %v4234 = vunpack.c.h.b16 %v2403
    %v4235 = vunpack.c.l.b16 %v2404
    %v4236 = vunpack.c.h.b16 %v2404
    %v4237 = vunpack.c.l.b16 %v2405
    %v4238 = vunpack.c.h.b16 %v2405
    %v4239 = vunpack.c.l.b16 %v2406
    %v4240 = vunpack.c.h.b16 %v2406
    %v4241 = vunpack.c.l.b16 %v2407
    %v4242 = vunpack.c.h.b16 %v2407
    %v4243 = vunpack.c.l.b16 %v2408
    %v4244 = vunpack.c.h.b16 %v2408
    %v4245 = vunpack.c.l.b16 %v2409
    %v4246 = vunpack.c.h.b16 %v2409
    %v4247 = vunpack.c.l.b16 %v2410
    %v4248 = vunpack.c.h.b16 %v2410
    %v4249 = vunpack.c.l.b16 %v2411
    %v4250 = vunpack.c.h.b16 %v2411
    %v4251 = vunpack.c.l.b16 %v2412
    %v4252 = vunpack.c.h.b16 %v2412
    %v4253 = vunpack.c.l.b16 %v2413
    %v4254 = vunpack.c.h.b16 %v2413
    %v4255 = vunpack.c.l.b16 %v2414
    %v4256 = vunpack.c.h.b16 %v2414
    %v4257 = vunpack.c.l.b16 %v2415
    %v4258 = vunpack.c.h.b16 %v2415
    %v4259 = vunpack.c.l.b16 %v2416
    %v4260 = vunpack.c.h.b16 %v2416
    %v4261 = vunpack.c.l.b16 %v2417
    %v4262 = vunpack.c.h.b16 %v2417
    %v4263 = vunpack.c.l.b16 %v2418
    %v4264 = vunpack.c.h.b16 %v2418
    %v4265 = vunpack.c.l.b16 %v2419
    %v4266 = vunpack.c.h.b16 %v2419
    %v4267 = vunpack.c.l.b16 %v2420
    %v4268 = vunpack.c.h.b16 %v2420
    %v4269 = vunpack.c.l.b16 %v2421
    %v4270 = vunpack.c.h.b16 %v2421
    %v4271 = vunpack.c.l.b16 %v2422
    %v4272 = vunpack.c.h.b16 %v2422
    %v4273 = vunpack.c.l.b16 %v2423
    %v4274 = vunpack.c.h.b16 %v2423
    %v4275 = vunpack.c.l.b16 %v2424
    %v4276 = vunpack.c.h.b16 %v2424
    %v4277 = vunpack.c.l.b16 %v2425
    %v4278 = vunpack.c.h.b16 %v2425
    %v4279 = vunpack.c.l.b16 %v2426
    %v4280 = vunpack.c.h.b16 %v2426
    %v4281 = vunpack.c.l.b16 %v2427
    %v4282 = vunpack.c.h.b16 %v2427
    %v4283 = vunpack.c.l.b16 %v2428
    %v4284 = vunpack.c.h.b16 %v2428
    %v4285 = vunpack.c.l.b16 %v2429
    %v4286 = vunpack.c.h.b16 %v2429
    %v4287 = vunpack.c.l.b16 %v2430
    %v4288 = vunpack.c.h.b16 %v2430
    %v4289 = vunpack.c.l.b16 %v2431
    %v4290 = vunpack.c.h.b16 %v2431
    %v4291 = vunpack.c.l.b16 %v2432
    %v4292 = vunpack.c.h.b16 %v2432
    %v4293 = vunpack.c.l.b16 %v2433
    %v4294 = vunpack.c.h.b16 %v2433
    %v4295 = vunpack.c.l.b16 %v2434
    %v4296 = vunpack.c.h.b16 %v2434
    %v4297 = vunpack.c.l.b16 %v2435
    %v4298 = vunpack.c.h.b16 %v2435
    %v4299 = vunpack.c.l.b16 %v2436
    %v4300 = vunpack.c.h.b16 %v2436
    %v4301 = vunpack.c.l.b16 %v2437
    %v4302 = vunpack.c.h.b16 %v2437
    %v4303 = vunpack.c.l.b16 %v2438
    %v4304 = vunpack.c.h.b16 %v2438
    %v4305 = vunpack.c.l.b16 %v2439
    %v4306 = vunpack.c.h.b16 %v2439
    %v4307 = vunpack.c.l.b16 %v2440
    %v4308 = vunpack.c.h.b16 %v2440
    %v4309 = vunpack.c.l.b16 %v2441
    %v4310 = vunpack.c.h.b16 %v2441
    %v4311 = vunpack.c.l.b16 %v2442
    %v4312 = vunpack.c.h.b16 %v2442
    %v4313 = vunpack.c.l.b16 %v2443
    %v4314 = vunpack.c.h.b16 %v2443
    %v4315 = vunpack.c.l.b16 %v2444
    %v4316 = vunpack.c.h.b16 %v2444
    %v4317 = vunpack.c.l.b16 %v2445
    %v4318 = vunpack.c.h.b16 %v2445
    %v4319 = vunpack.c.l.b16 %v2446
    %v4320 = vunpack.c.h.b16 %v2446
    %v4321 = vunpack.c.l.b16 %v2447
    %v4322 = vunpack.c.h.b16 %v2447
    %v4323 = vunpack.c.l.b16 %v2448
    %v4324 = vunpack.c.h.b16 %v2448
    %v4325 = vunpack.c.l.b16 %v2449
    %v4326 = vunpack.c.h.b16 %v2449
    %v4327 = vunpack.c.l.b16 %v2450
    %v4328 = vunpack.c.h.b16 %v2450
    %v4329 = vunpack.c.l.b16 %v2451
    %v4330 = vunpack.c.h.b16 %v2451
    %v4331 = vunpack.c.l.b16 %v2452
    %v4332 = vunpack.c.h.b16 %v2452
    %v4333 = vunpack.c.l.b16 %v2453
    %v4334 = vunpack.c.h.b16 %v2453
    %v4335 = vunpack.c.l.b16 %v2454
    %v4336 = vunpack.c.h.b16 %v2454
    %v4337 = vunpack.c.l.b16 %v2455
    %v4338 = vunpack.c.h.b16 %v2455
    %v4339 = vunpack.c.l.b16 %v2456
    %v4340 = vunpack.c.h.b16 %v2456
    %v4341 = vunpack.c.l.b16 %v2457
    %v4342 = vunpack.c.h.b16 %v2457
    %v4343 = vunpack.c.l.b16 %v2458
    %v4344 = vunpack.c.h.b16 %v2458
    %v4345 = vunpack.c.l.b16 %v2459
    %v4346 = vunpack.c.h.b16 %v2459
    %v4347 = vunpack.c.l.b16 %v2460
    %v4348 = vunpack.c.h.b16 %v2460
    %v4349 = vunpack.c.l.b16 %v2461
    %v4350 = vunpack.c.h.b16 %v2461
    %v4351 = vunpack.c.l.b16 %v2462
    %v4352 = vunpack.c.h.b16 %v2462
    %v4353 = vunpack.c.l.b16 %v2463
    %v4354 = vunpack.c.h.b16 %v2463
    %v4355 = vunpack.c.l.b16 %v2464
    %v4356 = vunpack.c.h.b16 %v2464
    %v4357 = vunpack.c.l.b16 %v2465
    %v4358 = vunpack.c.h.b16 %v2465
    %v4359 = vunpack.c.l.b16 %v2466
    %v4360 = vunpack.c.h.b16 %v2466
    %v4361 = vunpack.c.l.b16 %v2467
    %v4362 = vunpack.c.h.b16 %v2467
    %v4363 = vunpack.c.l.b16 %v2468
    %v4364 = vunpack.c.h.b16 %v2468
    %v4365 = vunpack.c.l.b16 %v2469
    %v4366 = vunpack.c.h.b16 %v2469
    %v4367 = vunpack.c.l.b16 %v2470
    %v4368 = vunpack.c.h.b16 %v2470
    %v4369 = vpack.c.b16 %v3861, %v3857
    %v4370 = vpack.c.b16 %v3862, %v3858
    %v4371 = vpack.c.b16 %v3863, %v3859
    %v4372 = vpack.c.b16 %v3864, %v3860
    %v4373 = vpack.c.b16 %v3869, %v3865
    %v4374 = vpack.c.b16 %v3870, %v3866
    %v4375 = vpack.c.b16 %v3871, %v3867
    %v4376 = vpack.c.b16 %v3872, %v3868
    %v4377 = vpack.c.b16 %v3877, %v3873
    %v4378 = vpack.c.b16 %v3878, %v3874
    %v4379 = vpack.c.b16 %v3879, %v3875
    %v4380 = vpack.c.b16 %v3880, %v3876
    %v4381 = vpack.c.b16 %v3885, %v3881
    %v4382 = vpack.c.b16 %v3886, %v3882
    %v4383 = vpack.c.b16 %v3887, %v3883
    %v4384 = vpack.c.b16 %v3888, %v3884
    %v4385 = vpack.c.b16 %v3893, %v3889
    %v4386 = vpack.c.b16 %v3894, %v3890
    %v4387 = vpack.c.b16 %v3895, %v3891
    %v4388 = vpack.c.b16 %v3896, %v3892
    %v4389 = vpack.c.b16 %v3901, %v3897
    %v4390 = vpack.c.b16 %v3902, %v3898
    %v4391 = vpack.c.b16 %v3903, %v3899
    %v4392 = vpack.c.b16 %v3904, %v3900
    %v4393 = vpack.c.b16 %v3909, %v3905
    %v4394 = vpack.c.b16 %v3910, %v3906
    %v4395 = vpack.c.b16 %v3911, %v3907
    %v4396 = vpack.c.b16 %v3912, %v3908
    %v4397 = vpack.c.b16 %v3917, %v3913
    %v4398 = vpack.c.b16 %v3918, %v3914
    %v4399 = vpack.c.b16 %v3919, %v3915
    %v4400 = vpack.c.b16 %v3920, %v3916
    %v4401 = vpack.c.b16 %v3925, %v3921
    %v4402 = vpack.c.b16 %v3926, %v3922
    %v4403 = vpack.c.b16 %v3927, %v3923
    %v4404 = vpack.c.b16 %v3928, %v3924
    %v4405 = vpack.c.b16 %v3933, %v3929
    %v4406 = vpack.c.b16 %v3934, %v3930
    %v4407 = vpack.c.b16 %v3935, %v3931
    %v4408 = vpack.c.b16 %v3936, %v3932
    %v4409 = vpack.c.b16 %v3941, %v3937
    %v4410 = vpack.c.b16 %v3942, %v3938
    %v4411 = vpack.c.b16 %v3943, %v3939
    %v4412 = vpack.c.b16 %v3944, %v3940
    %v4413 = vpack.c.b16 %v3949, %v3945
    %v4414 = vpack.c.b16 %v3950, %v3946
    %v4415 = vpack.c.b16 %v3951, %v3947
    %v4416 = vpack.c.b16 %v3952, %v3948
    %v4417 = vpack.c.b16 %v3957, %v3953
    %v4418 = vpack.c.b16 %v3958, %v3954
    %v4419 = vpack.c.b16 %v3959, %v3955
    %v4420 = vpack.c.b16 %v3960, %v3956
    %v4421 = vpack.c.b16 %v3965, %v3961
    %v4422 = vpack.c.b16 %v3966, %v3962
    %v4423 = vpack.c.b16 %v3967, %v3963
    %v4424 = vpack.c.b16 %v3968, %v3964
    %v4425 = vpack.c.b16 %v3973, %v3969
    %v4426 = vpack.c.b16 %v3974, %v3970
    %v4427 = vpack.c.b16 %v3975, %v3971
    %v4428 = vpack.c.b16 %v3976, %v3972
    %v4429 = vpack.c.b16 %v3981, %v3977
    %v4430 = vpack.c.b16 %v3982, %v3978
    %v4431 = vpack.c.b16 %v3983, %v3979
    %v4432 = vpack.c.b16 %v3984, %v3980
    %v4433 = vpack.c.b16 %v3989, %v3985
    %v4434 = vpack.c.b16 %v3990, %v3986
    %v4435 = vpack.c.b16 %v3991, %v3987
    %v4436 = vpack.c.b16 %v3992, %v3988
    %v4437 = vpack.c.b16 %v3997, %v3993
    %v4438 = vpack.c.b16 %v3998, %v3994
    %v4439 = vpack.c.b16 %v3999, %v3995
    %v4440 = vpack.c.b16 %v4000, %v3996
    %v4441 = vpack.c.b16 %v4005, %v4001
    %v4442 = vpack.c.b16 %v4006, %v4002
    %v4443 = vpack.c.b16 %v4007, %v4003
    %v4444 = vpack.c.b16 %v4008, %v4004
    %v4445 = vpack.c.b16 %v4013, %v4009
    %v4446 = vpack.c.b16 %v4014, %v4010
    %v4447 = vpack.c.b16 %v4015, %v4011
    %v4448 = vpack.c.b16 %v4016, %v4012
    %v4449 = vpack.c.b16 %v4021, %v4017
    %v4450 = vpack.c.b16 %v4022, %v4018
    %v4451 = vpack.c.b16 %v4023, %v4019
    %v4452 = vpack.c.b16 %v4024, %v4020
    %v4453 = vpack.c.b16 %v4029, %v4025
    %v4454 = vpack.c.b16 %v4030, %v4026
    %v4455 = vpack.c.b16 %v4031, %v4027
    %v4456 = vpack.c.b16 %v4032, %v4028
    %v4457 = vpack.c.b16 %v4037, %v4033
    %v4458 = vpack.c.b16 %v4038, %v4034
    %v4459 = vpack.c.b16 %v4039, %v4035
    %v4460 = vpack.c.b16 %v4040, %v4036
    %v4461 = vpack.c.b16 %v4045, %v4041
    %v4462 = vpack.c.b16 %v4046, %v4042
    %v4463 = vpack.c.b16 %v4047, %v4043
    %v4464 = vpack.c.b16 %v4048, %v4044
    %v4465 = vpack.c.b16 %v4053, %v4049
    %v4466 = vpack.c.b16 %v4054, %v4050
    %v4467 = vpack.c.b16 %v4055, %v4051
    %v4468 = vpack.c.b16 %v4056, %v4052
    %v4469 = vpack.c.b16 %v4061, %v4057
    %v4470 = vpack.c.b16 %v4062, %v4058
    %v4471 = vpack.c.b16 %v4063, %v4059
    %v4472 = vpack.c.b16 %v4064, %v4060
    %v4473 = vpack.c.b16 %v4069, %v4065
    %v4474 = vpack.c.b16 %v4070, %v4066
    %v4475 = vpack.c.b16 %v4071, %v4067
    %v4476 = vpack.c.b16 %v4072, %v4068
    %v4477 = vpack.c.b16 %v4077, %v4073
    %v4478 = vpack.c.b16 %v4078, %v4074
    %v4479 = vpack.c.b16 %v4079, %v4075
    %v4480 = vpack.c.b16 %v4080, %v4076
    %v4481 = vpack.c.b16 %v4085, %v4081
    %v4482 = vpack.c.b16 %v4086, %v4082
    %v4483 = vpack.c.b16 %v4087, %v4083
    %v4484 = vpack.c.b16 %v4088, %v4084
    %v4485 = vpack.c.b16 %v4093, %v4089
    %v4486 = vpack.c.b16 %v4094, %v4090
    %v4487 = vpack.c.b16 %v4095, %v4091
    %v4488 = vpack.c.b16 %v4096, %v4092
    %v4489 = vpack.c.b16 %v4101, %v4097
    %v4490 = vpack.c.b16 %v4102, %v4098
    %v4491 = vpack.c.b16 %v4103, %v4099
    %v4492 = vpack.c.b16 %v4104, %v4100
    %v4493 = vpack.c.b16 %v4109, %v4105
    %v4494 = vpack.c.b16 %v4110, %v4106
    %v4495 = vpack.c.b16 %v4111, %v4107
    %v4496 = vpack.c.b16 %v4112, %v4108
    %v4497 = vpack.c.b16 %v4117, %v4113
    %v4498 = vpack.c.b16 %v4118, %v4114
    %v4499 = vpack.c.b16 %v4119, %v4115
    %v4500 = vpack.c.b16 %v4120, %v4116
    %v4501 = vpack.c.b16 %v4125, %v4121
    %v4502 = vpack.c.b16 %v4126, %v4122
    %v4503 = vpack.c.b16 %v4127, %v4123
    %v4504 = vpack.c.b16 %v4128, %v4124
    %v4505 = vpack.c.b16 %v4133, %v4129
    %v4506 = vpack.c.b16 %v4134, %v4130
    %v4507 = vpack.c.b16 %v4135, %v4131
    %v4508 = vpack.c.b16 %v4136, %v4132
    %v4509 = vpack.c.b16 %v4141, %v4137
    %v4510 = vpack.c.b16 %v4142, %v4138
    %v4511 = vpack.c.b16 %v4143, %v4139
    %v4512 = vpack.c.b16 %v4144, %v4140
    %v4513 = vpack.c.b16 %v4149, %v4145
    %v4514 = vpack.c.b16 %v4150, %v4146
    %v4515 = vpack.c.b16 %v4151, %v4147
    %v4516 = vpack.c.b16 %v4152, %v4148
    %v4517 = vpack.c.b16 %v4157, %v4153
    %v4518 = vpack.c.b16 %v4158, %v4154
    %v4519 = vpack.c.b16 %v4159, %v4155
    %v4520 = vpack.c.b16 %v4160, %v4156
    %v4521 = vpack.c.b16 %v4165, %v4161
    %v4522 = vpack.c.b16 %v4166, %v4162
    %v4523 = vpack.c.b16 %v4167, %v4163
    %v4524 = vpack.c.b16 %v4168, %v4164
    %v4525 = vpack.c.b16 %v4173, %v4169
    %v4526 = vpack.c.b16 %v4174, %v4170
    %v4527 = vpack.c.b16 %v4175, %v4171
    %v4528 = vpack.c.b16 %v4176, %v4172
    %v4529 = vpack.c.b16 %v4181, %v4177
    %v4530 = vpack.c.b16 %v4182, %v4178
    %v4531 = vpack.c.b16 %v4183, %v4179
    %v4532 = vpack.c.b16 %v4184, %v4180
    %v4533 = vpack.c.b16 %v4189, %v4185
    %v4534 = vpack.c.b16 %v4190, %v4186
    %v4535 = vpack.c.b16 %v4191, %v4187
    %v4536 = vpack.c.b16 %v4192, %v4188
    %v4537 = vpack.c.b16 %v4197, %v4193
    %v4538 = vpack.c.b16 %v4198, %v4194
    %v4539 = vpack.c.b16 %v4199, %v4195
    %v4540 = vpack.c.b16 %v4200, %v4196
    %v4541 = vpack.c.b16 %v4205, %v4201
    %v4542 = vpack.c.b16 %v4206, %v4202
    %v4543 = vpack.c.b16 %v4207, %v4203
    %v4544 = vpack.c.b16 %v4208, %v4204
    %v4545 = vpack.c.b16 %v4213, %v4209
    %v4546 = vpack.c.b16 %v4214, %v4210
    %v4547 = vpack.c.b16 %v4215, %v4211
    %v4548 = vpack.c.b16 %v4216, %v4212
    %v4549 = vpack.c.b16 %v4221, %v4217
    %v4550 = vpack.c.b16 %v4222, %v4218
    %v4551 = vpack.c.b16 %v4223, %v4219
    %v4552 = vpack.c.b16 %v4224, %v4220
    %v4553 = vpack.c.b16 %v4229, %v4225
    %v4554 = vpack.c.b16 %v4230, %v4226
    %v4555 = vpack.c.b16 %v4231, %v4227
    %v4556 = vpack.c.b16 %v4232, %v4228
    %v4557 = vpack.c.b16 %v4237, %v4233
    %v4558 = vpack.c.b16 %v4238, %v4234
    %v4559 = vpack.c.b16 %v4239, %v4235
    %v4560 = vpack.c.b16 %v4240, %v4236
    %v4561 = vpack.c.b16 %v4245, %v4241
    %v4562 = vpack.c.b16 %v4246, %v4242
    %v4563 = vpack.c.b16 %v4247, %v4243
    %v4564 = vpack.c.b16 %v4248, %v4244
    %v4565 = vpack.c.b16 %v4253, %v4249
    %v4566 = vpack.c.b16 %v4254, %v4250
    %v4567 = vpack.c.b16 %v4255, %v4251
    %v4568 = vpack.c.b16 %v4256, %v4252
    %v4569 = vpack.c.b16 %v4261, %v4257
    %v4570 = vpack.c.b16 %v4262, %v4258
    %v4571 = vpack.c.b16 %v4263, %v4259
    %v4572 = vpack.c.b16 %v4264, %v4260
    %v4573 = vpack.c.b16 %v4269, %v4265
    %v4574 = vpack.c.b16 %v4270, %v4266
    %v4575 = vpack.c.b16 %v4271, %v4267
    %v4576 = vpack.c.b16 %v4272, %v4268
    %v4577 = vpack.c.b16 %v4277, %v4273
    %v4578 = vpack.c.b16 %v4278, %v4274
    %v4579 = vpack.c.b16 %v4279, %v4275
    %v4580 = vpack.c.b16 %v4280, %v4276
    %v4581 = vpack.c.b16 %v4285, %v4281
    %v4582 = vpack.c.b16 %v4286, %v4282
    %v4583 = vpack.c.b16 %v4287, %v4283
    %v4584 = vpack.c.b16 %v4288, %v4284
    %v4585 = vpack.c.b16 %v4293, %v4289
    %v4586 = vpack.c.b16 %v4294, %v4290
    %v4587 = vpack.c.b16 %v4295, %v4291
    %v4588 = vpack.c.b16 %v4296, %v4292
    %v4589 = vpack.c.b16 %v4301, %v4297
    %v4590 = vpack.c.b16 %v4302, %v4298
    %v4591 = vpack.c.b16 %v4303, %v4299
    %v4592 = vpack.c.b16 %v4304, %v4300
    %v4593 = vpack.c.b16 %v4309, %v4305
    %v4594 = vpack.c.b16 %v4310, %v4306
    %v4595 = vpack.c.b16 %v4311, %v4307
    %v4596 = vpack.c.b16 %v4312, %v4308
    %v4597 = vpack.c.b16 %v4317, %v4313
    %v4598 = vpack.c.b16 %v4318, %v4314
    %v4599 = vpack.c.b16 %v4319, %v4315
    %v4600 = vpack.c.b16 %v4320, %v4316
    %v4601 = vpack.c.b16 %v4325, %v4321
    %v4602 = vpack.c.b16 %v4326, %v4322
    %v4603 = vpack.c.b16 %v4327, %v4323
    %v4604 = vpack.c.b16 %v4328, %v4324
    %v4605 = vpack.c.b16 %v4333, %v4329
    %v4606 = vpack.c.b16 %v4334, %v4330
    %v4607 = vpack.c.b16 %v4335, %v4331
    %v4608 = vpack.c.b16 %v4336, %v4332
    %v4609 = vpack.c.b16 %v4341, %v4337
    %v4610 = vpack.c.b16 %v4342, %v4338
    %v4611 = vpack.c.b16 %v4343, %v4339
    %v4612 = vpack.c.b16 %v4344, %v4340
    %v4613 = vpack.c.b16 %v4349, %v4345
    %v4614 = vpack.c.b16 %v4350, %v4346
    %v4615 = vpack.c.b16 %v4351, %v4347
    %v4616 = vpack.c.b16 %v4352, %v4348
    %v4617 = vpack.c.b16 %v4357, %v4353
    %v4618 = vpack.c.b16 %v4358, %v4354
    %v4619 = vpack.c.b16 %v4359, %v4355
    %v4620 = vpack.c.b16 %v4360, %v4356
    %v4621 = vpack.c.b16 %v4365, %v4361
    %v4622 = vpack.c.b16 %v4366, %v4362
    %v4623 = vpack.c.b16 %v4367, %v4363
    %v4624 = vpack.c.b16 %v4368, %v4364
    %4881 = vmatpush.bf16.msra.mxu0 %v4397
    %4882 = vmatpush.bf16.msra.mxu0 %v4393
    %4883 = vmatpush.bf16.msra.mxu0 %v4389
    %4884 = vmatpush.bf16.msra.mxu0 %v4385
    %4885 = vmatpush.bf16.msra.mxu0 %v4381
    %4886 = vmatpush.bf16.msra.mxu0 %v4377
    %4887 = vmatpush.bf16.msra.mxu0 %v4373
    %4888 = vmatpush.bf16.msra.mxu0 %v4369
    %4889 = vmatmul.bf16.gmra.mxu0 %v3585
    %v4890 = vpop.f32.mrf.mxu0
    %v4891 = vadd.f32 %v3502, %v4890
    %v4892 = vpop.f32.mrf.mxu0
    %4893 = vdwg.mxu0
    %4894 = vmatpush.bf16.msra.mxu0 %v4429
    %4895 = vmatpush.bf16.msra.mxu0 %v4425
    %4896 = vmatpush.bf16.msra.mxu0 %v4421
    %4897 = vmatpush.bf16.msra.mxu0 %v4417
    %4898 = vmatpush.bf16.msra.mxu0 %v4413
    %4899 = vmatpush.bf16.msra.mxu0 %v4409
    %4900 = vmatpush.bf16.msra.mxu0 %v4405
    %4901 = vmatpush.bf16.msra.mxu0 %v4401
    %4902 = vmatmul.bf16.gmra.mxu0 %v3586
    %v4903 = vpop.f32.mrf.mxu0
    %v4904 = vadd.f32 %v4891, %v4903
    %v4905 = vpop.f32.mrf.mxu0
    %4906 = vdwg.mxu0
    %4907 = vmatpush.bf16.msra.mxu0 %v4461
    %4908 = vmatpush.bf16.msra.mxu0 %v4457
    %4909 = vmatpush.bf16.msra.mxu0 %v4453
    %4910 = vmatpush.bf16.msra.mxu0 %v4449
    %4911 = vmatpush.bf16.msra.mxu0 %v4445
    %4912 = vmatpush.bf16.msra.mxu0 %v4441
    %4913 = vmatpush.bf16.msra.mxu0 %v4437
    %4914 = vmatpush.bf16.msra.mxu0 %v4433
    %4915 = vmatmul.bf16.gmra.mxu0 %v3587
    %v4916 = vpop.f32.mrf.mxu0
    %v4917 = vadd.f32 %v4904, %v4916
    %v4918 = vpop.f32.mrf.mxu0
    %4919 = vdwg.mxu0
    %4920 = vmatpush.bf16.msra.mxu0 %v4493
    %4921 = vmatpush.bf16.msra.mxu0 %v4489
    %4922 = vmatpush.bf16.msra.mxu0 %v4485
    %4923 = vmatpush.bf16.msra.mxu0 %v4481
    %4924 = vmatpush.bf16.msra.mxu0 %v4477
    %4925 = vmatpush.bf16.msra.mxu0 %v4473
    %4926 = vmatpush.bf16.msra.mxu0 %v4469
    %4927 = vmatpush.bf16.msra.mxu0 %v4465
    %4928 = vmatmul.bf16.gmra.mxu0 %v3588
    %v4929 = vpop.f32.mrf.mxu0
    %v4930 = vadd.f32 %v4917, %v4929
    %v4931 = vpop.f32.mrf.mxu0
    %4932 = vdwg.mxu0
    %4933 = vmatpush.bf16.msra.mxu0 %v4525
    %4934 = vmatpush.bf16.msra.mxu0 %v4521
    %4935 = vmatpush.bf16.msra.mxu0 %v4517
    %4936 = vmatpush.bf16.msra.mxu0 %v4513
    %4937 = vmatpush.bf16.msra.mxu0 %v4509
    %4938 = vmatpush.bf16.msra.mxu0 %v4505
    %4939 = vmatpush.bf16.msra.mxu0 %v4501
    %4940 = vmatpush.bf16.msra.mxu0 %v4497
    %4941 = vmatmul.bf16.gmra.mxu0 %v3589
    %v4942 = vpop.f32.mrf.mxu0
    %v4943 = vadd.f32 %v4930, %v4942
    %v4944 = vpop.f32.mrf.mxu0
    %4945 = vdwg.mxu0
    %4946 = vmatpush.bf16.msra.mxu0 %v4557
    %4947 = vmatpush.bf16.msra.mxu0 %v4553
    %4948 = vmatpush.bf16.msra.mxu0 %v4549
    %4949 = vmatpush.bf16.msra.mxu0 %v4545
    %4950 = vmatpush.bf16.msra.mxu0 %v4541
    %4951 = vmatpush.bf16.msra.mxu0 %v4537
    %4952 = vmatpush.bf16.msra.mxu0 %v4533
    %4953 = vmatpush.bf16.msra.mxu0 %v4529
    %4954 = vmatmul.bf16.gmra.mxu0 %v3590
    %v4955 = vpop.f32.mrf.mxu0
    %v4956 = vadd.f32 %v4943, %v4955
    %v4957 = vpop.f32.mrf.mxu0
    %4958 = vdwg.mxu0
    %4959 = vmatpush.bf16.msra.mxu0 %v4589
    %4960 = vmatpush.bf16.msra.mxu0 %v4585
    %4961 = vmatpush.bf16.msra.mxu0 %v4581
    %4962 = vmatpush.bf16.msra.mxu0 %v4577
    %4963 = vmatpush.bf16.msra.mxu0 %v4573
    %4964 = vmatpush.bf16.msra.mxu0 %v4569
    %4965 = vmatpush.bf16.msra.mxu0 %v4565
    %4966 = vmatpush.bf16.msra.mxu0 %v4561
    %4967 = vmatmul.bf16.gmra.mxu0 %v3591
    %v4968 = vpop.f32.mrf.mxu0
    %v4969 = vadd.f32 %v4956, %v4968
    %v4970 = vpop.f32.mrf.mxu0
    %4971 = vdwg.mxu0
    %4972 = vmatpush.bf16.msra.mxu0 %v4621
    %4973 = vmatpush.bf16.msra.mxu0 %v4617
    %4974 = vmatpush.bf16.msra.mxu0 %v4613
    %4975 = vmatpush.bf16.msra.mxu0 %v4609
    %4976 = vmatpush.bf16.msra.mxu0 %v4605
    %4977 = vmatpush.bf16.msra.mxu0 %v4601
    %4978 = vmatpush.bf16.msra.mxu0 %v4597
    %4979 = vmatpush.bf16.msra.mxu0 %v4593
    %4980 = vmatmul.bf16.gmra.mxu0 %v3592
    %v4981 = vpop.f32.mrf.mxu0
    %v4982 = vadd.f32 %v4969, %v4981
    %v4983 = vpop.f32.mrf.mxu0
    %4984 = vdwg.mxu0
    %4985 = vmatpush.bf16.msra.mxu0 %v4398
    %4986 = vmatpush.bf16.msra.mxu0 %v4394
    %4987 = vmatpush.bf16.msra.mxu0 %v4390
    %4988 = vmatpush.bf16.msra.mxu0 %v4386
    %4989 = vmatpush.bf16.msra.mxu0 %v4382
    %4990 = vmatpush.bf16.msra.mxu0 %v4378
    %4991 = vmatpush.bf16.msra.mxu0 %v4374
    %4992 = vmatpush.bf16.msra.mxu0 %v4370
    %4993 = vmatmul.bf16.gmra.mxu0 %v3585
    %v4994 = vpop.f32.mrf.mxu0
    %v4995 = vadd.f32 %v3515, %v4994
    %v4996 = vpop.f32.mrf.mxu0
    %4997 = vdwg.mxu0
    %4998 = vmatpush.bf16.msra.mxu0 %v4430
    %4999 = vmatpush.bf16.msra.mxu0 %v4426
    %5000 = vmatpush.bf16.msra.mxu0 %v4422
    %5001 = vmatpush.bf16.msra.mxu0 %v4418
    %5002 = vmatpush.bf16.msra.mxu0 %v4414
    %5003 = vmatpush.bf16.msra.mxu0 %v4410
    %5004 = vmatpush.bf16.msra.mxu0 %v4406
    %5005 = vmatpush.bf16.msra.mxu0 %v4402
    %5006 = vmatmul.bf16.gmra.mxu0 %v3586
    %v5007 = vpop.f32.mrf.mxu0
    %v5008 = vadd.f32 %v4995, %v5007
    %v5009 = vpop.f32.mrf.mxu0
    %5010 = vdwg.mxu0
    %5011 = vmatpush.bf16.msra.mxu0 %v4462
    %5012 = vmatpush.bf16.msra.mxu0 %v4458
    %5013 = vmatpush.bf16.msra.mxu0 %v4454
    %5014 = vmatpush.bf16.msra.mxu0 %v4450
    %5015 = vmatpush.bf16.msra.mxu0 %v4446
    %5016 = vmatpush.bf16.msra.mxu0 %v4442
    %5017 = vmatpush.bf16.msra.mxu0 %v4438
    %5018 = vmatpush.bf16.msra.mxu0 %v4434
    %5019 = vmatmul.bf16.gmra.mxu0 %v3587
    %v5020 = vpop.f32.mrf.mxu0
    %v5021 = vadd.f32 %v5008, %v5020
    %v5022 = vpop.f32.mrf.mxu0
    %5023 = vdwg.mxu0
    %5024 = vmatpush.bf16.msra.mxu0 %v4494
    %5025 = vmatpush.bf16.msra.mxu0 %v4490
    %5026 = vmatpush.bf16.msra.mxu0 %v4486
    %5027 = vmatpush.bf16.msra.mxu0 %v4482
    %5028 = vmatpush.bf16.msra.mxu0 %v4478
    %5029 = vmatpush.bf16.msra.mxu0 %v4474
    %5030 = vmatpush.bf16.msra.mxu0 %v4470
    %5031 = vmatpush.bf16.msra.mxu0 %v4466
    %5032 = vmatmul.bf16.gmra.mxu0 %v3588
    %v5033 = vpop.f32.mrf.mxu0
    %v5034 = vadd.f32 %v5021, %v5033
    %v5035 = vpop.f32.mrf.mxu0
    %5036 = vdwg.mxu0
    %5037 = vmatpush.bf16.msra.mxu0 %v4526
    %5038 = vmatpush.bf16.msra.mxu0 %v4522
    %5039 = vmatpush.bf16.msra.mxu0 %v4518
    %5040 = vmatpush.bf16.msra.mxu0 %v4514
    %5041 = vmatpush.bf16.msra.mxu0 %v4510
    %5042 = vmatpush.bf16.msra.mxu0 %v4506
    %5043 = vmatpush.bf16.msra.mxu0 %v4502
    %5044 = vmatpush.bf16.msra.mxu0 %v4498
    %5045 = vmatmul.bf16.gmra.mxu0 %v3589
    %v5046 = vpop.f32.mrf.mxu0
    %v5047 = vadd.f32 %v5034, %v5046
    %v5048 = vpop.f32.mrf.mxu0
    %5049 = vdwg.mxu0
    %5050 = vmatpush.bf16.msra.mxu0 %v4558
    %5051 = vmatpush.bf16.msra.mxu0 %v4554
    %5052 = vmatpush.bf16.msra.mxu0 %v4550
    %5053 = vmatpush.bf16.msra.mxu0 %v4546
    %5054 = vmatpush.bf16.msra.mxu0 %v4542
    %5055 = vmatpush.bf16.msra.mxu0 %v4538
    %5056 = vmatpush.bf16.msra.mxu0 %v4534
    %5057 = vmatpush.bf16.msra.mxu0 %v4530
    %5058 = vmatmul.bf16.gmra.mxu0 %v3590
    %v5059 = vpop.f32.mrf.mxu0
    %v5060 = vadd.f32 %v5047, %v5059
    %v5061 = vpop.f32.mrf.mxu0
    %5062 = vdwg.mxu0
    %5063 = vmatpush.bf16.msra.mxu0 %v4590
    %5064 = vmatpush.bf16.msra.mxu0 %v4586
    %5065 = vmatpush.bf16.msra.mxu0 %v4582
    %5066 = vmatpush.bf16.msra.mxu0 %v4578
    %5067 = vmatpush.bf16.msra.mxu0 %v4574
    %5068 = vmatpush.bf16.msra.mxu0 %v4570
    %5069 = vmatpush.bf16.msra.mxu0 %v4566
    %5070 = vmatpush.bf16.msra.mxu0 %v4562
    %5071 = vmatmul.bf16.gmra.mxu0 %v3591
    %v5072 = vpop.f32.mrf.mxu0
    %v5073 = vadd.f32 %v5060, %v5072
    %v5074 = vpop.f32.mrf.mxu0
    %5075 = vdwg.mxu0
    %5076 = vmatpush.bf16.msra.mxu0 %v4622
    %5077 = vmatpush.bf16.msra.mxu0 %v4618
    %5078 = vmatpush.bf16.msra.mxu0 %v4614
    %5079 = vmatpush.bf16.msra.mxu0 %v4610
    %5080 = vmatpush.bf16.msra.mxu0 %v4606
    %5081 = vmatpush.bf16.msra.mxu0 %v4602
    %5082 = vmatpush.bf16.msra.mxu0 %v4598
    %5083 = vmatpush.bf16.msra.mxu0 %v4594
    %5084 = vmatmul.bf16.gmra.mxu0 %v3592
    %v5085 = vpop.f32.mrf.mxu0
    %v5086 = vadd.f32 %v5073, %v5085
    %v5087 = vpop.f32.mrf.mxu0
    %5088 = vdwg.mxu0
    %5089 = vmatpush.bf16.msra.mxu0 %v4399
    %5090 = vmatpush.bf16.msra.mxu0 %v4395
    %5091 = vmatpush.bf16.msra.mxu0 %v4391
    %5092 = vmatpush.bf16.msra.mxu0 %v4387
    %5093 = vmatpush.bf16.msra.mxu0 %v4383
    %5094 = vmatpush.bf16.msra.mxu0 %v4379
    %5095 = vmatpush.bf16.msra.mxu0 %v4375
    %5096 = vmatpush.bf16.msra.mxu0 %v4371
    %5097 = vmatmul.bf16.gmra.mxu0 %v3585
    %v5098 = vpop.f32.mrf.mxu0
    %v5099 = vadd.f32 %v3528, %v5098
    %v5100 = vpop.f32.mrf.mxu0
    %5101 = vdwg.mxu0
    %5102 = vmatpush.bf16.msra.mxu0 %v4431
    %5103 = vmatpush.bf16.msra.mxu0 %v4427
    %5104 = vmatpush.bf16.msra.mxu0 %v4423
    %5105 = vmatpush.bf16.msra.mxu0 %v4419
    %5106 = vmatpush.bf16.msra.mxu0 %v4415
    %5107 = vmatpush.bf16.msra.mxu0 %v4411
    %5108 = vmatpush.bf16.msra.mxu0 %v4407
    %5109 = vmatpush.bf16.msra.mxu0 %v4403
    %5110 = vmatmul.bf16.gmra.mxu0 %v3586
    %v5111 = vpop.f32.mrf.mxu0
    %v5112 = vadd.f32 %v5099, %v5111
    %v5113 = vpop.f32.mrf.mxu0
    %5114 = vdwg.mxu0
    %5115 = vmatpush.bf16.msra.mxu0 %v4463
    %5116 = vmatpush.bf16.msra.mxu0 %v4459
    %5117 = vmatpush.bf16.msra.mxu0 %v4455
    %5118 = vmatpush.bf16.msra.mxu0 %v4451
    %5119 = vmatpush.bf16.msra.mxu0 %v4447
    %5120 = vmatpush.bf16.msra.mxu0 %v4443
    %5121 = vmatpush.bf16.msra.mxu0 %v4439
    %5122 = vmatpush.bf16.msra.mxu0 %v4435
    %5123 = vmatmul.bf16.gmra.mxu0 %v3587
    %v5124 = vpop.f32.mrf.mxu0
    %v5125 = vadd.f32 %v5112, %v5124
    %v5126 = vpop.f32.mrf.mxu0
    %5127 = vdwg.mxu0
    %5128 = vmatpush.bf16.msra.mxu0 %v4495
    %5129 = vmatpush.bf16.msra.mxu0 %v4491
    %5130 = vmatpush.bf16.msra.mxu0 %v4487
    %5131 = vmatpush.bf16.msra.mxu0 %v4483
    %5132 = vmatpush.bf16.msra.mxu0 %v4479
    %5133 = vmatpush.bf16.msra.mxu0 %v4475
    %5134 = vmatpush.bf16.msra.mxu0 %v4471
    %5135 = vmatpush.bf16.msra.mxu0 %v4467
    %5136 = vmatmul.bf16.gmra.mxu0 %v3588
    %v5137 = vpop.f32.mrf.mxu0
    %v5138 = vadd.f32 %v5125, %v5137
    %v5139 = vpop.f32.mrf.mxu0
    %5140 = vdwg.mxu0
    %5141 = vmatpush.bf16.msra.mxu0 %v4527
    %5142 = vmatpush.bf16.msra.mxu0 %v4523
    %5143 = vmatpush.bf16.msra.mxu0 %v4519
    %5144 = vmatpush.bf16.msra.mxu0 %v4515
    %5145 = vmatpush.bf16.msra.mxu0 %v4511
    %5146 = vmatpush.bf16.msra.mxu0 %v4507
    %5147 = vmatpush.bf16.msra.mxu0 %v4503
    %5148 = vmatpush.bf16.msra.mxu0 %v4499
    %5149 = vmatmul.bf16.gmra.mxu0 %v3589
    %v5150 = vpop.f32.mrf.mxu0
    %v5151 = vadd.f32 %v5138, %v5150
    %v5152 = vpop.f32.mrf.mxu0
    %5153 = vdwg.mxu0
    %5154 = vmatpush.bf16.msra.mxu0 %v4559
    %5155 = vmatpush.bf16.msra.mxu0 %v4555
    %5156 = vmatpush.bf16.msra.mxu0 %v4551
    %5157 = vmatpush.bf16.msra.mxu0 %v4547
    %5158 = vmatpush.bf16.msra.mxu0 %v4543
    %5159 = vmatpush.bf16.msra.mxu0 %v4539
    %5160 = vmatpush.bf16.msra.mxu0 %v4535
    %5161 = vmatpush.bf16.msra.mxu0 %v4531
    %5162 = vmatmul.bf16.gmra.mxu0 %v3590
    %v5163 = vpop.f32.mrf.mxu0
    %v5164 = vadd.f32 %v5151, %v5163
    %v5165 = vpop.f32.mrf.mxu0
    %5166 = vdwg.mxu0
    %5167 = vmatpush.bf16.msra.mxu0 %v4591
    %5168 = vmatpush.bf16.msra.mxu0 %v4587
    %5169 = vmatpush.bf16.msra.mxu0 %v4583
    %5170 = vmatpush.bf16.msra.mxu0 %v4579
    %5171 = vmatpush.bf16.msra.mxu0 %v4575
    %5172 = vmatpush.bf16.msra.mxu0 %v4571
    %5173 = vmatpush.bf16.msra.mxu0 %v4567
    %5174 = vmatpush.bf16.msra.mxu0 %v4563
    %5175 = vmatmul.bf16.gmra.mxu0 %v3591
    %v5176 = vpop.f32.mrf.mxu0
    %v5177 = vadd.f32 %v5164, %v5176
    %v5178 = vpop.f32.mrf.mxu0
    %5179 = vdwg.mxu0
    %5180 = vmatpush.bf16.msra.mxu0 %v4623
    %5181 = vmatpush.bf16.msra.mxu0 %v4619
    %5182 = vmatpush.bf16.msra.mxu0 %v4615
    %5183 = vmatpush.bf16.msra.mxu0 %v4611
    %5184 = vmatpush.bf16.msra.mxu0 %v4607
    %5185 = vmatpush.bf16.msra.mxu0 %v4603
    %5186 = vmatpush.bf16.msra.mxu0 %v4599
    %5187 = vmatpush.bf16.msra.mxu0 %v4595
    %5188 = vmatmul.bf16.gmra.mxu0 %v3592
    %v5189 = vpop.f32.mrf.mxu0
    %v5190 = vadd.f32 %v5177, %v5189
    %v5191 = vpop.f32.mrf.mxu0
    %5192 = vdwg.mxu0
    %5193 = vmatpush.bf16.msra.mxu0 %v4400
    %5194 = vmatpush.bf16.msra.mxu0 %v4396
    %5195 = vmatpush.bf16.msra.mxu0 %v4392
    %5196 = vmatpush.bf16.msra.mxu0 %v4388
    %5197 = vmatpush.bf16.msra.mxu0 %v4384
    %5198 = vmatpush.bf16.msra.mxu0 %v4380
    %5199 = vmatpush.bf16.msra.mxu0 %v4376
    %5200 = vmatpush.bf16.msra.mxu0 %v4372
    %5201 = vmatmul.bf16.gmra.mxu0 %v3585
    %v5202 = vpop.f32.mrf.mxu0
    %v5203 = vadd.f32 %v3541, %v5202
    %v5204 = vpop.f32.mrf.mxu0
    %5205 = vdwg.mxu0
    %5206 = vmatpush.bf16.msra.mxu0 %v4432
    %5207 = vmatpush.bf16.msra.mxu0 %v4428
    %5208 = vmatpush.bf16.msra.mxu0 %v4424
    %5209 = vmatpush.bf16.msra.mxu0 %v4420
    %5210 = vmatpush.bf16.msra.mxu0 %v4416
    %5211 = vmatpush.bf16.msra.mxu0 %v4412
    %5212 = vmatpush.bf16.msra.mxu0 %v4408
    %5213 = vmatpush.bf16.msra.mxu0 %v4404
    %5214 = vmatmul.bf16.gmra.mxu0 %v3586
    %v5215 = vpop.f32.mrf.mxu0
    %v5216 = vadd.f32 %v5203, %v5215
    %v5217 = vpop.f32.mrf.mxu0
    %5218 = vdwg.mxu0
    %5219 = vmatpush.bf16.msra.mxu0 %v4464
    %5220 = vmatpush.bf16.msra.mxu0 %v4460
    %5221 = vmatpush.bf16.msra.mxu0 %v4456
    %5222 = vmatpush.bf16.msra.mxu0 %v4452
    %5223 = vmatpush.bf16.msra.mxu0 %v4448
    %5224 = vmatpush.bf16.msra.mxu0 %v4444
    %5225 = vmatpush.bf16.msra.mxu0 %v4440
    %5226 = vmatpush.bf16.msra.mxu0 %v4436
    %5227 = vmatmul.bf16.gmra.mxu0 %v3587
    %v5228 = vpop.f32.mrf.mxu0
    %v5229 = vadd.f32 %v5216, %v5228
    %v5230 = vpop.f32.mrf.mxu0
    %5231 = vdwg.mxu0
    %5232 = vmatpush.bf16.msra.mxu0 %v4496
    %5233 = vmatpush.bf16.msra.mxu0 %v4492
    %5234 = vmatpush.bf16.msra.mxu0 %v4488
    %5235 = vmatpush.bf16.msra.mxu0 %v4484
    %5236 = vmatpush.bf16.msra.mxu0 %v4480
    %5237 = vmatpush.bf16.msra.mxu0 %v4476
    %5238 = vmatpush.bf16.msra.mxu0 %v4472
    %5239 = vmatpush.bf16.msra.mxu0 %v4468
    %5240 = vmatmul.bf16.gmra.mxu0 %v3588
    %v5241 = vpop.f32.mrf.mxu0
    %v5242 = vadd.f32 %v5229, %v5241
    %v5243 = vpop.f32.mrf.mxu0
    %5244 = vdwg.mxu0
    %5245 = vmatpush.bf16.msra.mxu0 %v4528
    %5246 = vmatpush.bf16.msra.mxu0 %v4524
    %5247 = vmatpush.bf16.msra.mxu0 %v4520
    %5248 = vmatpush.bf16.msra.mxu0 %v4516
    %5249 = vmatpush.bf16.msra.mxu0 %v4512
    %5250 = vmatpush.bf16.msra.mxu0 %v4508
    %5251 = vmatpush.bf16.msra.mxu0 %v4504
    %5252 = vmatpush.bf16.msra.mxu0 %v4500
    %5253 = vmatmul.bf16.gmra.mxu0 %v3589
    %v5254 = vpop.f32.mrf.mxu0
    %v5255 = vadd.f32 %v5242, %v5254
    %v5256 = vpop.f32.mrf.mxu0
    %5257 = vdwg.mxu0
    %5258 = vmatpush.bf16.msra.mxu0 %v4560
    %5259 = vmatpush.bf16.msra.mxu0 %v4556
    %5260 = vmatpush.bf16.msra.mxu0 %v4552
    %5261 = vmatpush.bf16.msra.mxu0 %v4548
    %5262 = vmatpush.bf16.msra.mxu0 %v4544
    %5263 = vmatpush.bf16.msra.mxu0 %v4540
    %5264 = vmatpush.bf16.msra.mxu0 %v4536
    %5265 = vmatpush.bf16.msra.mxu0 %v4532
    %5266 = vmatmul.bf16.gmra.mxu0 %v3590
    %v5267 = vpop.f32.mrf.mxu0
    %v5268 = vadd.f32 %v5255, %v5267
    %v5269 = vpop.f32.mrf.mxu0
    %5270 = vdwg.mxu0
    %5271 = vmatpush.bf16.msra.mxu0 %v4592
    %5272 = vmatpush.bf16.msra.mxu0 %v4588
    %5273 = vmatpush.bf16.msra.mxu0 %v4584
    %5274 = vmatpush.bf16.msra.mxu0 %v4580
    %5275 = vmatpush.bf16.msra.mxu0 %v4576
    %5276 = vmatpush.bf16.msra.mxu0 %v4572
    %5277 = vmatpush.bf16.msra.mxu0 %v4568
    %5278 = vmatpush.bf16.msra.mxu0 %v4564
    %5279 = vmatmul.bf16.gmra.mxu0 %v3591
    %v5280 = vpop.f32.mrf.mxu0
    %v5281 = vadd.f32 %v5268, %v5280
    %v5282 = vpop.f32.mrf.mxu0
    %5283 = vdwg.mxu0
    %5284 = vmatpush.bf16.msra.mxu0 %v4624
    %5285 = vmatpush.bf16.msra.mxu0 %v4620
    %5286 = vmatpush.bf16.msra.mxu0 %v4616
    %5287 = vmatpush.bf16.msra.mxu0 %v4612
    %5288 = vmatpush.bf16.msra.mxu0 %v4608
    %5289 = vmatpush.bf16.msra.mxu0 %v4604
    %5290 = vmatpush.bf16.msra.mxu0 %v4600
    %5291 = vmatpush.bf16.msra.mxu0 %v4596
    %5292 = vmatmul.bf16.gmra.mxu0 %v3592
    %v5293 = vpop.f32.mrf.mxu0
    %v5294 = vadd.f32 %v5281, %v5293
    %v5295 = vpop.f32.mrf.mxu0
    %5296 = vdwg.mxu0
    %v5297 = vpack.c.bf16 %v3313, %v3313
    %v5298 = vpack.c.bf16 %v3314, %v3314
    %v5363 = vunpack.c.l.b16 %v2503
    %v5364 = vunpack.c.h.b16 %v2503
    %v5365 = vunpack.c.l.b16 %v2504
    %v5366 = vunpack.c.h.b16 %v2504
    %v5367 = vunpack.c.l.b16 %v2505
    %v5368 = vunpack.c.h.b16 %v2505
    %v5369 = vunpack.c.l.b16 %v2506
    %v5370 = vunpack.c.h.b16 %v2506
    %v5371 = vunpack.c.l.b16 %v2507
    %v5372 = vunpack.c.h.b16 %v2507
    %v5373 = vunpack.c.l.b16 %v2508
    %v5374 = vunpack.c.h.b16 %v2508
    %v5375 = vunpack.c.l.b16 %v2509
    %v5376 = vunpack.c.h.b16 %v2509
    %v5377 = vunpack.c.l.b16 %v2510
    %v5378 = vunpack.c.h.b16 %v2510
    %v5379 = vunpack.c.l.b16 %v2511
    %v5380 = vunpack.c.h.b16 %v2511
    %v5381 = vunpack.c.l.b16 %v2512
    %v5382 = vunpack.c.h.b16 %v2512
    %v5383 = vunpack.c.l.b16 %v2513
    %v5384 = vunpack.c.h.b16 %v2513
    %v5385 = vunpack.c.l.b16 %v2514
    %v5386 = vunpack.c.h.b16 %v2514
    %v5387 = vunpack.c.l.b16 %v2515
    %v5388 = vunpack.c.h.b16 %v2515
    %v5389 = vunpack.c.l.b16 %v2516
    %v5390 = vunpack.c.h.b16 %v2516
    %v5391 = vunpack.c.l.b16 %v2517
    %v5392 = vunpack.c.h.b16 %v2517
    %v5393 = vunpack.c.l.b16 %v2518
    %v5394 = vunpack.c.h.b16 %v2518
    %v5395 = vunpack.c.l.b16 %v2519
    %v5396 = vunpack.c.h.b16 %v2519
    %v5397 = vunpack.c.l.b16 %v2520
    %v5398 = vunpack.c.h.b16 %v2520
    %v5399 = vunpack.c.l.b16 %v2521
    %v5400 = vunpack.c.h.b16 %v2521
    %v5401 = vunpack.c.l.b16 %v2522
    %v5402 = vunpack.c.h.b16 %v2522
    %v5403 = vunpack.c.l.b16 %v2523
    %v5404 = vunpack.c.h.b16 %v2523
    %v5405 = vunpack.c.l.b16 %v2524
    %v5406 = vunpack.c.h.b16 %v2524
    %v5407 = vunpack.c.l.b16 %v2525
    %v5408 = vunpack.c.h.b16 %v2525
    %v5409 = vunpack.c.l.b16 %v2526
    %v5410 = vunpack.c.h.b16 %v2526
    %v5411 = vunpack.c.l.b16 %v2527
    %v5412 = vunpack.c.h.b16 %v2527
    %v5413 = vunpack.c.l.b16 %v2528
    %v5414 = vunpack.c.h.b16 %v2528
    %v5415 = vunpack.c.l.b16 %v2529
    %v5416 = vunpack.c.h.b16 %v2529
    %v5417 = vunpack.c.l.b16 %v2530
    %v5418 = vunpack.c.h.b16 %v2530
    %v5419 = vunpack.c.l.b16 %v2531
    %v5420 = vunpack.c.h.b16 %v2531
    %v5421 = vunpack.c.l.b16 %v2532
    %v5422 = vunpack.c.h.b16 %v2532
    %v5423 = vunpack.c.l.b16 %v2533
    %v5424 = vunpack.c.h.b16 %v2533
    %v5425 = vunpack.c.l.b16 %v2534
    %v5426 = vunpack.c.h.b16 %v2534
    %v5427 = vunpack.c.l.b16 %v2535
    %v5428 = vunpack.c.h.b16 %v2535
    %v5429 = vunpack.c.l.b16 %v2536
    %v5430 = vunpack.c.h.b16 %v2536
    %v5431 = vunpack.c.l.b16 %v2537
    %v5432 = vunpack.c.h.b16 %v2537
    %v5433 = vunpack.c.l.b16 %v2538
    %v5434 = vunpack.c.h.b16 %v2538
    %v5435 = vunpack.c.l.b16 %v2539
    %v5436 = vunpack.c.h.b16 %v2539
    %v5437 = vunpack.c.l.b16 %v2540
    %v5438 = vunpack.c.h.b16 %v2540
    %v5439 = vunpack.c.l.b16 %v2541
    %v5440 = vunpack.c.h.b16 %v2541
    %v5441 = vunpack.c.l.b16 %v2542
    %v5442 = vunpack.c.h.b16 %v2542
    %v5443 = vunpack.c.l.b16 %v2543
    %v5444 = vunpack.c.h.b16 %v2543
    %v5445 = vunpack.c.l.b16 %v2544
    %v5446 = vunpack.c.h.b16 %v2544
    %v5447 = vunpack.c.l.b16 %v2545
    %v5448 = vunpack.c.h.b16 %v2545
    %v5449 = vunpack.c.l.b16 %v2546
    %v5450 = vunpack.c.h.b16 %v2546
    %v5451 = vunpack.c.l.b16 %v2547
    %v5452 = vunpack.c.h.b16 %v2547
    %v5453 = vunpack.c.l.b16 %v2548
    %v5454 = vunpack.c.h.b16 %v2548
    %v5455 = vunpack.c.l.b16 %v2549
    %v5456 = vunpack.c.h.b16 %v2549
    %v5457 = vunpack.c.l.b16 %v2550
    %v5458 = vunpack.c.h.b16 %v2550
    %v5459 = vunpack.c.l.b16 %v2551
    %v5460 = vunpack.c.h.b16 %v2551
    %v5461 = vunpack.c.l.b16 %v2552
    %v5462 = vunpack.c.h.b16 %v2552
    %v5463 = vunpack.c.l.b16 %v2553
    %v5464 = vunpack.c.h.b16 %v2553
    %v5465 = vunpack.c.l.b16 %v2554
    %v5466 = vunpack.c.h.b16 %v2554
    %v5467 = vunpack.c.l.b16 %v2555
    %v5468 = vunpack.c.h.b16 %v2555
    %v5469 = vunpack.c.l.b16 %v2556
    %v5470 = vunpack.c.h.b16 %v2556
    %v5471 = vunpack.c.l.b16 %v2557
    %v5472 = vunpack.c.h.b16 %v2557
    %v5473 = vunpack.c.l.b16 %v2558
    %v5474 = vunpack.c.h.b16 %v2558
    %v5475 = vunpack.c.l.b16 %v2559
    %v5476 = vunpack.c.h.b16 %v2559
    %v5477 = vunpack.c.l.b16 %v2560
    %v5478 = vunpack.c.h.b16 %v2560
    %v5479 = vunpack.c.l.b16 %v2561
    %v5480 = vunpack.c.h.b16 %v2561
    %v5481 = vunpack.c.l.b16 %v2562
    %v5482 = vunpack.c.h.b16 %v2562
    %v5483 = vunpack.c.l.b16 %v2563
    %v5484 = vunpack.c.h.b16 %v2563
    %v5485 = vunpack.c.l.b16 %v2564
    %v5486 = vunpack.c.h.b16 %v2564
    %v5487 = vunpack.c.l.b16 %v2565
    %v5488 = vunpack.c.h.b16 %v2565
    %v5489 = vunpack.c.l.b16 %v2566
    %v5490 = vunpack.c.h.b16 %v2566
    %v5491 = vpack.c.b16 %v5367, %v5363
    %v5492 = vpack.c.b16 %v5368, %v5364
    %v5493 = vpack.c.b16 %v5369, %v5365
    %v5494 = vpack.c.b16 %v5370, %v5366
    %v5495 = vpack.c.b16 %v5375, %v5371
    %v5496 = vpack.c.b16 %v5376, %v5372
    %v5497 = vpack.c.b16 %v5377, %v5373
    %v5498 = vpack.c.b16 %v5378, %v5374
    %v5499 = vpack.c.b16 %v5383, %v5379
    %v5500 = vpack.c.b16 %v5384, %v5380
    %v5501 = vpack.c.b16 %v5385, %v5381
    %v5502 = vpack.c.b16 %v5386, %v5382
    %v5503 = vpack.c.b16 %v5391, %v5387
    %v5504 = vpack.c.b16 %v5392, %v5388
    %v5505 = vpack.c.b16 %v5393, %v5389
    %v5506 = vpack.c.b16 %v5394, %v5390
    %v5507 = vpack.c.b16 %v5399, %v5395
    %v5508 = vpack.c.b16 %v5400, %v5396
    %v5509 = vpack.c.b16 %v5401, %v5397
    %v5510 = vpack.c.b16 %v5402, %v5398
    %v5511 = vpack.c.b16 %v5407, %v5403
    %v5512 = vpack.c.b16 %v5408, %v5404
    %v5513 = vpack.c.b16 %v5409, %v5405
    %v5514 = vpack.c.b16 %v5410, %v5406
    %v5515 = vpack.c.b16 %v5415, %v5411
    %v5516 = vpack.c.b16 %v5416, %v5412
    %v5517 = vpack.c.b16 %v5417, %v5413
    %v5518 = vpack.c.b16 %v5418, %v5414
    %v5519 = vpack.c.b16 %v5423, %v5419
    %v5520 = vpack.c.b16 %v5424, %v5420
    %v5521 = vpack.c.b16 %v5425, %v5421
    %v5522 = vpack.c.b16 %v5426, %v5422
    %v5523 = vpack.c.b16 %v5431, %v5427
    %v5524 = vpack.c.b16 %v5432, %v5428
    %v5525 = vpack.c.b16 %v5433, %v5429
    %v5526 = vpack.c.b16 %v5434, %v5430
    %v5527 = vpack.c.b16 %v5439, %v5435
    %v5528 = vpack.c.b16 %v5440, %v5436
    %v5529 = vpack.c.b16 %v5441, %v5437
    %v5530 = vpack.c.b16 %v5442, %v5438
    %v5531 = vpack.c.b16 %v5447, %v5443
    %v5532 = vpack.c.b16 %v5448, %v5444
    %v5533 = vpack.c.b16 %v5449, %v5445
    %v5534 = vpack.c.b16 %v5450, %v5446
    %v5535 = vpack.c.b16 %v5455, %v5451
    %v5536 = vpack.c.b16 %v5456, %v5452
    %v5537 = vpack.c.b16 %v5457, %v5453
    %v5538 = vpack.c.b16 %v5458, %v5454
    %v5539 = vpack.c.b16 %v5463, %v5459
    %v5540 = vpack.c.b16 %v5464, %v5460
    %v5541 = vpack.c.b16 %v5465, %v5461
    %v5542 = vpack.c.b16 %v5466, %v5462
    %v5543 = vpack.c.b16 %v5471, %v5467
    %v5544 = vpack.c.b16 %v5472, %v5468
    %v5545 = vpack.c.b16 %v5473, %v5469
    %v5546 = vpack.c.b16 %v5474, %v5470
    %v5547 = vpack.c.b16 %v5479, %v5475
    %v5548 = vpack.c.b16 %v5480, %v5476
    %v5549 = vpack.c.b16 %v5481, %v5477
    %v5550 = vpack.c.b16 %v5482, %v5478
    %v5551 = vpack.c.b16 %v5487, %v5483
    %v5552 = vpack.c.b16 %v5488, %v5484
    %v5553 = vpack.c.b16 %v5489, %v5485
    %v5554 = vpack.c.b16 %v5490, %v5486
    %5619 = vmatpush.bf16.msra.mxu0 %v5519
    %5620 = vmatpush.bf16.msra.mxu0 %v5515
    %5621 = vmatpush.bf16.msra.mxu0 %v5511
    %5622 = vmatpush.bf16.msra.mxu0 %v5507
    %5623 = vmatpush.bf16.msra.mxu0 %v5503
    %5624 = vmatpush.bf16.msra.mxu0 %v5499
    %5625 = vmatpush.bf16.msra.mxu0 %v5495
    %5626 = vmatpush.bf16.msra.mxu0 %v5491
    %5627 = vmatmul.bf16.gmra.mxu0 %v5297
    %v5628 = vpop.f32.mrf.mxu0
    %v5629 = vadd.f32 0.0, %v5628
    %v5630 = vpop.f32.mrf.mxu0
    %5631 = vdwg.mxu0
    %5632 = vmatpush.bf16.msra.mxu0 %v5551
    %5633 = vmatpush.bf16.msra.mxu0 %v5547
    %5634 = vmatpush.bf16.msra.mxu0 %v5543
    %5635 = vmatpush.bf16.msra.mxu0 %v5539
    %5636 = vmatpush.bf16.msra.mxu0 %v5535
    %5637 = vmatpush.bf16.msra.mxu0 %v5531
    %5638 = vmatpush.bf16.msra.mxu0 %v5527
    %5639 = vmatpush.bf16.msra.mxu0 %v5523
    %5640 = vmatmul.bf16.gmra.mxu0 %v5298
    %v5641 = vpop.f32.mrf.mxu0
    %v5642 = vadd.f32 %v5629, %v5641
    %v5643 = vpop.f32.mrf.mxu0
    %5644 = vdwg.mxu0
    %5645 = vmatpush.bf16.msra.mxu0 %v5520
    %5646 = vmatpush.bf16.msra.mxu0 %v5516
    %5647 = vmatpush.bf16.msra.mxu0 %v5512
    %5648 = vmatpush.bf16.msra.mxu0 %v5508
    %5649 = vmatpush.bf16.msra.mxu0 %v5504
    %5650 = vmatpush.bf16.msra.mxu0 %v5500
    %5651 = vmatpush.bf16.msra.mxu0 %v5496
    %5652 = vmatpush.bf16.msra.mxu0 %v5492
    %5653 = vmatmul.bf16.gmra.mxu0 %v5297
    %v5654 = vpop.f32.mrf.mxu0
    %v5655 = vadd.f32 0.0, %v5654
    %v5656 = vpop.f32.mrf.mxu0
    %5657 = vdwg.mxu0
    %5658 = vmatpush.bf16.msra.mxu0 %v5552
    %5659 = vmatpush.bf16.msra.mxu0 %v5548
    %5660 = vmatpush.bf16.msra.mxu0 %v5544
    %5661 = vmatpush.bf16.msra.mxu0 %v5540
    %5662 = vmatpush.bf16.msra.mxu0 %v5536
    %5663 = vmatpush.bf16.msra.mxu0 %v5532
    %5664 = vmatpush.bf16.msra.mxu0 %v5528
    %5665 = vmatpush.bf16.msra.mxu0 %v5524
    %5666 = vmatmul.bf16.gmra.mxu0 %v5298
    %v5667 = vpop.f32.mrf.mxu0
    %v5668 = vadd.f32 %v5655, %v5667
    %v5669 = vpop.f32.mrf.mxu0
    %5670 = vdwg.mxu0
    %5671 = vmatpush.bf16.msra.mxu0 %v5521
    %5672 = vmatpush.bf16.msra.mxu0 %v5517
    %5673 = vmatpush.bf16.msra.mxu0 %v5513
    %5674 = vmatpush.bf16.msra.mxu0 %v5509
    %5675 = vmatpush.bf16.msra.mxu0 %v5505
    %5676 = vmatpush.bf16.msra.mxu0 %v5501
    %5677 = vmatpush.bf16.msra.mxu0 %v5497
    %5678 = vmatpush.bf16.msra.mxu0 %v5493
    %5679 = vmatmul.bf16.gmra.mxu0 %v5297
    %v5680 = vpop.f32.mrf.mxu0
    %v5681 = vadd.f32 0.0, %v5680
    %v5682 = vpop.f32.mrf.mxu0
    %5683 = vdwg.mxu0
    %5684 = vmatpush.bf16.msra.mxu0 %v5553
    %5685 = vmatpush.bf16.msra.mxu0 %v5549
    %5686 = vmatpush.bf16.msra.mxu0 %v5545
    %5687 = vmatpush.bf16.msra.mxu0 %v5541
    %5688 = vmatpush.bf16.msra.mxu0 %v5537
    %5689 = vmatpush.bf16.msra.mxu0 %v5533
    %5690 = vmatpush.bf16.msra.mxu0 %v5529
    %5691 = vmatpush.bf16.msra.mxu0 %v5525
    %5692 = vmatmul.bf16.gmra.mxu0 %v5298
    %v5693 = vpop.f32.mrf.mxu0
    %v5694 = vadd.f32 %v5681, %v5693
    %v5695 = vpop.f32.mrf.mxu0
    %5696 = vdwg.mxu0
    %5697 = vmatpush.bf16.msra.mxu0 %v5522
    %5698 = vmatpush.bf16.msra.mxu0 %v5518
    %5699 = vmatpush.bf16.msra.mxu0 %v5514
    %5700 = vmatpush.bf16.msra.mxu0 %v5510
    %5701 = vmatpush.bf16.msra.mxu0 %v5506
    %5702 = vmatpush.bf16.msra.mxu0 %v5502
    %5703 = vmatpush.bf16.msra.mxu0 %v5498
    %5704 = vmatpush.bf16.msra.mxu0 %v5494
    %5705 = vmatmul.bf16.gmra.mxu0 %v5297
    %v5706 = vpop.f32.mrf.mxu0
    %v5707 = vadd.f32 0.0, %v5706
    %v5708 = vpop.f32.mrf.mxu0
    %5709 = vdwg.mxu0
    %5710 = vmatpush.bf16.msra.mxu0 %v5554
    %5711 = vmatpush.bf16.msra.mxu0 %v5550
    %5712 = vmatpush.bf16.msra.mxu0 %v5546
    %5713 = vmatpush.bf16.msra.mxu0 %v5542
    %5714 = vmatpush.bf16.msra.mxu0 %v5538
    %5715 = vmatpush.bf16.msra.mxu0 %v5534
    %5716 = vmatpush.bf16.msra.mxu0 %v5530
    %5717 = vmatpush.bf16.msra.mxu0 %v5526
    %5718 = vmatmul.bf16.gmra.mxu0 %v5298
    %v5719 = vpop.f32.mrf.mxu0
    %v5720 = vadd.f32 %v5707, %v5719
    %v5721 = vpop.f32.mrf.mxu0
    %5722 = vdwg.mxu0
    %v5723 = vadd.f32 %v4982, %v5642
    %v5724 = vadd.f32 %v5086, %v5668
    %v5725 = vadd.f32 %v5190, %v5694
    %v5726 = vadd.f32 %v5294, %v5720
    %v5728 = vperm.slane %v2567, 0
    %v5729 = vperm.slane %v2567, 1
    %v5730 = vperm.slane %v2567, 2
    %v5731 = vperm.slane %v2567, 3
    %v5736 = vadd.f32 %v5723, %v5728
    %v5737 = vadd.f32 %v5724, %v5729
    %v5738 = vadd.f32 %v5725, %v5730
    %v5739 = vadd.f32 %v5726, %v5731
    %v5740 = vmax.f32 %v5736, 0.0
    %v5741 = vmax.f32 %v5737, 0.0
    %v5742 = vmax.f32 %v5738, 0.0
    %v5743 = vmax.f32 %v5739, 0.0
    %v5744 = vpack.c.bf16 %v5740, %v5740
    %v5745 = vpack.c.bf16 %v5741, %v5741
    %v5746 = vpack.c.bf16 %v5742, %v5742
    %v5747 = vpack.c.bf16 %v5743, %v5743
    %v5749 = vperm.slane %v2632, 0
    %v5815 = vunpack.c.l.b16 %v2568
    %v5816 = vunpack.c.l.b16 %v2569
    %v5817 = vunpack.c.l.b16 %v2570
    %v5818 = vunpack.c.l.b16 %v2571
    %v5819 = vunpack.c.l.b16 %v2572
    %v5820 = vunpack.c.l.b16 %v2573
    %v5821 = vunpack.c.l.b16 %v2574
    %v5822 = vunpack.c.l.b16 %v2575
    %v5823 = vunpack.c.l.b16 %v2576
    %v5824 = vunpack.c.l.b16 %v2577
    %v5825 = vunpack.c.l.b16 %v2578
    %v5826 = vunpack.c.l.b16 %v2579
    %v5827 = vunpack.c.l.b16 %v2580
    %v5828 = vunpack.c.l.b16 %v2581
    %v5829 = vunpack.c.l.b16 %v2582
    %v5830 = vunpack.c.l.b16 %v2583
    %v5831 = vunpack.c.l.b16 %v2584
    %v5832 = vunpack.c.l.b16 %v2585
    %v5833 = vunpack.c.l.b16 %v2586
    %v5834 = vunpack.c.l.b16 %v2587
    %v5835 = vunpack.c.l.b16 %v2588
    %v5836 = vunpack.c.l.b16 %v2589
    %v5837 = vunpack.c.l.b16 %v2590
    %v5838 = vunpack.c.l.b16 %v2591
    %v5839 = vunpack.c.l.b16 %v2592
    %v5840 = vunpack.c.l.b16 %v2593
    %v5841 = vunpack.c.l.b16 %v2594
    %v5842 = vunpack.c.l.b16 %v2595
    %v5843 = vunpack.c.l.b16 %v2596
    %v5844 = vunpack.c.l.b16 %v2597
    %v5845 = vunpack.c.l.b16 %v2598
    %v5846 = vunpack.c.l.b16 %v2599
    %v5847 = vunpack.c.l.b16 %v2600
    %v5848 = vunpack.c.l.b16 %v2601
    %v5849 = vunpack.c.l.b16 %v2602
    %v5850 = vunpack.c.l.b16 %v2603
    %v5851 = vunpack.c.l.b16 %v2604
    %v5852 = vunpack.c.l.b16 %v2605
    %v5853 = vunpack.c.l.b16 %v2606
    %v5854 = vunpack.c.l.b16 %v2607
    %v5855 = vunpack.c.l.b16 %v2608
    %v5856 = vunpack.c.l.b16 %v2609
    %v5857 = vunpack.c.l.b16 %v2610
    %v5858 = vunpack.c.l.b16 %v2611
    %v5859 = vunpack.c.l.b16 %v2612
    %v5860 = vunpack.c.l.b16 %v2613
    %v5861 = vunpack.c.l.b16 %v2614
    %v5862 = vunpack.c.l.b16 %v2615
    %v5863 = vunpack.c.l.b16 %v2616
    %v5864 = vunpack.c.l.b16 %v2617
    %v5865 = vunpack.c.l.b16 %v2618
    %v5866 = vunpack.c.l.b16 %v2619
    %v5867 = vunpack.c.l.b16 %v2620
    %v5868 = vunpack.c.l.b16 %v2621
    %v5869 = vunpack.c.l.b16 %v2622
    %v5870 = vunpack.c.l.b16 %v2623
    %v5871 = vunpack.c.l.b16 %v2624
    %v5872 = vunpack.c.l.b16 %v2625
    %v5873 = vunpack.c.l.b16 %v2626
    %v5874 = vunpack.c.l.b16 %v2627
    %v5875 = vunpack.c.l.b16 %v2628
    %v5876 = vunpack.c.l.b16 %v2629
    %v5877 = vunpack.c.l.b16 %v2630
    %v5878 = vunpack.c.l.b16 %v2631
    %v5879 = vpack.c.b16 %v5816, %v5815
    %v5880 = vpack.c.b16 %v5818, %v5817
    %v5881 = vpack.c.b16 %v5820, %v5819
    %v5882 = vpack.c.b16 %v5822, %v5821
    %v5883 = vpack.c.b16 %v5824, %v5823
    %v5884 = vpack.c.b16 %v5826, %v5825
    %v5885 = vpack.c.b16 %v5828, %v5827
    %v5886 = vpack.c.b16 %v5830, %v5829
    %v5887 = vpack.c.b16 %v5832, %v5831
    %v5888 = vpack.c.b16 %v5834, %v5833
    %v5889 = vpack.c.b16 %v5836, %v5835
    %v5890 = vpack.c.b16 %v5838, %v5837
    %v5891 = vpack.c.b16 %v5840, %v5839
    %v5892 = vpack.c.b16 %v5842, %v5841
    %v5893 = vpack.c.b16 %v5844, %v5843
    %v5894 = vpack.c.b16 %v5846, %v5845
    %v5895 = vpack.c.b16 %v5848, %v5847
    %v5896 = vpack.c.b16 %v5850, %v5849
    %v5897 = vpack.c.b16 %v5852, %v5851
    %v5898 = vpack.c.b16 %v5854, %v5853
    %v5899 = vpack.c.b16 %v5856, %v5855
    %v5900 = vpack.c.b16 %v5858, %v5857
    %v5901 = vpack.c.b16 %v5860, %v5859
    %v5902 = vpack.c.b16 %v5862, %v5861
    %v5903 = vpack.c.b16 %v5864, %v5863
    %v5904 = vpack.c.b16 %v5866, %v5865
    %v5905 = vpack.c.b16 %v5868, %v5867
    %v5906 = vpack.c.b16 %v5870, %v5869
    %v5907 = vpack.c.b16 %v5872, %v5871
    %v5908 = vpack.c.b16 %v5874, %v5873
    %v5909 = vpack.c.b16 %v5876, %v5875
    %v5910 = vpack.c.b16 %v5878, %v5877
    %5943 = vmatpush.bf16.msra.mxu0 %v5886
    %5944 = vmatpush.bf16.msra.mxu0 %v5885
    %5945 = vmatpush.bf16.msra.mxu0 %v5884
    %5946 = vmatpush.bf16.msra.mxu0 %v5883
    %5947 = vmatpush.bf16.msra.mxu0 %v5882
    %5948 = vmatpush.bf16.msra.mxu0 %v5881
    %5949 = vmatpush.bf16.msra.mxu0 %v5880
    %5950 = vmatpush.bf16.msra.mxu0 %v5879
    %5951 = vmatmul.bf16.gmra.mxu0 %v5744
    %v5952 = vpop.f32.mrf.mxu0
    %v5953 = vadd.f32 %v5749, %v5952
    %v5954 = vpop.f32.mrf.mxu0
    %5955 = vdwg.mxu0
    %5956 = vmatpush.bf16.msra.mxu0 %v5894
    %5957 = vmatpush.bf16.msra.mxu0 %v5893
    %5958 = vmatpush.bf16.msra.mxu0 %v5892
    %5959 = vmatpush.bf16.msra.mxu0 %v5891
    %5960 = vmatpush.bf16.msra.mxu0 %v5890
    %5961 = vmatpush.bf16.msra.mxu0 %v5889
    %5962 = vmatpush.bf16.msra.mxu0 %v5888
    %5963 = vmatpush.bf16.msra.mxu0 %v5887
    %5964 = vmatmul.bf16.gmra.mxu0 %v5745
    %v5965 = vpop.f32.mrf.mxu0
    %v5966 = vadd.f32 %v5953, %v5965
    %v5967 = vpop.f32.mrf.mxu0
    %5968 = vdwg.mxu0
    %5969 = vmatpush.bf16.msra.mxu0 %v5902
    %5970 = vmatpush.bf16.msra.mxu0 %v5901
    %5971 = vmatpush.bf16.msra.mxu0 %v5900
    %5972 = vmatpush.bf16.msra.mxu0 %v5899
    %5973 = vmatpush.bf16.msra.mxu0 %v5898
    %5974 = vmatpush.bf16.msra.mxu0 %v5897
    %5975 = vmatpush.bf16.msra.mxu0 %v5896
    %5976 = vmatpush.bf16.msra.mxu0 %v5895
    %5977 = vmatmul.bf16.gmra.mxu0 %v5746
    %v5978 = vpop.f32.mrf.mxu0
    %v5979 = vadd.f32 %v5966, %v5978
    %v5980 = vpop.f32.mrf.mxu0
    %5981 = vdwg.mxu0
    %5982 = vmatpush.bf16.msra.mxu0 %v5910
    %5983 = vmatpush.bf16.msra.mxu0 %v5909
    %5984 = vmatpush.bf16.msra.mxu0 %v5908
    %5985 = vmatpush.bf16.msra.mxu0 %v5907
    %5986 = vmatpush.bf16.msra.mxu0 %v5906
    %5987 = vmatpush.bf16.msra.mxu0 %v5905
    %5988 = vmatpush.bf16.msra.mxu0 %v5904
    %5989 = vmatpush.bf16.msra.mxu0 %v5903
    %5990 = vmatmul.bf16.gmra.mxu0 %v5747
    %v5991 = vpop.f32.mrf.mxu0
    %v5992 = vadd.f32 %v5979, %v5991
    %v5993 = vpop.f32.mrf.mxu0
    %5994 = vdwg.mxu0
    %v5995 = vmul.f32 %v2160, 8.517193
    %v5996 = vmul.f32 %v5995, 1.442695
    %v5997 = vpow.pop %v5996
    %v5998 = vmul.f32 %v5997, 0.01
    %v5999 = vadd.f32 %v5998, 1e-07
    %v6000 = vrcp.pop %v5999
    %6002 = vset.pattern.permute.xlu0 0
    %6003 = vperm.xlu0 %6002, %v6000
    %v6004 = vpop.permute.xlu0 %6003
    %v6006 = vmul.f32 %v5992, %v6004
    %vm6007 = vcmask 66560
    %6008 = vst.msk [vmem:[#allocation20] sm:$0x3] %vm6007, %v6006
    // Predicated region
    $region138: #{tpu_custom_call.1} parent=1 // pred_check
      _
    $region139: #{tpu_custom_call.1} parent=1 // pred_check_branch
      %6010 = sbr.rel (0) target = $region141
    $region140: #{tpu_custom_call.1} parent=1 // pred_region
      %6012 = vsyncadd [#allocation4], 0
      %s6014 = sshll.u32 [#allocation20], 4
      %s6015 = int_to_ptr.vmem [resolvable:$true] %s6014
      %s6016 = sshll.u32 %s23, 4
      %s6017 = int_to_ptr.hbm [resolvable:$true] %s6016
      %6019 = dma.vmem_to_hbm [thread:$0]  %s6015, 32, %s6017, [#allocation4]
    $region141: #{tpu_custom_call.1} parent=1 // pred_fallthru
      _
    // Predicated region
    $region142: #{tpu_custom_call.1} parent=1 // pred_check
      _
    $region143: #{tpu_custom_call.1} parent=1 // pred_check_branch
      %6021 = sbr.rel (0) target = $region145
    $region144: #{tpu_custom_call.1} parent=1 // pred_region
      %6023 = dma.done [#allocation4], 32
    $region145: #{tpu_custom_call.1} parent=1 // pred_fallthru
      _
    %6024 = vsyncpa [#allocation3], 1
    %6025 = vsyncpa [#allocation6], 1
    %6026 = vsyncpa [#allocation9], 1
    %6027 = vsyncpa [#allocation12], 1
    %6028 = vsyncpa [#allocation15], 1
    %6029 = vsyncpa [#allocation18], 1
    %6030 = vsyncpa [#allocation4], 1

</llo_original>
